<compile_context>
chip_gen: v6e
topology: v6e:2x2x1
jax: 0.10.0
libtpu: 0.0.40
codegen_flags: <defaults>
</compile_context>

<pallas_src>
import functools

import jax
import jax.numpy as jnp
from jax import lax
from jax.experimental import pallas as pl
from jax.experimental.pallas import tpu as pltpu


# -----------------------------------------------------------------------------
# Fused SRCNN kernel: one (batch, row-tile) stripe per grid step.
#
# Layout inside the kernel: activations are (channels, flat_spatial) with the
# flattened (row-major, width-padded) spatial index on the 128-lane axis.
# A conv tap (kh, kw) is then just a lane-offset slice at kh*Wp + kw, and the
# im2col patch is built by stacking those slices along the sublane axis.
# -----------------------------------------------------------------------------
def _srcnn_kernel(x_ref, m_ref, w1_ref, b1_ref, w2_ref, b2_ref, w3_ref, b3_ref,
                  o_ref, p1_ref, p3_ref, *, TH, W, Wp, C2, L1, L3):
    # x_ref : (1, 1, 3, Lin)   padded input stripe, flat spatial (Lin = (TH+13)*Wp)
    # m_ref : (1, 1, L1)       validity mask for the conv2 output (conv3 zero-pad)
    # w1_ref: (C1, 243)  bf16  conv1 weights, rows = (kh, kw, cin) im2col order
    # w2_ref: (C2, C1)   bf16  1x1 conv weights
    # w3_ref: (3, 400)   bf16  conv3 weights, rows = (kh, kw, cin) im2col order
    # b*_ref: (Cout, 1)  f32
    # o_ref : (1, 3, TH, W)    NCHW output tile (W lane-dense)
    # p1_ref: (243, L1)  f32   conv1 im2col patch scratch
    # p3_ref: (400, L3)  f32   conv3 im2col patch scratch
    X = x_ref[0, 0, :, :]                                    # (3, Lin) f32

    # ---- conv1 (9x9, 3 -> C1): build (243, L1) patch, single MXU matmul ----
    for kh in range(9):
        for kw in range(9):
            t = kh * 9 + kw
            off = kh * Wp + kw
            p1_ref[3 * t:3 * t + 3, :] = X[:, off:off + L1]
    h1 = jnp.dot(w1_ref[...], p1_ref[...].astype(jnp.bfloat16),
                 preferred_element_type=jnp.float32)         # (C1, L1)
    h1 = jnp.maximum(h1 + b1_ref[...], 0.0)

    # ---- conv2 (1x1, C1 -> C2): plain matmul + ReLU (stays in VMEM/vregs) ----
    h2 = jnp.dot(w2_ref[...], h1.astype(jnp.bfloat16),
                 preferred_element_type=jnp.float32)         # (C2, L1)
    h2 = jnp.maximum(h2 + b2_ref[...], 0.0)

    # Zero positions outside the original image: this reproduces conv3's own
    # zero padding of the (H, W) conv2 output (needed because we fused).
    h2 = h2 * m_ref[0, :, :]                                 # (C2, L1)

    # ---- conv3 (5x5, C2 -> 3): build (400, L3) patch, single MXU matmul ----
    for kh in range(5):
        for kw in range(5):
            t = kh * 5 + kw
            off = kh * Wp + kw
            p3_ref[C2 * t:C2 * (t + 1), :] = h2[:, off:off + L3]
    y = jnp.dot(w3_ref[...], p3_ref[...].astype(jnp.bfloat16),
                preferred_element_type=jnp.float32) + b3_ref[...]   # (3, L3)

    # ---- lane-dense NCHW store: one dense (3, W) write per output row ----
    for r in range(TH):
        o_ref[0, :, r, :] = y[:, r * Wp:r * Wp + W]


def srcnn_forward(params, x, *, tile_h=None):
    """x: (N, 3, H, W) float32 NCHW -> (N, 3, H, W) float32, PyTorch semantics."""
    N, Cin, H, W = x.shape
    assert Cin == 3
    w1, b1 = params["w1"], params["b1"]
    w2, b2 = params["w2"], params["b2"]
    w3, b3 = params["w3"], params["b3"]
    C1 = w1.shape[-1]
    C2 = w2.shape[-1]

    # Row tile: keep stripe + im2col scratch small enough for v7x's 64 MiB VMEM.
    if tile_h is None:
        tile_h = 8 if H % 8 == 0 else H
    TH = tile_h
    assert H % TH == 0 and (TH % 8 == 0 or TH == H)
    T = H // TH

    PAD = 6                       # combined halo: 4 (conv1) + 2 (conv3)
    Wp = W + 2 * PAD
    R = TH + 2 * PAD + 1          # +1 slack row for the flat-window tail
    Lin = R * Wp
    L1 = (TH + 4) * Wp            # conv1/conv2 flat extent (TH+4 rows incl. halo)
    L3 = (TH - 1) * Wp + W        # conv3 flat output extent

    # Zero-pad and gather overlapping row stripes (only the tiny 3-channel input
    # is duplicated ~(TH+13)/TH x in HBM; the 32/16-channel intermediates never
    # touch HBM at all).
    xp = jnp.pad(x, ((0, 0), (0, 0), (PAD, PAD + 1), (PAD, PAD)))
    xs = jnp.stack([xp[:, :, t * TH:t * TH + R, :] for t in range(T)], axis=1)
    xs = xs.reshape(N, T, 3, Lin).astype(jnp.float32)

    # Weights in (Cout, KH*KW*Cin) im2col order, bf16 for the MXU.
    w1t = w1.reshape(9 * 9 * 3, C1).T.astype(jnp.bfloat16)       # (C1, 243)
    w2t = w2.reshape(C1, C2).T.astype(jnp.bfloat16)              # (C2, C1)
    w3t = w3.reshape(5 * 5 * C2, 3).T.astype(jnp.bfloat16)       # (3, 400)
    b1c = b1.reshape(C1, 1).astype(jnp.float32)
    b2c = b2.reshape(C2, 1).astype(jnp.float32)
    b3c = b3.reshape(3, 1).astype(jnp.float32)

    # Per-tile validity mask over the (TH+4, Wp) conv1/conv2 grid: zero where the
    # position lies outside the original HxW image (== conv3's zero padding).
    v = jnp.arange(TH + 4)
    u = jnp.arange(Wp)
    col_ok = (u >= 2) & (u < W + 2)
    g_row = jnp.arange(T)[:, None] * TH + v[None, :] - 2
    row_ok = (g_row >= 0) & (g_row < H)
    mask = (row_ok[:, :, None] & col_ok[None, None, :]).astype(jnp.float32)
    mask = mask.reshape(T, 1, L1)

    kernel = functools.partial(_srcnn_kernel, TH=TH, W=W, Wp=Wp, C2=C2,
                               L1=L1, L3=L3)

    return pl.pallas_call(
        kernel,
        out_shape=jax.ShapeDtypeStruct((N, 3, H, W), jnp.float32),
        grid=(N, T),
        in_specs=[
            pl.BlockSpec((1, 1, 3, Lin), lambda n, t: (n, t, 0, 0)),   # input stripe
            pl.BlockSpec((1, 1, L1), lambda n, t: (t, 0, 0)),          # edge mask
            pl.BlockSpec((C1, 9 * 9 * 3), lambda n, t: (0, 0)),        # w1
            pl.BlockSpec((C1, 1), lambda n, t: (0, 0)),                # b1
            pl.BlockSpec((C2, C1), lambda n, t: (0, 0)),               # w2
            pl.BlockSpec((C2, 1), lambda n, t: (0, 0)),                # b2
            pl.BlockSpec((3, 5 * 5 * C2), lambda n, t: (0, 0)),        # w3
            pl.BlockSpec((3, 1), lambda n, t: (0, 0)),                 # b3
        ],
        out_specs=pl.BlockSpec((1, 3, TH, W), lambda n, t: (n, 0, t, 0)),
        scratch_shapes=[
            pltpu.VMEM((9 * 9 * 3, L1), jnp.float32),      # conv1 im2col patch
            pltpu.VMEM((5 * 5 * C2, L3), jnp.float32),     # conv3 im2col patch
        ],
        compiler_params=pltpu.CompilerParams(
            dimension_semantics=("parallel", "parallel"),
            vmem_limit_bytes=48 * 1024 * 1024,
        ),
    )(xs, mask, w1t, b1c, w2t, b2c, w3t, b3c)


# -----------------------------------------------------------------------------
# Parameters + pure-JAX reference (for a correctness check of the fused kernel)
# -----------------------------------------------------------------------------
def init_srcnn_params(key, num_channels):
    c1, c2 = num_channels, num_channels // 2
    keys = jax.random.split(key, 6)

    def winit(k, shape):
        fan_in = shape[0] * shape[1] * shape[2]
        return jax.random.normal(k, shape, jnp.float32) / jnp.sqrt(fan_in)

    return {
        "w1": winit(keys[0], (9, 9, 3, c1)),
        "b1": 0.01 * jax.random.normal(keys[1], (c1,), jnp.float32),
        "w2": winit(keys[2], (1, 1, c1, c2)),
        "b2": 0.01 * jax.random.normal(keys[3], (c2,), jnp.float32),
        "w3": winit(keys[4], (5, 5, c2, 3)),
        "b3": 0.01 * jax.random.normal(keys[5], (3,), jnp.float32),
    }


def srcnn_reference(params, x):
    dn = ("NCHW", "HWIO", "NCHW")
    hi = lax.Precision.HIGHEST

    def conv(z, w, pad):
        return lax.conv_general_dilated(z, w, (1, 1), [(pad, pad), (pad, pad)],
                                        dimension_numbers=dn, precision=hi)

    y = conv(x, params["w1"], 4) + params["b1"].reshape(1, -1, 1, 1)
    y = jnp.maximum(y, 0.0)
    y = conv(y, params["w2"], 0) + params["b2"].reshape(1, -1, 1, 1)
    y = jnp.maximum(y, 0.0)
    y = conv(y, params["w3"], 2) + params["b3"].reshape(1, -1, 1, 1)
    return y


if __name__ == "__main__":
    NUM_CHANNELS = 32          # SRCNN(params=32)
    N, C, H, W = 2, 3, 16, 16  # small deterministic input

    key = jax.random.PRNGKey(0)
    k_params, k_x = jax.random.split(key)

    params = init_srcnn_params(k_params, NUM_CHANNELS)
    x = jax.random.normal(k_x, (N, C, H, W), jnp.float32)

    out = jax.jit(srcnn_forward)(params, x)
    out = jax.block_until_ready(out)

    assert out.shape == (N, 3, H, W), out.shape
    assert out.dtype == jnp.float32
    assert bool(jnp.all(jnp.isfinite(out)))

    ref = srcnn_reference(params, x)
    assert bool(jnp.allclose(out, ref, atol=1e-1, rtol=1e-1)), float(
        jnp.max(jnp.abs(out - ref)))

    print("KERNEL_OK")
</pallas_src>

<mosaic_0001>
module attributes {stable_mosaic.version = 11 : i64} {
  func.func @_srcnn_kernel(%arg0: i32, %arg1: i32, %arg2: memref<1x1x3x588xf32, #tpu.memory_space<vmem>>, %arg3: memref<1x1x336xf32, #tpu.memory_space<vmem>>, %arg4: memref<32x243xbf16, #tpu.memory_space<vmem>>, %arg5: memref<32x1xf32, #tpu.memory_space<vmem>>, %arg6: memref<16x32xbf16, #tpu.memory_space<vmem>>, %arg7: memref<16x1xf32, #tpu.memory_space<vmem>>, %arg8: memref<3x400xbf16, #tpu.memory_space<vmem>>, %arg9: memref<3x1xf32, #tpu.memory_space<vmem>>, %arg10: memref<1x3x8x16xf32, #tpu.memory_space<vmem>>, %arg11: memref<243x336xf32, #tpu.memory_space<vmem>>, %arg12: memref<400x212xf32, #tpu.memory_space<vmem>>) attributes {dimension_semantics = [#tpu.dimension_semantics<parallel>, #tpu.dimension_semantics<parallel>], iteration_bounds = array<i64: 2, 2>, scalar_prefetch = 0 : i64, scratch_operands = 2 : i64, tpu.core_type = #tpu.core_type<tc>, window_params = [{transform_indices = @transform_0, window_bounds = array<i64: 1, 1, 3, 588>}, {transform_indices = @transform_1, window_bounds = array<i64: 1, 1, 336>}, {pipeline_mode = #tpu.pipeline_mode<synchronous>, transform_indices = @transform_2, window_bounds = array<i64: 32, 243>}, {pipeline_mode = #tpu.pipeline_mode<synchronous>, transform_indices = @transform_3, window_bounds = array<i64: 32, 1>}, {pipeline_mode = #tpu.pipeline_mode<synchronous>, transform_indices = @transform_4, window_bounds = array<i64: 16, 32>}, {pipeline_mode = #tpu.pipeline_mode<synchronous>, transform_indices = @transform_5, window_bounds = array<i64: 16, 1>}, {pipeline_mode = #tpu.pipeline_mode<synchronous>, transform_indices = @transform_6, window_bounds = array<i64: 3, 400>}, {pipeline_mode = #tpu.pipeline_mode<synchronous>, transform_indices = @transform_7, window_bounds = array<i64: 3, 1>}, {transform_indices = @transform_8, window_bounds = array<i64: 1, 3, 8, 16>}]} {
    %c0 = arith.constant 0 : index
    %c0_0 = arith.constant 0 : index
    %c0_1 = arith.constant 0 : index
    %c0_2 = arith.constant 0 : index
    %0 = vector.load %arg2[%c0, %c0_0, %c0_1, %c0_2] : memref<1x1x3x588xf32, #tpu.memory_space<vmem>>, vector<1x1x3x588xf32>
    %1 = vector.shape_cast %0 : vector<1x1x3x588xf32> to vector<3x588xf32>
    %2 = vector.extract_strided_slice %1 {offsets = [0, 0], sizes = [3, 336], strides = [1, 1]} : vector<3x588xf32> to vector<3x336xf32>
    %c0_3 = arith.constant 0 : index
    %c0_4 = arith.constant 0 : index
    %3 = vector.load %arg11[%c0_3, %c0_4] : memref<243x336xf32, #tpu.memory_space<vmem>>, vector<3x336xf32>
    tpu.vector_store %arg11[%c0_3, %c0_4], %2 {strides = array<i32>} : memref<243x336xf32, #tpu.memory_space<vmem>>, vector<3x336xf32>,
    %4 = vector.extract_strided_slice %1 {offsets = [0, 1], sizes = [3, 336], strides = [1, 1]} : vector<3x588xf32> to vector<3x336xf32>
    %c3 = arith.constant 3 : index
    %c0_5 = arith.constant 0 : index
    %5 = vector.load %arg11[%c3, %c0_5] : memref<243x336xf32, #tpu.memory_space<vmem>>, vector<3x336xf32>
    tpu.vector_store %arg11[%c3, %c0_5], %4 {strides = array<i32>} : memref<243x336xf32, #tpu.memory_space<vmem>>, vector<3x336xf32>,
    %6 = vector.extract_strided_slice %1 {offsets = [0, 2], sizes = [3, 336], strides = [1, 1]} : vector<3x588xf32> to vector<3x336xf32>
    %c6 = arith.constant 6 : index
    %c0_6 = arith.constant 0 : index
    %7 = vector.load %arg11[%c6, %c0_6] : memref<243x336xf32, #tpu.memory_space<vmem>>, vector<3x336xf32>
    tpu.vector_store %arg11[%c6, %c0_6], %6 {strides = array<i32>} : memref<243x336xf32, #tpu.memory_space<vmem>>, vector<3x336xf32>,
    %8 = vector.extract_strided_slice %1 {offsets = [0, 3], sizes = [3, 336], strides = [1, 1]} : vector<3x588xf32> to vector<3x336xf32>
    %c9 = arith.constant 9 : index
    %c0_7 = arith.constant 0 : index
    %9 = vector.load %arg11[%c9, %c0_7] : memref<243x336xf32, #tpu.memory_space<vmem>>, vector<3x336xf32>
    tpu.vector_store %arg11[%c9, %c0_7], %8 {strides = array<i32>} : memref<243x336xf32, #tpu.memory_space<vmem>>, vector<3x336xf32>,
    %10 = vector.extract_strided_slice %1 {offsets = [0, 4], sizes = [3, 336], strides = [1, 1]} : vector<3x588xf32> to vector<3x336xf32>
    %c12 = arith.constant 12 : index
    %c0_8 = arith.constant 0 : index
    %11 = vector.load %arg11[%c12, %c0_8] : memref<243x336xf32, #tpu.memory_space<vmem>>, vector<3x336xf32>
    tpu.vector_store %arg11[%c12, %c0_8], %10 {strides = array<i32>} : memref<243x336xf32, #tpu.memory_space<vmem>>, vector<3x336xf32>,
    %12 = vector.extract_strided_slice %1 {offsets = [0, 5], sizes = [3, 336], strides = [1, 1]} : vector<3x588xf32> to vector<3x336xf32>
    %c15 = arith.constant 15 : index
    %c0_9 = arith.constant 0 : index
    %13 = vector.load %arg11[%c15, %c0_9] : memref<243x336xf32, #tpu.memory_space<vmem>>, vector<3x336xf32>
    tpu.vector_store %arg11[%c15, %c0_9], %12 {strides = array<i32>} : memref<243x336xf32, #tpu.memory_space<vmem>>, vector<3x336xf32>,
    %14 = vector.extract_strided_slice %1 {offsets = [0, 6], sizes = [3, 336], strides = [1, 1]} : vector<3x588xf32> to vector<3x336xf32>
    %c18 = arith.constant 18 : index
    %c0_10 = arith.constant 0 : index
    %15 = vector.load %arg11[%c18, %c0_10] : memref<243x336xf32, #tpu.memory_space<vmem>>, vector<3x336xf32>
    tpu.vector_store %arg11[%c18, %c0_10], %14 {strides = array<i32>} : memref<243x336xf32, #tpu.memory_space<vmem>>, vector<3x336xf32>,
    %16 = vector.extract_strided_slice %1 {offsets = [0, 7], sizes = [3, 336], strides = [1, 1]} : vector<3x588xf32> to vector<3x336xf32>
    %c21 = arith.constant 21 : index
    %c0_11 = arith.constant 0 : index
    %17 = vector.load %arg11[%c21, %c0_11] : memref<243x336xf32, #tpu.memory_space<vmem>>, vector<3x336xf32>
    tpu.vector_store %arg11[%c21, %c0_11], %16 {strides = array<i32>} : memref<243x336xf32, #tpu.memory_space<vmem>>, vector<3x336xf32>,
    %18 = vector.extract_strided_slice %1 {offsets = [0, 8], sizes = [3, 336], strides = [1, 1]} : vector<3x588xf32> to vector<3x336xf32>
    %c24 = arith.constant 24 : index
    %c0_12 = arith.constant 0 : index
    %19 = vector.load %arg11[%c24, %c0_12] : memref<243x336xf32, #tpu.memory_space<vmem>>, vector<3x336xf32>
    tpu.vector_store %arg11[%c24, %c0_12], %18 {strides = array<i32>} : memref<243x336xf32, #tpu.memory_space<vmem>>, vector<3x336xf32>,
    %20 = vector.extract_strided_slice %1 {offsets = [0, 28], sizes = [3, 336], strides = [1, 1]} : vector<3x588xf32> to vector<3x336xf32>
    %c27 = arith.constant 27 : index
    %c0_13 = arith.constant 0 : index
    %21 = vector.load %arg11[%c27, %c0_13] : memref<243x336xf32, #tpu.memory_space<vmem>>, vector<3x336xf32>
    tpu.vector_store %arg11[%c27, %c0_13], %20 {strides = array<i32>} : memref<243x336xf32, #tpu.memory_space<vmem>>, vector<3x336xf32>,
    %22 = vector.extract_strided_slice %1 {offsets = [0, 29], sizes = [3, 336], strides = [1, 1]} : vector<3x588xf32> to vector<3x336xf32>
    %c30 = arith.constant 30 : index
    %c0_14 = arith.constant 0 : index
    %23 = vector.load %arg11[%c30, %c0_14] : memref<243x336xf32, #tpu.memory_space<vmem>>, vector<3x336xf32>
    tpu.vector_store %arg11[%c30, %c0_14], %22 {strides = array<i32>} : memref<243x336xf32, #tpu.memory_space<vmem>>, vector<3x336xf32>,
    %24 = vector.extract_strided_slice %1 {offsets = [0, 30], sizes = [3, 336], strides = [1, 1]} : vector<3x588xf32> to vector<3x336xf32>
    %c33 = arith.constant 33 : index
    %c0_15 = arith.constant 0 : index
    %25 = vector.load %arg11[%c33, %c0_15] : memref<243x336xf32, #tpu.memory_space<vmem>>, vector<3x336xf32>
    tpu.vector_store %arg11[%c33, %c0_15], %24 {strides = array<i32>} : memref<243x336xf32, #tpu.memory_space<vmem>>, vector<3x336xf32>,
    %26 = vector.extract_strided_slice %1 {offsets = [0, 31], sizes = [3, 336], strides = [1, 1]} : vector<3x588xf32> to vector<3x336xf32>
    %c36 = arith.constant 36 : index
    %c0_16 = arith.constant 0 : index
    %27 = vector.load %arg11[%c36, %c0_16] : memref<243x336xf32, #tpu.memory_space<vmem>>, vector<3x336xf32>
    tpu.vector_store %arg11[%c36, %c0_16], %26 {strides = array<i32>} : memref<243x336xf32, #tpu.memory_space<vmem>>, vector<3x336xf32>,
    %28 = vector.extract_strided_slice %1 {offsets = [0, 32], sizes = [3, 336], strides = [1, 1]} : vector<3x588xf32> to vector<3x336xf32>
    %c39 = arith.constant 39 : index
    %c0_17 = arith.constant 0 : index
    %29 = vector.load %arg11[%c39, %c0_17] : memref<243x336xf32, #tpu.memory_space<vmem>>, vector<3x336xf32>
    tpu.vector_store %arg11[%c39, %c0_17], %28 {strides = array<i32>} : memref<243x336xf32, #tpu.memory_space<vmem>>, vector<3x336xf32>,
    %30 = vector.extract_strided_slice %1 {offsets = [0, 33], sizes = [3, 336], strides = [1, 1]} : vector<3x588xf32> to vector<3x336xf32>
    %c42 = arith.constant 42 : index
    %c0_18 = arith.constant 0 : index
    %31 = vector.load %arg11[%c42, %c0_18] : memref<243x336xf32, #tpu.memory_space<vmem>>, vector<3x336xf32>
    tpu.vector_store %arg11[%c42, %c0_18], %30 {strides = array<i32>} : memref<243x336xf32, #tpu.memory_space<vmem>>, vector<3x336xf32>,
    %32 = vector.extract_strided_slice %1 {offsets = [0, 34], sizes = [3, 336], strides = [1, 1]} : vector<3x588xf32> to vector<3x336xf32>
    %c45 = arith.constant 45 : index
    %c0_19 = arith.constant 0 : index
    %33 = vector.load %arg11[%c45, %c0_19] : memref<243x336xf32, #tpu.memory_space<vmem>>, vector<3x336xf32>
    tpu.vector_store %arg11[%c45, %c0_19], %32 {strides = array<i32>} : memref<243x336xf32, #tpu.memory_space<vmem>>, vector<3x336xf32>,
    %34 = vector.extract_strided_slice %1 {offsets = [0, 35], sizes = [3, 336], strides = [1, 1]} : vector<3x588xf32> to vector<3x336xf32>
    %c48 = arith.constant 48 : index
    %c0_20 = arith.constant 0 : index
    %35 = vector.load %arg11[%c48, %c0_20] : memref<243x336xf32, #tpu.memory_space<vmem>>, vector<3x336xf32>
    tpu.vector_store %arg11[%c48, %c0_20], %34 {strides = array<i32>} : memref<243x336xf32, #tpu.memory_space<vmem>>, vector<3x336xf32>,
    %36 = vector.extract_strided_slice %1 {offsets = [0, 36], sizes = [3, 336], strides = [1, 1]} : vector<3x588xf32> to vector<3x336xf32>
    %c51 = arith.constant 51 : index
    %c0_21 = arith.constant 0 : index
    %37 = vector.load %arg11[%c51, %c0_21] : memref<243x336xf32, #tpu.memory_space<vmem>>, vector<3x336xf32>
    tpu.vector_store %arg11[%c51, %c0_21], %36 {strides = array<i32>} : memref<243x336xf32, #tpu.memory_space<vmem>>, vector<3x336xf32>,
    %38 = vector.extract_strided_slice %1 {offsets = [0, 56], sizes = [3, 336], strides = [1, 1]} : vector<3x588xf32> to vector<3x336xf32>
    %c54 = arith.constant 54 : index
    %c0_22 = arith.constant 0 : index
    %39 = vector.load %arg11[%c54, %c0_22] : memref<243x336xf32, #tpu.memory_space<vmem>>, vector<3x336xf32>
    tpu.vector_store %arg11[%c54, %c0_22], %38 {strides = array<i32>} : memref<243x336xf32, #tpu.memory_space<vmem>>, vector<3x336xf32>,
    %40 = vector.extract_strided_slice %1 {offsets = [0, 57], sizes = [3, 336], strides = [1, 1]} : vector<3x588xf32> to vector<3x336xf32>
    %c57 = arith.constant 57 : index
    %c0_23 = arith.constant 0 : index
    %41 = vector.load %arg11[%c57, %c0_23] : memref<243x336xf32, #tpu.memory_space<vmem>>, vector<3x336xf32>
    tpu.vector_store %arg11[%c57, %c0_23], %40 {strides = array<i32>} : memref<243x336xf32, #tpu.memory_space<vmem>>, vector<3x336xf32>,
    %42 = vector.extract_strided_slice %1 {offsets = [0, 58], sizes = [3, 336], strides = [1, 1]} : vector<3x588xf32> to vector<3x336xf32>
    %c60 = arith.constant 60 : index
    %c0_24 = arith.constant 0 : index
    %43 = vector.load %arg11[%c60, %c0_24] : memref<243x336xf32, #tpu.memory_space<vmem>>, vector<3x336xf32>
    tpu.vector_store %arg11[%c60, %c0_24], %42 {strides = array<i32>} : memref<243x336xf32, #tpu.memory_space<vmem>>, vector<3x336xf32>,
    %44 = vector.extract_strided_slice %1 {offsets = [0, 59], sizes = [3, 336], strides = [1, 1]} : vector<3x588xf32> to vector<3x336xf32>
    %c63 = arith.constant 63 : index
    %c0_25 = arith.constant 0 : index
    %45 = vector.load %arg11[%c63, %c0_25] : memref<243x336xf32, #tpu.memory_space<vmem>>, vector<3x336xf32>
    tpu.vector_store %arg11[%c63, %c0_25], %44 {strides = array<i32>} : memref<243x336xf32, #tpu.memory_space<vmem>>, vector<3x336xf32>,
    %46 = vector.extract_strided_slice %1 {offsets = [0, 60], sizes = [3, 336], strides = [1, 1]} : vector<3x588xf32> to vector<3x336xf32>
    %c66 = arith.constant 66 : index
    %c0_26 = arith.constant 0 : index
    %47 = vector.load %arg11[%c66, %c0_26] : memref<243x336xf32, #tpu.memory_space<vmem>>, vector<3x336xf32>
    tpu.vector_store %arg11[%c66, %c0_26], %46 {strides = array<i32>} : memref<243x336xf32, #tpu.memory_space<vmem>>, vector<3x336xf32>,
    %48 = vector.extract_strided_slice %1 {offsets = [0, 61], sizes = [3, 336], strides = [1, 1]} : vector<3x588xf32> to vector<3x336xf32>
    %c69 = arith.constant 69 : index
    %c0_27 = arith.constant 0 : index
    %49 = vector.load %arg11[%c69, %c0_27] : memref<243x336xf32, #tpu.memory_space<vmem>>, vector<3x336xf32>
    tpu.vector_store %arg11[%c69, %c0_27], %48 {strides = array<i32>} : memref<243x336xf32, #tpu.memory_space<vmem>>, vector<3x336xf32>,
    %50 = vector.extract_strided_slice %1 {offsets = [0, 62], sizes = [3, 336], strides = [1, 1]} : vector<3x588xf32> to vector<3x336xf32>
    %c72 = arith.constant 72 : index
    %c0_28 = arith.constant 0 : index
    %51 = vector.load %arg11[%c72, %c0_28] : memref<243x336xf32, #tpu.memory_space<vmem>>, vector<3x336xf32>
    tpu.vector_store %arg11[%c72, %c0_28], %50 {strides = array<i32>} : memref<243x336xf32, #tpu.memory_space<vmem>>, vector<3x336xf32>,
    %52 = vector.extract_strided_slice %1 {offsets = [0, 63], sizes = [3, 336], strides = [1, 1]} : vector<3x588xf32> to vector<3x336xf32>
    %c75 = arith.constant 75 : index
    %c0_29 = arith.constant 0 : index
    %53 = vector.load %arg11[%c75, %c0_29] : memref<243x336xf32, #tpu.memory_space<vmem>>, vector<3x336xf32>
    tpu.vector_store %arg11[%c75, %c0_29], %52 {strides = array<i32>} : memref<243x336xf32, #tpu.memory_space<vmem>>, vector<3x336xf32>,
    %54 = vector.extract_strided_slice %1 {offsets = [0, 64], sizes = [3, 336], strides = [1, 1]} : vector<3x588xf32> to vector<3x336xf32>
    %c78 = arith.constant 78 : index
    %c0_30 = arith.constant 0 : index
    %55 = vector.load %arg11[%c78, %c0_30] : memref<243x336xf32, #tpu.memory_space<vmem>>, vector<3x336xf32>
    tpu.vector_store %arg11[%c78, %c0_30], %54 {strides = array<i32>} : memref<243x336xf32, #tpu.memory_space<vmem>>, vector<3x336xf32>,
    %56 = vector.extract_strided_slice %1 {offsets = [0, 84], sizes = [3, 336], strides = [1, 1]} : vector<3x588xf32> to vector<3x336xf32>
    %c81 = arith.constant 81 : index
    %c0_31 = arith.constant 0 : index
    %57 = vector.load %arg11[%c81, %c0_31] : memref<243x336xf32, #tpu.memory_space<vmem>>, vector<3x336xf32>
    tpu.vector_store %arg11[%c81, %c0_31], %56 {strides = array<i32>} : memref<243x336xf32, #tpu.memory_space<vmem>>, vector<3x336xf32>,
    %58 = vector.extract_strided_slice %1 {offsets = [0, 85], sizes = [3, 336], strides = [1, 1]} : vector<3x588xf32> to vector<3x336xf32>
    %c84 = arith.constant 84 : index
    %c0_32 = arith.constant 0 : index
    %59 = vector.load %arg11[%c84, %c0_32] : memref<243x336xf32, #tpu.memory_space<vmem>>, vector<3x336xf32>
    tpu.vector_store %arg11[%c84, %c0_32], %58 {strides = array<i32>} : memref<243x336xf32, #tpu.memory_space<vmem>>, vector<3x336xf32>,
    %60 = vector.extract_strided_slice %1 {offsets = [0, 86], sizes = [3, 336], strides = [1, 1]} : vector<3x588xf32> to vector<3x336xf32>
    %c87 = arith.constant 87 : index
    %c0_33 = arith.constant 0 : index
    %61 = vector.load %arg11[%c87, %c0_33] : memref<243x336xf32, #tpu.memory_space<vmem>>, vector<3x336xf32>
    tpu.vector_store %arg11[%c87, %c0_33], %60 {strides = array<i32>} : memref<243x336xf32, #tpu.memory_space<vmem>>, vector<3x336xf32>,
    %62 = vector.extract_strided_slice %1 {offsets = [0, 87], sizes = [3, 336], strides = [1, 1]} : vector<3x588xf32> to vector<3x336xf32>
    %c90 = arith.constant 90 : index
    %c0_34 = arith.constant 0 : index
    %63 = vector.load %arg11[%c90, %c0_34] : memref<243x336xf32, #tpu.memory_space<vmem>>, vector<3x336xf32>
    tpu.vector_store %arg11[%c90, %c0_34], %62 {strides = array<i32>} : memref<243x336xf32, #tpu.memory_space<vmem>>, vector<3x336xf32>,
    %64 = vector.extract_strided_slice %1 {offsets = [0, 88], sizes = [3, 336], strides = [1, 1]} : vector<3x588xf32> to vector<3x336xf32>
    %c93 = arith.constant 93 : index
    %c0_35 = arith.constant 0 : index
    %65 = vector.load %arg11[%c93, %c0_35] : memref<243x336xf32, #tpu.memory_space<vmem>>, vector<3x336xf32>
    tpu.vector_store %arg11[%c93, %c0_35], %64 {strides = array<i32>} : memref<243x336xf32, #tpu.memory_space<vmem>>, vector<3x336xf32>,
    %66 = vector.extract_strided_slice %1 {offsets = [0, 89], sizes = [3, 336], strides = [1, 1]} : vector<3x588xf32> to vector<3x336xf32>
    %c96 = arith.constant 96 : index
    %c0_36 = arith.constant 0 : index
    %67 = vector.load %arg11[%c96, %c0_36] : memref<243x336xf32, #tpu.memory_space<vmem>>, vector<3x336xf32>
    tpu.vector_store %arg11[%c96, %c0_36], %66 {strides = array<i32>} : memref<243x336xf32, #tpu.memory_space<vmem>>, vector<3x336xf32>,
    %68 = vector.extract_strided_slice %1 {offsets = [0, 90], sizes = [3, 336], strides = [1, 1]} : vector<3x588xf32> to vector<3x336xf32>
    %c99 = arith.constant 99 : index
    %c0_37 = arith.constant 0 : index
    %69 = vector.load %arg11[%c99, %c0_37] : memref<243x336xf32, #tpu.memory_space<vmem>>, vector<3x336xf32>
    tpu.vector_store %arg11[%c99, %c0_37], %68 {strides = array<i32>} : memref<243x336xf32, #tpu.memory_space<vmem>>, vector<3x336xf32>,
    %70 = vector.extract_strided_slice %1 {offsets = [0, 91], sizes = [3, 336], strides = [1, 1]} : vector<3x588xf32> to vector<3x336xf32>
    %c102 = arith.constant 102 : index
    %c0_38 = arith.constant 0 : index
    %71 = vector.load %arg11[%c102, %c0_38] : memref<243x336xf32, #tpu.memory_space<vmem>>, vector<3x336xf32>
    tpu.vector_store %arg11[%c102, %c0_38], %70 {strides = array<i32>} : memref<243x336xf32, #tpu.memory_space<vmem>>, vector<3x336xf32>,
    %72 = vector.extract_strided_slice %1 {offsets = [0, 92], sizes = [3, 336], strides = [1, 1]} : vector<3x588xf32> to vector<3x336xf32>
    %c105 = arith.constant 105 : index
    %c0_39 = arith.constant 0 : index
    %73 = vector.load %arg11[%c105, %c0_39] : memref<243x336xf32, #tpu.memory_space<vmem>>, vector<3x336xf32>
    tpu.vector_store %arg11[%c105, %c0_39], %72 {strides = array<i32>} : memref<243x336xf32, #tpu.memory_space<vmem>>, vector<3x336xf32>,
    %74 = vector.extract_strided_slice %1 {offsets = [0, 112], sizes = [3, 336], strides = [1, 1]} : vector<3x588xf32> to vector<3x336xf32>
    %c108 = arith.constant 108 : index
    %c0_40 = arith.constant 0 : index
    %75 = vector.load %arg11[%c108, %c0_40] : memref<243x336xf32, #tpu.memory_space<vmem>>, vector<3x336xf32>
    tpu.vector_store %arg11[%c108, %c0_40], %74 {strides = array<i32>} : memref<243x336xf32, #tpu.memory_space<vmem>>, vector<3x336xf32>,
    %76 = vector.extract_strided_slice %1 {offsets = [0, 113], sizes = [3, 336], strides = [1, 1]} : vector<3x588xf32> to vector<3x336xf32>
    %c111 = arith.constant 111 : index
    %c0_41 = arith.constant 0 : index
    %77 = vector.load %arg11[%c111, %c0_41] : memref<243x336xf32, #tpu.memory_space<vmem>>, vector<3x336xf32>
    tpu.vector_store %arg11[%c111, %c0_41], %76 {strides = array<i32>} : memref<243x336xf32, #tpu.memory_space<vmem>>, vector<3x336xf32>,
    %78 = vector.extract_strided_slice %1 {offsets = [0, 114], sizes = [3, 336], strides = [1, 1]} : vector<3x588xf32> to vector<3x336xf32>
    %c114 = arith.constant 114 : index
    %c0_42 = arith.constant 0 : index
    %79 = vector.load %arg11[%c114, %c0_42] : memref<243x336xf32, #tpu.memory_space<vmem>>, vector<3x336xf32>
    tpu.vector_store %arg11[%c114, %c0_42], %78 {strides = array<i32>} : memref<243x336xf32, #tpu.memory_space<vmem>>, vector<3x336xf32>,
    %80 = vector.extract_strided_slice %1 {offsets = [0, 115], sizes = [3, 336], strides = [1, 1]} : vector<3x588xf32> to vector<3x336xf32>
    %c117 = arith.constant 117 : index
    %c0_43 = arith.constant 0 : index
    %81 = vector.load %arg11[%c117, %c0_43] : memref<243x336xf32, #tpu.memory_space<vmem>>, vector<3x336xf32>
    tpu.vector_store %arg11[%c117, %c0_43], %80 {strides = array<i32>} : memref<243x336xf32, #tpu.memory_space<vmem>>, vector<3x336xf32>,
    %82 = vector.extract_strided_slice %1 {offsets = [0, 116], sizes = [3, 336], strides = [1, 1]} : vector<3x588xf32> to vector<3x336xf32>
    %c120 = arith.constant 120 : index
    %c0_44 = arith.constant 0 : index
    %83 = vector.load %arg11[%c120, %c0_44] : memref<243x336xf32, #tpu.memory_space<vmem>>, vector<3x336xf32>
    tpu.vector_store %arg11[%c120, %c0_44], %82 {strides = array<i32>} : memref<243x336xf32, #tpu.memory_space<vmem>>, vector<3x336xf32>,
    %84 = vector.extract_strided_slice %1 {offsets = [0, 117], sizes = [3, 336], strides = [1, 1]} : vector<3x588xf32> to vector<3x336xf32>
    %c123 = arith.constant 123 : index
    %c0_45 = arith.constant 0 : index
    %85 = vector.load %arg11[%c123, %c0_45] : memref<243x336xf32, #tpu.memory_space<vmem>>, vector<3x336xf32>
    tpu.vector_store %arg11[%c123, %c0_45], %84 {strides = array<i32>} : memref<243x336xf32, #tpu.memory_space<vmem>>, vector<3x336xf32>,
    %86 = vector.extract_strided_slice %1 {offsets = [0, 118], sizes = [3, 336], strides = [1, 1]} : vector<3x588xf32> to vector<3x336xf32>
    %c126 = arith.constant 126 : index
    %c0_46 = arith.constant 0 : index
    %87 = vector.load %arg11[%c126, %c0_46] : memref<243x336xf32, #tpu.memory_space<vmem>>, vector<3x336xf32>
    tpu.vector_store %arg11[%c126, %c0_46], %86 {strides = array<i32>} : memref<243x336xf32, #tpu.memory_space<vmem>>, vector<3x336xf32>,
    %88 = vector.extract_strided_slice %1 {offsets = [0, 119], sizes = [3, 336], strides = [1, 1]} : vector<3x588xf32> to vector<3x336xf32>
    %c129 = arith.constant 129 : index
    %c0_47 = arith.constant 0 : index
    %89 = vector.load %arg11[%c129, %c0_47] : memref<243x336xf32, #tpu.memory_space<vmem>>, vector<3x336xf32>
    tpu.vector_store %arg11[%c129, %c0_47], %88 {strides = array<i32>} : memref<243x336xf32, #tpu.memory_space<vmem>>, vector<3x336xf32>,
    %90 = vector.extract_strided_slice %1 {offsets = [0, 120], sizes = [3, 336], strides = [1, 1]} : vector<3x588xf32> to vector<3x336xf32>
    %c132 = arith.constant 132 : index
    %c0_48 = arith.constant 0 : index
    %91 = vector.load %arg11[%c132, %c0_48] : memref<243x336xf32, #tpu.memory_space<vmem>>, vector<3x336xf32>
    tpu.vector_store %arg11[%c132, %c0_48], %90 {strides = array<i32>} : memref<243x336xf32, #tpu.memory_space<vmem>>, vector<3x336xf32>,
    %92 = vector.extract_strided_slice %1 {offsets = [0, 140], sizes = [3, 336], strides = [1, 1]} : vector<3x588xf32> to vector<3x336xf32>
    %c135 = arith.constant 135 : index
    %c0_49 = arith.constant 0 : index
    %93 = vector.load %arg11[%c135, %c0_49] : memref<243x336xf32, #tpu.memory_space<vmem>>, vector<3x336xf32>
    tpu.vector_store %arg11[%c135, %c0_49], %92 {strides = array<i32>} : memref<243x336xf32, #tpu.memory_space<vmem>>, vector<3x336xf32>,
    %94 = vector.extract_strided_slice %1 {offsets = [0, 141], sizes = [3, 336], strides = [1, 1]} : vector<3x588xf32> to vector<3x336xf32>
    %c138 = arith.constant 138 : index
    %c0_50 = arith.constant 0 : index
    %95 = vector.load %arg11[%c138, %c0_50] : memref<243x336xf32, #tpu.memory_space<vmem>>, vector<3x336xf32>
    tpu.vector_store %arg11[%c138, %c0_50], %94 {strides = array<i32>} : memref<243x336xf32, #tpu.memory_space<vmem>>, vector<3x336xf32>,
    %96 = vector.extract_strided_slice %1 {offsets = [0, 142], sizes = [3, 336], strides = [1, 1]} : vector<3x588xf32> to vector<3x336xf32>
    %c141 = arith.constant 141 : index
    %c0_51 = arith.constant 0 : index
    %97 = vector.load %arg11[%c141, %c0_51] : memref<243x336xf32, #tpu.memory_space<vmem>>, vector<3x336xf32>
    tpu.vector_store %arg11[%c141, %c0_51], %96 {strides = array<i32>} : memref<243x336xf32, #tpu.memory_space<vmem>>, vector<3x336xf32>,
    %98 = vector.extract_strided_slice %1 {offsets = [0, 143], sizes = [3, 336], strides = [1, 1]} : vector<3x588xf32> to vector<3x336xf32>
    %c144 = arith.constant 144 : index
    %c0_52 = arith.constant 0 : index
    %99 = vector.load %arg11[%c144, %c0_52] : memref<243x336xf32, #tpu.memory_space<vmem>>, vector<3x336xf32>
    tpu.vector_store %arg11[%c144, %c0_52], %98 {strides = array<i32>} : memref<243x336xf32, #tpu.memory_space<vmem>>, vector<3x336xf32>,
    %100 = vector.extract_strided_slice %1 {offsets = [0, 144], sizes = [3, 336], strides = [1, 1]} : vector<3x588xf32> to vector<3x336xf32>
    %c147 = arith.constant 147 : index
    %c0_53 = arith.constant 0 : index
    %101 = vector.load %arg11[%c147, %c0_53] : memref<243x336xf32, #tpu.memory_space<vmem>>, vector<3x336xf32>
    tpu.vector_store %arg11[%c147, %c0_53], %100 {strides = array<i32>} : memref<243x336xf32, #tpu.memory_space<vmem>>, vector<3x336xf32>,
    %102 = vector.extract_strided_slice %1 {offsets = [0, 145], sizes = [3, 336], strides = [1, 1]} : vector<3x588xf32> to vector<3x336xf32>
    %c150 = arith.constant 150 : index
    %c0_54 = arith.constant 0 : index
    %103 = vector.load %arg11[%c150, %c0_54] : memref<243x336xf32, #tpu.memory_space<vmem>>, vector<3x336xf32>
    tpu.vector_store %arg11[%c150, %c0_54], %102 {strides = array<i32>} : memref<243x336xf32, #tpu.memory_space<vmem>>, vector<3x336xf32>,
    %104 = vector.extract_strided_slice %1 {offsets = [0, 146], sizes = [3, 336], strides = [1, 1]} : vector<3x588xf32> to vector<3x336xf32>
    %c153 = arith.constant 153 : index
    %c0_55 = arith.constant 0 : index
    %105 = vector.load %arg11[%c153, %c0_55] : memref<243x336xf32, #tpu.memory_space<vmem>>, vector<3x336xf32>
    tpu.vector_store %arg11[%c153, %c0_55], %104 {strides = array<i32>} : memref<243x336xf32, #tpu.memory_space<vmem>>, vector<3x336xf32>,
    %106 = vector.extract_strided_slice %1 {offsets = [0, 147], sizes = [3, 336], strides = [1, 1]} : vector<3x588xf32> to vector<3x336xf32>
    %c156 = arith.constant 156 : index
    %c0_56 = arith.constant 0 : index
    %107 = vector.load %arg11[%c156, %c0_56] : memref<243x336xf32, #tpu.memory_space<vmem>>, vector<3x336xf32>
    tpu.vector_store %arg11[%c156, %c0_56], %106 {strides = array<i32>} : memref<243x336xf32, #tpu.memory_space<vmem>>, vector<3x336xf32>,
    %108 = vector.extract_strided_slice %1 {offsets = [0, 148], sizes = [3, 336], strides = [1, 1]} : vector<3x588xf32> to vector<3x336xf32>
    %c159 = arith.constant 159 : index
    %c0_57 = arith.constant 0 : index
    %109 = vector.load %arg11[%c159, %c0_57] : memref<243x336xf32, #tpu.memory_space<vmem>>, vector<3x336xf32>
    tpu.vector_store %arg11[%c159, %c0_57], %108 {strides = array<i32>} : memref<243x336xf32, #tpu.memory_space<vmem>>, vector<3x336xf32>,
    %110 = vector.extract_strided_slice %1 {offsets = [0, 168], sizes = [3, 336], strides = [1, 1]} : vector<3x588xf32> to vector<3x336xf32>
    %c162 = arith.constant 162 : index
    %c0_58 = arith.constant 0 : index
    %111 = vector.load %arg11[%c162, %c0_58] : memref<243x336xf32, #tpu.memory_space<vmem>>, vector<3x336xf32>
    tpu.vector_store %arg11[%c162, %c0_58], %110 {strides = array<i32>} : memref<243x336xf32, #tpu.memory_space<vmem>>, vector<3x336xf32>,
    %112 = vector.extract_strided_slice %1 {offsets = [0, 169], sizes = [3, 336], strides = [1, 1]} : vector<3x588xf32> to vector<3x336xf32>
    %c165 = arith.constant 165 : index
    %c0_59 = arith.constant 0 : index
    %113 = vector.load %arg11[%c165, %c0_59] : memref<243x336xf32, #tpu.memory_space<vmem>>, vector<3x336xf32>
    tpu.vector_store %arg11[%c165, %c0_59], %112 {strides = array<i32>} : memref<243x336xf32, #tpu.memory_space<vmem>>, vector<3x336xf32>,
    %114 = vector.extract_strided_slice %1 {offsets = [0, 170], sizes = [3, 336], strides = [1, 1]} : vector<3x588xf32> to vector<3x336xf32>
    %c168 = arith.constant 168 : index
    %c0_60 = arith.constant 0 : index
    %115 = vector.load %arg11[%c168, %c0_60] : memref<243x336xf32, #tpu.memory_space<vmem>>, vector<3x336xf32>
    tpu.vector_store %arg11[%c168, %c0_60], %114 {strides = array<i32>} : memref<243x336xf32, #tpu.memory_space<vmem>>, vector<3x336xf32>,
    %116 = vector.extract_strided_slice %1 {offsets = [0, 171], sizes = [3, 336], strides = [1, 1]} : vector<3x588xf32> to vector<3x336xf32>
    %c171 = arith.constant 171 : index
    %c0_61 = arith.constant 0 : index
    %117 = vector.load %arg11[%c171, %c0_61] : memref<243x336xf32, #tpu.memory_space<vmem>>, vector<3x336xf32>
    tpu.vector_store %arg11[%c171, %c0_61], %116 {strides = array<i32>} : memref<243x336xf32, #tpu.memory_space<vmem>>, vector<3x336xf32>,
    %118 = vector.extract_strided_slice %1 {offsets = [0, 172], sizes = [3, 336], strides = [1, 1]} : vector<3x588xf32> to vector<3x336xf32>
    %c174 = arith.constant 174 : index
    %c0_62 = arith.constant 0 : index
    %119 = vector.load %arg11[%c174, %c0_62] : memref<243x336xf32, #tpu.memory_space<vmem>>, vector<3x336xf32>
    tpu.vector_store %arg11[%c174, %c0_62], %118 {strides = array<i32>} : memref<243x336xf32, #tpu.memory_space<vmem>>, vector<3x336xf32>,
    %120 = vector.extract_strided_slice %1 {offsets = [0, 173], sizes = [3, 336], strides = [1, 1]} : vector<3x588xf32> to vector<3x336xf32>
    %c177 = arith.constant 177 : index
    %c0_63 = arith.constant 0 : index
    %121 = vector.load %arg11[%c177, %c0_63] : memref<243x336xf32, #tpu.memory_space<vmem>>, vector<3x336xf32>
    tpu.vector_store %arg11[%c177, %c0_63], %120 {strides = array<i32>} : memref<243x336xf32, #tpu.memory_space<vmem>>, vector<3x336xf32>,
    %122 = vector.extract_strided_slice %1 {offsets = [0, 174], sizes = [3, 336], strides = [1, 1]} : vector<3x588xf32> to vector<3x336xf32>
    %c180 = arith.constant 180 : index
    %c0_64 = arith.constant 0 : index
    %123 = vector.load %arg11[%c180, %c0_64] : memref<243x336xf32, #tpu.memory_space<vmem>>, vector<3x336xf32>
    tpu.vector_store %arg11[%c180, %c0_64], %122 {strides = array<i32>} : memref<243x336xf32, #tpu.memory_space<vmem>>, vector<3x336xf32>,
    %124 = vector.extract_strided_slice %1 {offsets = [0, 175], sizes = [3, 336], strides = [1, 1]} : vector<3x588xf32> to vector<3x336xf32>
    %c183 = arith.constant 183 : index
    %c0_65 = arith.constant 0 : index
    %125 = vector.load %arg11[%c183, %c0_65] : memref<243x336xf32, #tpu.memory_space<vmem>>, vector<3x336xf32>
    tpu.vector_store %arg11[%c183, %c0_65], %124 {strides = array<i32>} : memref<243x336xf32, #tpu.memory_space<vmem>>, vector<3x336xf32>,
    %126 = vector.extract_strided_slice %1 {offsets = [0, 176], sizes = [3, 336], strides = [1, 1]} : vector<3x588xf32> to vector<3x336xf32>
    %c186 = arith.constant 186 : index
    %c0_66 = arith.constant 0 : index
    %127 = vector.load %arg11[%c186, %c0_66] : memref<243x336xf32, #tpu.memory_space<vmem>>, vector<3x336xf32>
    tpu.vector_store %arg11[%c186, %c0_66], %126 {strides = array<i32>} : memref<243x336xf32, #tpu.memory_space<vmem>>, vector<3x336xf32>,
    %128 = vector.extract_strided_slice %1 {offsets = [0, 196], sizes = [3, 336], strides = [1, 1]} : vector<3x588xf32> to vector<3x336xf32>
    %c189 = arith.constant 189 : index
    %c0_67 = arith.constant 0 : index
    %129 = vector.load %arg11[%c189, %c0_67] : memref<243x336xf32, #tpu.memory_space<vmem>>, vector<3x336xf32>
    tpu.vector_store %arg11[%c189, %c0_67], %128 {strides = array<i32>} : memref<243x336xf32, #tpu.memory_space<vmem>>, vector<3x336xf32>,
    %130 = vector.extract_strided_slice %1 {offsets = [0, 197], sizes = [3, 336], strides = [1, 1]} : vector<3x588xf32> to vector<3x336xf32>
    %c192 = arith.constant 192 : index
    %c0_68 = arith.constant 0 : index
    %131 = vector.load %arg11[%c192, %c0_68] : memref<243x336xf32, #tpu.memory_space<vmem>>, vector<3x336xf32>
    tpu.vector_store %arg11[%c192, %c0_68], %130 {strides = array<i32>} : memref<243x336xf32, #tpu.memory_space<vmem>>, vector<3x336xf32>,
    %132 = vector.extract_strided_slice %1 {offsets = [0, 198], sizes = [3, 336], strides = [1, 1]} : vector<3x588xf32> to vector<3x336xf32>
    %c195 = arith.constant 195 : index
    %c0_69 = arith.constant 0 : index
    %133 = vector.load %arg11[%c195, %c0_69] : memref<243x336xf32, #tpu.memory_space<vmem>>, vector<3x336xf32>
    tpu.vector_store %arg11[%c195, %c0_69], %132 {strides = array<i32>} : memref<243x336xf32, #tpu.memory_space<vmem>>, vector<3x336xf32>,
    %134 = vector.extract_strided_slice %1 {offsets = [0, 199], sizes = [3, 336], strides = [1, 1]} : vector<3x588xf32> to vector<3x336xf32>
    %c198 = arith.constant 198 : index
    %c0_70 = arith.constant 0 : index
    %135 = vector.load %arg11[%c198, %c0_70] : memref<243x336xf32, #tpu.memory_space<vmem>>, vector<3x336xf32>
    tpu.vector_store %arg11[%c198, %c0_70], %134 {strides = array<i32>} : memref<243x336xf32, #tpu.memory_space<vmem>>, vector<3x336xf32>,
    %136 = vector.extract_strided_slice %1 {offsets = [0, 200], sizes = [3, 336], strides = [1, 1]} : vector<3x588xf32> to vector<3x336xf32>
    %c201 = arith.constant 201 : index
    %c0_71 = arith.constant 0 : index
    %137 = vector.load %arg11[%c201, %c0_71] : memref<243x336xf32, #tpu.memory_space<vmem>>, vector<3x336xf32>
    tpu.vector_store %arg11[%c201, %c0_71], %136 {strides = array<i32>} : memref<243x336xf32, #tpu.memory_space<vmem>>, vector<3x336xf32>,
    %138 = vector.extract_strided_slice %1 {offsets = [0, 201], sizes = [3, 336], strides = [1, 1]} : vector<3x588xf32> to vector<3x336xf32>
    %c204 = arith.constant 204 : index
    %c0_72 = arith.constant 0 : index
    %139 = vector.load %arg11[%c204, %c0_72] : memref<243x336xf32, #tpu.memory_space<vmem>>, vector<3x336xf32>
    tpu.vector_store %arg11[%c204, %c0_72], %138 {strides = array<i32>} : memref<243x336xf32, #tpu.memory_space<vmem>>, vector<3x336xf32>,
    %140 = vector.extract_strided_slice %1 {offsets = [0, 202], sizes = [3, 336], strides = [1, 1]} : vector<3x588xf32> to vector<3x336xf32>
    %c207 = arith.constant 207 : index
    %c0_73 = arith.constant 0 : index
    %141 = vector.load %arg11[%c207, %c0_73] : memref<243x336xf32, #tpu.memory_space<vmem>>, vector<3x336xf32>
    tpu.vector_store %arg11[%c207, %c0_73], %140 {strides = array<i32>} : memref<243x336xf32, #tpu.memory_space<vmem>>, vector<3x336xf32>,
    %142 = vector.extract_strided_slice %1 {offsets = [0, 203], sizes = [3, 336], strides = [1, 1]} : vector<3x588xf32> to vector<3x336xf32>
    %c210 = arith.constant 210 : index
    %c0_74 = arith.constant 0 : index
    %143 = vector.load %arg11[%c210, %c0_74] : memref<243x336xf32, #tpu.memory_space<vmem>>, vector<3x336xf32>
    tpu.vector_store %arg11[%c210, %c0_74], %142 {strides = array<i32>} : memref<243x336xf32, #tpu.memory_space<vmem>>, vector<3x336xf32>,
    %144 = vector.extract_strided_slice %1 {offsets = [0, 204], sizes = [3, 336], strides = [1, 1]} : vector<3x588xf32> to vector<3x336xf32>
    %c213 = arith.constant 213 : index
    %c0_75 = arith.constant 0 : index
    %145 = vector.load %arg11[%c213, %c0_75] : memref<243x336xf32, #tpu.memory_space<vmem>>, vector<3x336xf32>
    tpu.vector_store %arg11[%c213, %c0_75], %144 {strides = array<i32>} : memref<243x336xf32, #tpu.memory_space<vmem>>, vector<3x336xf32>,
    %146 = vector.extract_strided_slice %1 {offsets = [0, 224], sizes = [3, 336], strides = [1, 1]} : vector<3x588xf32> to vector<3x336xf32>
    %c216 = arith.constant 216 : index
    %c0_76 = arith.constant 0 : index
    %147 = vector.load %arg11[%c216, %c0_76] : memref<243x336xf32, #tpu.memory_space<vmem>>, vector<3x336xf32>
    tpu.vector_store %arg11[%c216, %c0_76], %146 {strides = array<i32>} : memref<243x336xf32, #tpu.memory_space<vmem>>, vector<3x336xf32>,
    %148 = vector.extract_strided_slice %1 {offsets = [0, 225], sizes = [3, 336], strides = [1, 1]} : vector<3x588xf32> to vector<3x336xf32>
    %c219 = arith.constant 219 : index
    %c0_77 = arith.constant 0 : index
    %149 = vector.load %arg11[%c219, %c0_77] : memref<243x336xf32, #tpu.memory_space<vmem>>, vector<3x336xf32>
    tpu.vector_store %arg11[%c219, %c0_77], %148 {strides = array<i32>} : memref<243x336xf32, #tpu.memory_space<vmem>>, vector<3x336xf32>,
    %150 = vector.extract_strided_slice %1 {offsets = [0, 226], sizes = [3, 336], strides = [1, 1]} : vector<3x588xf32> to vector<3x336xf32>
    %c222 = arith.constant 222 : index
    %c0_78 = arith.constant 0 : index
    %151 = vector.load %arg11[%c222, %c0_78] : memref<243x336xf32, #tpu.memory_space<vmem>>, vector<3x336xf32>
    tpu.vector_store %arg11[%c222, %c0_78], %150 {strides = array<i32>} : memref<243x336xf32, #tpu.memory_space<vmem>>, vector<3x336xf32>,
    %152 = vector.extract_strided_slice %1 {offsets = [0, 227], sizes = [3, 336], strides = [1, 1]} : vector<3x588xf32> to vector<3x336xf32>
    %c225 = arith.constant 225 : index
    %c0_79 = arith.constant 0 : index
    %153 = vector.load %arg11[%c225, %c0_79] : memref<243x336xf32, #tpu.memory_space<vmem>>, vector<3x336xf32>
    tpu.vector_store %arg11[%c225, %c0_79], %152 {strides = array<i32>} : memref<243x336xf32, #tpu.memory_space<vmem>>, vector<3x336xf32>,
    %154 = vector.extract_strided_slice %1 {offsets = [0, 228], sizes = [3, 336], strides = [1, 1]} : vector<3x588xf32> to vector<3x336xf32>
    %c228 = arith.constant 228 : index
    %c0_80 = arith.constant 0 : index
    %155 = vector.load %arg11[%c228, %c0_80] : memref<243x336xf32, #tpu.memory_space<vmem>>, vector<3x336xf32>
    tpu.vector_store %arg11[%c228, %c0_80], %154 {strides = array<i32>} : memref<243x336xf32, #tpu.memory_space<vmem>>, vector<3x336xf32>,
    %156 = vector.extract_strided_slice %1 {offsets = [0, 229], sizes = [3, 336], strides = [1, 1]} : vector<3x588xf32> to vector<3x336xf32>
    %c231 = arith.constant 231 : index
    %c0_81 = arith.constant 0 : index
    %157 = vector.load %arg11[%c231, %c0_81] : memref<243x336xf32, #tpu.memory_space<vmem>>, vector<3x336xf32>
    tpu.vector_store %arg11[%c231, %c0_81], %156 {strides = array<i32>} : memref<243x336xf32, #tpu.memory_space<vmem>>, vector<3x336xf32>,
    %158 = vector.extract_strided_slice %1 {offsets = [0, 230], sizes = [3, 336], strides = [1, 1]} : vector<3x588xf32> to vector<3x336xf32>
    %c234 = arith.constant 234 : index
    %c0_82 = arith.constant 0 : index
    %159 = vector.load %arg11[%c234, %c0_82] : memref<243x336xf32, #tpu.memory_space<vmem>>, vector<3x336xf32>
    tpu.vector_store %arg11[%c234, %c0_82], %158 {strides = array<i32>} : memref<243x336xf32, #tpu.memory_space<vmem>>, vector<3x336xf32>,
    %160 = vector.extract_strided_slice %1 {offsets = [0, 231], sizes = [3, 336], strides = [1, 1]} : vector<3x588xf32> to vector<3x336xf32>
    %c237 = arith.constant 237 : index
    %c0_83 = arith.constant 0 : index
    %161 = vector.load %arg11[%c237, %c0_83] : memref<243x336xf32, #tpu.memory_space<vmem>>, vector<3x336xf32>
    tpu.vector_store %arg11[%c237, %c0_83], %160 {strides = array<i32>} : memref<243x336xf32, #tpu.memory_space<vmem>>, vector<3x336xf32>,
    %162 = vector.extract_strided_slice %1 {offsets = [0, 232], sizes = [3, 336], strides = [1, 1]} : vector<3x588xf32> to vector<3x336xf32>
    %c240 = arith.constant 240 : index
    %c0_84 = arith.constant 0 : index
    %163 = vector.load %arg11[%c240, %c0_84] : memref<243x336xf32, #tpu.memory_space<vmem>>, vector<3x336xf32>
    tpu.vector_store %arg11[%c240, %c0_84], %162 {strides = array<i32>} : memref<243x336xf32, #tpu.memory_space<vmem>>, vector<3x336xf32>,
    %c0_85 = arith.constant 0 : index
    %c0_86 = arith.constant 0 : index
    %164 = vector.load %arg4[%c0_85, %c0_86] : memref<32x243xbf16, #tpu.memory_space<vmem>>, vector<32x243xbf16>
    %c0_87 = arith.constant 0 : index
    %c0_88 = arith.constant 0 : index
    %165 = vector.load %arg11[%c0_87, %c0_88] : memref<243x336xf32, #tpu.memory_space<vmem>>, vector<243x336xf32>
    %166 = arith.truncf %165 : vector<243x336xf32> to vector<243x336xbf16>
    %cst = arith.constant dense<0.000000e+00> : vector<32x336xf32>
    %167 = tpu.matmul %164, %166, %cst {dimension_numbers = #tpu.dot_dimension_numbers<[1], [0], [0], [1], [0, 0, 1, 1], [], []>} : vector<32x243xbf16>, vector<243x336xbf16>, vector<32x336xf32> -> vector<32x336xf32>
    %c0_89 = arith.constant 0 : index
    %c0_90 = arith.constant 0 : index
    %168 = vector.load %arg5[%c0_89, %c0_90] : memref<32x1xf32, #tpu.memory_space<vmem>>, vector<32x1xf32>
    %169 = vector.broadcast %168 : vector<32x1xf32> to vector<32x336xf32>
    %170 = arith.addf %167, %169 : vector<32x336xf32>
    %cst_91 = arith.constant 0.000000e+00 : f32
    %171 = vector.broadcast %cst_91 : f32 to vector<32x336xf32>
    %172 = arith.maximumf %170, %171 : vector<32x336xf32>
    %c0_92 = arith.constant 0 : index
    %c0_93 = arith.constant 0 : index
    %173 = vector.load %arg6[%c0_92, %c0_93] : memref<16x32xbf16, #tpu.memory_space<vmem>>, vector<16x32xbf16>
    %174 = arith.truncf %172 : vector<32x336xf32> to vector<32x336xbf16>
    %cst_94 = arith.constant dense<0.000000e+00> : vector<16x336xf32>
    %175 = tpu.matmul %173, %174, %cst_94 {dimension_numbers = #tpu.dot_dimension_numbers<[1], [0], [0], [1], [0, 0, 1, 1], [], []>} : vector<16x32xbf16>, vector<32x336xbf16>, vector<16x336xf32> -> vector<16x336xf32>
    %c0_95 = arith.constant 0 : index
    %c0_96 = arith.constant 0 : index
    %176 = vector.load %arg7[%c0_95, %c0_96] : memref<16x1xf32, #tpu.memory_space<vmem>>, vector<16x1xf32>
    %177 = vector.broadcast %176 : vector<16x1xf32> to vector<16x336xf32>
    %178 = arith.addf %175, %177 : vector<16x336xf32>
    %cst_97 = arith.constant 0.000000e+00 : f32
    %179 = vector.broadcast %cst_97 : f32 to vector<16x336xf32>
    %180 = arith.maximumf %178, %179 : vector<16x336xf32>
    %c0_98 = arith.constant 0 : index
    %c0_99 = arith.constant 0 : index
    %c0_100 = arith.constant 0 : index
    %181 = vector.load %arg3[%c0_98, %c0_99, %c0_100] : memref<1x1x336xf32, #tpu.memory_space<vmem>>, vector<1x1x336xf32>
    %182 = vector.shape_cast %181 : vector<1x1x336xf32> to vector<1x336xf32>
    %183 = vector.broadcast %182 : vector<1x336xf32> to vector<16x336xf32>
    %184 = arith.mulf %180, %183 : vector<16x336xf32>
    %185 = vector.extract_strided_slice %184 {offsets = [0, 0], sizes = [16, 212], strides = [1, 1]} : vector<16x336xf32> to vector<16x212xf32>
    %c0_101 = arith.constant 0 : index
    %c0_102 = arith.constant 0 : index
    %186 = vector.load %arg12[%c0_101, %c0_102] : memref<400x212xf32, #tpu.memory_space<vmem>>, vector<16x212xf32>
    tpu.vector_store %arg12[%c0_101, %c0_102], %185 {strides = array<i32>} : memref<400x212xf32, #tpu.memory_space<vmem>>, vector<16x212xf32>,
    %187 = vector.extract_strided_slice %184 {offsets = [0, 1], sizes = [16, 212], strides = [1, 1]} : vector<16x336xf32> to vector<16x212xf32>
    %c16 = arith.constant 16 : index
    %c0_103 = arith.constant 0 : index
    %188 = vector.load %arg12[%c16, %c0_103] : memref<400x212xf32, #tpu.memory_space<vmem>>, vector<16x212xf32>
    tpu.vector_store %arg12[%c16, %c0_103], %187 {strides = array<i32>} : memref<400x212xf32, #tpu.memory_space<vmem>>, vector<16x212xf32>,
    %189 = vector.extract_strided_slice %184 {offsets = [0, 2], sizes = [16, 212], strides = [1, 1]} : vector<16x336xf32> to vector<16x212xf32>
    %c32 = arith.constant 32 : index
    %c0_104 = arith.constant 0 : index
    %190 = vector.load %arg12[%c32, %c0_104] : memref<400x212xf32, #tpu.memory_space<vmem>>, vector<16x212xf32>
    tpu.vector_store %arg12[%c32, %c0_104], %189 {strides = array<i32>} : memref<400x212xf32, #tpu.memory_space<vmem>>, vector<16x212xf32>,
    %191 = vector.extract_strided_slice %184 {offsets = [0, 3], sizes = [16, 212], strides = [1, 1]} : vector<16x336xf32> to vector<16x212xf32>
    %c48_105 = arith.constant 48 : index
    %c0_106 = arith.constant 0 : index
    %192 = vector.load %arg12[%c48_105, %c0_106] : memref<400x212xf32, #tpu.memory_space<vmem>>, vector<16x212xf32>
    tpu.vector_store %arg12[%c48_105, %c0_106], %191 {strides = array<i32>} : memref<400x212xf32, #tpu.memory_space<vmem>>, vector<16x212xf32>,
    %193 = vector.extract_strided_slice %184 {offsets = [0, 4], sizes = [16, 212], strides = [1, 1]} : vector<16x336xf32> to vector<16x212xf32>
    %c64 = arith.constant 64 : index
    %c0_107 = arith.constant 0 : index
    %194 = vector.load %arg12[%c64, %c0_107] : memref<400x212xf32, #tpu.memory_space<vmem>>, vector<16x212xf32>
    tpu.vector_store %arg12[%c64, %c0_107], %193 {strides = array<i32>} : memref<400x212xf32, #tpu.memory_space<vmem>>, vector<16x212xf32>,
    %195 = vector.extract_strided_slice %184 {offsets = [0, 28], sizes = [16, 212], strides = [1, 1]} : vector<16x336xf32> to vector<16x212xf32>
    %c80 = arith.constant 80 : index
    %c0_108 = arith.constant 0 : index
    %196 = vector.load %arg12[%c80, %c0_108] : memref<400x212xf32, #tpu.memory_space<vmem>>, vector<16x212xf32>
    tpu.vector_store %arg12[%c80, %c0_108], %195 {strides = array<i32>} : memref<400x212xf32, #tpu.memory_space<vmem>>, vector<16x212xf32>,
    %197 = vector.extract_strided_slice %184 {offsets = [0, 29], sizes = [16, 212], strides = [1, 1]} : vector<16x336xf32> to vector<16x212xf32>
    %c96_109 = arith.constant 96 : index
    %c0_110 = arith.constant 0 : index
    %198 = vector.load %arg12[%c96_109, %c0_110] : memref<400x212xf32, #tpu.memory_space<vmem>>, vector<16x212xf32>
    tpu.vector_store %arg12[%c96_109, %c0_110], %197 {strides = array<i32>} : memref<400x212xf32, #tpu.memory_space<vmem>>, vector<16x212xf32>,
    %199 = vector.extract_strided_slice %184 {offsets = [0, 30], sizes = [16, 212], strides = [1, 1]} : vector<16x336xf32> to vector<16x212xf32>
    %c112 = arith.constant 112 : index
    %c0_111 = arith.constant 0 : index
    %200 = vector.load %arg12[%c112, %c0_111] : memref<400x212xf32, #tpu.memory_space<vmem>>, vector<16x212xf32>
    tpu.vector_store %arg12[%c112, %c0_111], %199 {strides = array<i32>} : memref<400x212xf32, #tpu.memory_space<vmem>>, vector<16x212xf32>,
    %201 = vector.extract_strided_slice %184 {offsets = [0, 31], sizes = [16, 212], strides = [1, 1]} : vector<16x336xf32> to vector<16x212xf32>
    %c128 = arith.constant 128 : index
    %c0_112 = arith.constant 0 : index
    %202 = vector.load %arg12[%c128, %c0_112] : memref<400x212xf32, #tpu.memory_space<vmem>>, vector<16x212xf32>
    tpu.vector_store %arg12[%c128, %c0_112], %201 {strides = array<i32>} : memref<400x212xf32, #tpu.memory_space<vmem>>, vector<16x212xf32>,
    %203 = vector.extract_strided_slice %184 {offsets = [0, 32], sizes = [16, 212], strides = [1, 1]} : vector<16x336xf32> to vector<16x212xf32>
    %c144_113 = arith.constant 144 : index
    %c0_114 = arith.constant 0 : index
    %204 = vector.load %arg12[%c144_113, %c0_114] : memref<400x212xf32, #tpu.memory_space<vmem>>, vector<16x212xf32>
    tpu.vector_store %arg12[%c144_113, %c0_114], %203 {strides = array<i32>} : memref<400x212xf32, #tpu.memory_space<vmem>>, vector<16x212xf32>,
    %205 = vector.extract_strided_slice %184 {offsets = [0, 56], sizes = [16, 212], strides = [1, 1]} : vector<16x336xf32> to vector<16x212xf32>
    %c160 = arith.constant 160 : index
    %c0_115 = arith.constant 0 : index
    %206 = vector.load %arg12[%c160, %c0_115] : memref<400x212xf32, #tpu.memory_space<vmem>>, vector<16x212xf32>
    tpu.vector_store %arg12[%c160, %c0_115], %205 {strides = array<i32>} : memref<400x212xf32, #tpu.memory_space<vmem>>, vector<16x212xf32>,
    %207 = vector.extract_strided_slice %184 {offsets = [0, 57], sizes = [16, 212], strides = [1, 1]} : vector<16x336xf32> to vector<16x212xf32>
    %c176 = arith.constant 176 : index
    %c0_116 = arith.constant 0 : index
    %208 = vector.load %arg12[%c176, %c0_116] : memref<400x212xf32, #tpu.memory_space<vmem>>, vector<16x212xf32>
    tpu.vector_store %arg12[%c176, %c0_116], %207 {strides = array<i32>} : memref<400x212xf32, #tpu.memory_space<vmem>>, vector<16x212xf32>,
    %209 = vector.extract_strided_slice %184 {offsets = [0, 58], sizes = [16, 212], strides = [1, 1]} : vector<16x336xf32> to vector<16x212xf32>
    %c192_117 = arith.constant 192 : index
    %c0_118 = arith.constant 0 : index
    %210 = vector.load %arg12[%c192_117, %c0_118] : memref<400x212xf32, #tpu.memory_space<vmem>>, vector<16x212xf32>
    tpu.vector_store %arg12[%c192_117, %c0_118], %209 {strides = array<i32>} : memref<400x212xf32, #tpu.memory_space<vmem>>, vector<16x212xf32>,
    %211 = vector.extract_strided_slice %184 {offsets = [0, 59], sizes = [16, 212], strides = [1, 1]} : vector<16x336xf32> to vector<16x212xf32>
    %c208 = arith.constant 208 : index
    %c0_119 = arith.constant 0 : index
    %212 = vector.load %arg12[%c208, %c0_119] : memref<400x212xf32, #tpu.memory_space<vmem>>, vector<16x212xf32>
    tpu.vector_store %arg12[%c208, %c0_119], %211 {strides = array<i32>} : memref<400x212xf32, #tpu.memory_space<vmem>>, vector<16x212xf32>,
    %213 = vector.extract_strided_slice %184 {offsets = [0, 60], sizes = [16, 212], strides = [1, 1]} : vector<16x336xf32> to vector<16x212xf32>
    %c224 = arith.constant 224 : index
    %c0_120 = arith.constant 0 : index
    %214 = vector.load %arg12[%c224, %c0_120] : memref<400x212xf32, #tpu.memory_space<vmem>>, vector<16x212xf32>
    tpu.vector_store %arg12[%c224, %c0_120], %213 {strides = array<i32>} : memref<400x212xf32, #tpu.memory_space<vmem>>, vector<16x212xf32>,
    %215 = vector.extract_strided_slice %184 {offsets = [0, 84], sizes = [16, 212], strides = [1, 1]} : vector<16x336xf32> to vector<16x212xf32>
    %c240_121 = arith.constant 240 : index
    %c0_122 = arith.constant 0 : index
    %216 = vector.load %arg12[%c240_121, %c0_122] : memref<400x212xf32, #tpu.memory_space<vmem>>, vector<16x212xf32>
    tpu.vector_store %arg12[%c240_121, %c0_122], %215 {strides = array<i32>} : memref<400x212xf32, #tpu.memory_space<vmem>>, vector<16x212xf32>,
    %217 = vector.extract_strided_slice %184 {offsets = [0, 85], sizes = [16, 212], strides = [1, 1]} : vector<16x336xf32> to vector<16x212xf32>
    %c256 = arith.constant 256 : index
    %c0_123 = arith.constant 0 : index
    %218 = vector.load %arg12[%c256, %c0_123] : memref<400x212xf32, #tpu.memory_space<vmem>>, vector<16x212xf32>
    tpu.vector_store %arg12[%c256, %c0_123], %217 {strides = array<i32>} : memref<400x212xf32, #tpu.memory_space<vmem>>, vector<16x212xf32>,
    %219 = vector.extract_strided_slice %184 {offsets = [0, 86], sizes = [16, 212], strides = [1, 1]} : vector<16x336xf32> to vector<16x212xf32>
    %c272 = arith.constant 272 : index
    %c0_124 = arith.constant 0 : index
    %220 = vector.load %arg12[%c272, %c0_124] : memref<400x212xf32, #tpu.memory_space<vmem>>, vector<16x212xf32>
    tpu.vector_store %arg12[%c272, %c0_124], %219 {strides = array<i32>} : memref<400x212xf32, #tpu.memory_space<vmem>>, vector<16x212xf32>,
    %221 = vector.extract_strided_slice %184 {offsets = [0, 87], sizes = [16, 212], strides = [1, 1]} : vector<16x336xf32> to vector<16x212xf32>
    %c288 = arith.constant 288 : index
    %c0_125 = arith.constant 0 : index
    %222 = vector.load %arg12[%c288, %c0_125] : memref<400x212xf32, #tpu.memory_space<vmem>>, vector<16x212xf32>
    tpu.vector_store %arg12[%c288, %c0_125], %221 {strides = array<i32>} : memref<400x212xf32, #tpu.memory_space<vmem>>, vector<16x212xf32>,
    %223 = vector.extract_strided_slice %184 {offsets = [0, 88], sizes = [16, 212], strides = [1, 1]} : vector<16x336xf32> to vector<16x212xf32>
    %c304 = arith.constant 304 : index
    %c0_126 = arith.constant 0 : index
    %224 = vector.load %arg12[%c304, %c0_126] : memref<400x212xf32, #tpu.memory_space<vmem>>, vector<16x212xf32>
    tpu.vector_store %arg12[%c304, %c0_126], %223 {strides = array<i32>} : memref<400x212xf32, #tpu.memory_space<vmem>>, vector<16x212xf32>,
    %225 = vector.extract_strided_slice %184 {offsets = [0, 112], sizes = [16, 212], strides = [1, 1]} : vector<16x336xf32> to vector<16x212xf32>
    %c320 = arith.constant 320 : index
    %c0_127 = arith.constant 0 : index
    %226 = vector.load %arg12[%c320, %c0_127] : memref<400x212xf32, #tpu.memory_space<vmem>>, vector<16x212xf32>
    tpu.vector_store %arg12[%c320, %c0_127], %225 {strides = array<i32>} : memref<400x212xf32, #tpu.memory_space<vmem>>, vector<16x212xf32>,
    %227 = vector.extract_strided_slice %184 {offsets = [0, 113], sizes = [16, 212], strides = [1, 1]} : vector<16x336xf32> to vector<16x212xf32>
    %c336 = arith.constant 336 : index
    %c0_128 = arith.constant 0 : index
    %228 = vector.load %arg12[%c336, %c0_128] : memref<400x212xf32, #tpu.memory_space<vmem>>, vector<16x212xf32>
    tpu.vector_store %arg12[%c336, %c0_128], %227 {strides = array<i32>} : memref<400x212xf32, #tpu.memory_space<vmem>>, vector<16x212xf32>,
    %229 = vector.extract_strided_slice %184 {offsets = [0, 114], sizes = [16, 212], strides = [1, 1]} : vector<16x336xf32> to vector<16x212xf32>
    %c352 = arith.constant 352 : index
    %c0_129 = arith.constant 0 : index
    %230 = vector.load %arg12[%c352, %c0_129] : memref<400x212xf32, #tpu.memory_space<vmem>>, vector<16x212xf32>
    tpu.vector_store %arg12[%c352, %c0_129], %229 {strides = array<i32>} : memref<400x212xf32, #tpu.memory_space<vmem>>, vector<16x212xf32>,
    %231 = vector.extract_strided_slice %184 {offsets = [0, 115], sizes = [16, 212], strides = [1, 1]} : vector<16x336xf32> to vector<16x212xf32>
    %c368 = arith.constant 368 : index
    %c0_130 = arith.constant 0 : index
    %232 = vector.load %arg12[%c368, %c0_130] : memref<400x212xf32, #tpu.memory_space<vmem>>, vector<16x212xf32>
    tpu.vector_store %arg12[%c368, %c0_130], %231 {strides = array<i32>} : memref<400x212xf32, #tpu.memory_space<vmem>>, vector<16x212xf32>,
    %233 = vector.extract_strided_slice %184 {offsets = [0, 116], sizes = [16, 212], strides = [1, 1]} : vector<16x336xf32> to vector<16x212xf32>
    %c384 = arith.constant 384 : index
    %c0_131 = arith.constant 0 : index
    %234 = vector.load %arg12[%c384, %c0_131] : memref<400x212xf32, #tpu.memory_space<vmem>>, vector<16x212xf32>
    tpu.vector_store %arg12[%c384, %c0_131], %233 {strides = array<i32>} : memref<400x212xf32, #tpu.memory_space<vmem>>, vector<16x212xf32>,
    %c0_132 = arith.constant 0 : index
    %c0_133 = arith.constant 0 : index
    %235 = vector.load %arg8[%c0_132, %c0_133] : memref<3x400xbf16, #tpu.memory_space<vmem>>, vector<3x400xbf16>
    %c0_134 = arith.constant 0 : index
    %c0_135 = arith.constant 0 : index
    %236 = vector.load %arg12[%c0_134, %c0_135] : memref<400x212xf32, #tpu.memory_space<vmem>>, vector<400x212xf32>
    %237 = arith.truncf %236 : vector<400x212xf32> to vector<400x212xbf16>
    %cst_136 = arith.constant dense<0.000000e+00> : vector<3x212xf32>
    %238 = tpu.matmul %235, %237, %cst_136 {dimension_numbers = #tpu.dot_dimension_numbers<[1], [0], [0], [1], [0, 0, 1, 1], [], []>} : vector<3x400xbf16>, vector<400x212xbf16>, vector<3x212xf32> -> vector<3x212xf32>
    %c0_137 = arith.constant 0 : index
    %c0_138 = arith.constant 0 : index
    %239 = vector.load %arg9[%c0_137, %c0_138] : memref<3x1xf32, #tpu.memory_space<vmem>>, vector<3x1xf32>
    %240 = vector.broadcast %239 : vector<3x1xf32> to vector<3x212xf32>
    %241 = arith.addf %238, %240 : vector<3x212xf32>
    %242 = vector.extract_strided_slice %241 {offsets = [0, 0], sizes = [3, 16], strides = [1, 1]} : vector<3x212xf32> to vector<3x16xf32>
    %c0_139 = arith.constant 0 : index
    %c0_140 = arith.constant 0 : index
    %c0_141 = arith.constant 0 : index
    %c0_142 = arith.constant 0 : index
    %243 = vector.load %arg10[%c0_139, %c0_140, %c0_141, %c0_142] : memref<1x3x8x16xf32, #tpu.memory_space<vmem>>, vector<1x3x1x16xf32>
    %244 = vector.shape_cast %243 : vector<1x3x1x16xf32> to vector<3x16xf32>
    %245 = vector.shape_cast %242 : vector<3x16xf32> to vector<1x3x1x16xf32>
    tpu.vector_store %arg10[%c0_139, %c0_140, %c0_141, %c0_142], %245 {strides = array<i32>} : memref<1x3x8x16xf32, #tpu.memory_space<vmem>>, vector<1x3x1x16xf32>,
    %246 = vector.extract_strided_slice %241 {offsets = [0, 28], sizes = [3, 16], strides = [1, 1]} : vector<3x212xf32> to vector<3x16xf32>
    %c0_143 = arith.constant 0 : index
    %c0_144 = arith.constant 0 : index
    %c1 = arith.constant 1 : index
    %c0_145 = arith.constant 0 : index
    %247 = vector.load %arg10[%c0_143, %c0_144, %c1, %c0_145] : memref<1x3x8x16xf32, #tpu.memory_space<vmem>>, vector<1x3x1x16xf32>
    %248 = vector.shape_cast %247 : vector<1x3x1x16xf32> to vector<3x16xf32>
    %249 = vector.shape_cast %246 : vector<3x16xf32> to vector<1x3x1x16xf32>
    tpu.vector_store %arg10[%c0_143, %c0_144, %c1, %c0_145], %249 {strides = array<i32>} : memref<1x3x8x16xf32, #tpu.memory_space<vmem>>, vector<1x3x1x16xf32>,
    %250 = vector.extract_strided_slice %241 {offsets = [0, 56], sizes = [3, 16], strides = [1, 1]} : vector<3x212xf32> to vector<3x16xf32>
    %c0_146 = arith.constant 0 : index
    %c0_147 = arith.constant 0 : index
    %c2 = arith.constant 2 : index
    %c0_148 = arith.constant 0 : index
    %251 = vector.load %arg10[%c0_146, %c0_147, %c2, %c0_148] : memref<1x3x8x16xf32, #tpu.memory_space<vmem>>, vector<1x3x1x16xf32>
    %252 = vector.shape_cast %251 : vector<1x3x1x16xf32> to vector<3x16xf32>
    %253 = vector.shape_cast %250 : vector<3x16xf32> to vector<1x3x1x16xf32>
    tpu.vector_store %arg10[%c0_146, %c0_147, %c2, %c0_148], %253 {strides = array<i32>} : memref<1x3x8x16xf32, #tpu.memory_space<vmem>>, vector<1x3x1x16xf32>,
    %254 = vector.extract_strided_slice %241 {offsets = [0, 84], sizes = [3, 16], strides = [1, 1]} : vector<3x212xf32> to vector<3x16xf32>
    %c0_149 = arith.constant 0 : index
    %c0_150 = arith.constant 0 : index
    %c3_151 = arith.constant 3 : index
    %c0_152 = arith.constant 0 : index
    %255 = vector.load %arg10[%c0_149, %c0_150, %c3_151, %c0_152] : memref<1x3x8x16xf32, #tpu.memory_space<vmem>>, vector<1x3x1x16xf32>
    %256 = vector.shape_cast %255 : vector<1x3x1x16xf32> to vector<3x16xf32>
    %257 = vector.shape_cast %254 : vector<3x16xf32> to vector<1x3x1x16xf32>
    tpu.vector_store %arg10[%c0_149, %c0_150, %c3_151, %c0_152], %257 {strides = array<i32>} : memref<1x3x8x16xf32, #tpu.memory_space<vmem>>, vector<1x3x1x16xf32>,
    %258 = vector.extract_strided_slice %241 {offsets = [0, 112], sizes = [3, 16], strides = [1, 1]} : vector<3x212xf32> to vector<3x16xf32>
    %c0_153 = arith.constant 0 : index
    %c0_154 = arith.constant 0 : index
    %c4 = arith.constant 4 : index
    %c0_155 = arith.constant 0 : index
    %259 = vector.load %arg10[%c0_153, %c0_154, %c4, %c0_155] : memref<1x3x8x16xf32, #tpu.memory_space<vmem>>, vector<1x3x1x16xf32>
    %260 = vector.shape_cast %259 : vector<1x3x1x16xf32> to vector<3x16xf32>
    %261 = vector.shape_cast %258 : vector<3x16xf32> to vector<1x3x1x16xf32>
    tpu.vector_store %arg10[%c0_153, %c0_154, %c4, %c0_155], %261 {strides = array<i32>} : memref<1x3x8x16xf32, #tpu.memory_space<vmem>>, vector<1x3x1x16xf32>,
    %262 = vector.extract_strided_slice %241 {offsets = [0, 140], sizes = [3, 16], strides = [1, 1]} : vector<3x212xf32> to vector<3x16xf32>
    %c0_156 = arith.constant 0 : index
    %c0_157 = arith.constant 0 : index
    %c5 = arith.constant 5 : index
    %c0_158 = arith.constant 0 : index
    %263 = vector.load %arg10[%c0_156, %c0_157, %c5, %c0_158] : memref<1x3x8x16xf32, #tpu.memory_space<vmem>>, vector<1x3x1x16xf32>
    %264 = vector.shape_cast %263 : vector<1x3x1x16xf32> to vector<3x16xf32>
    %265 = vector.shape_cast %262 : vector<3x16xf32> to vector<1x3x1x16xf32>
    tpu.vector_store %arg10[%c0_156, %c0_157, %c5, %c0_158], %265 {strides = array<i32>} : memref<1x3x8x16xf32, #tpu.memory_space<vmem>>, vector<1x3x1x16xf32>,
    %266 = vector.extract_strided_slice %241 {offsets = [0, 168], sizes = [3, 16], strides = [1, 1]} : vector<3x212xf32> to vector<3x16xf32>
    %c0_159 = arith.constant 0 : index
    %c0_160 = arith.constant 0 : index
    %c6_161 = arith.constant 6 : index
    %c0_162 = arith.constant 0 : index
    %267 = vector.load %arg10[%c0_159, %c0_160, %c6_161, %c0_162] : memref<1x3x8x16xf32, #tpu.memory_space<vmem>>, vector<1x3x1x16xf32>
    %268 = vector.shape_cast %267 : vector<1x3x1x16xf32> to vector<3x16xf32>
    %269 = vector.shape_cast %266 : vector<3x16xf32> to vector<1x3x1x16xf32>
    tpu.vector_store %arg10[%c0_159, %c0_160, %c6_161, %c0_162], %269 {strides = array<i32>} : memref<1x3x8x16xf32, #tpu.memory_space<vmem>>, vector<1x3x1x16xf32>,
    %270 = vector.extract_strided_slice %241 {offsets = [0, 196], sizes = [3, 16], strides = [1, 1]} : vector<3x212xf32> to vector<3x16xf32>
    %c0_163 = arith.constant 0 : index
    %c0_164 = arith.constant 0 : index
    %c7 = arith.constant 7 : index
    %c0_165 = arith.constant 0 : index
    %271 = vector.load %arg10[%c0_163, %c0_164, %c7, %c0_165] : memref<1x3x8x16xf32, #tpu.memory_space<vmem>>, vector<1x3x1x16xf32>
    %272 = vector.shape_cast %271 : vector<1x3x1x16xf32> to vector<3x16xf32>
    %273 = vector.shape_cast %270 : vector<3x16xf32> to vector<1x3x1x16xf32>
    tpu.vector_store %arg10[%c0_163, %c0_164, %c7, %c0_165], %273 {strides = array<i32>} : memref<1x3x8x16xf32, #tpu.memory_space<vmem>>, vector<1x3x1x16xf32>,
    return
  }
  func.func @transform_0(%arg0: i32, %arg1: i32) -> (i32, i32, i32, i32) {
    %c0_i32 = arith.constant 0 : i32
    %c0_i32_0 = arith.constant 0 : i32
    %c0_i32_1 = arith.constant 0 : i32
    return %arg0, %arg1, %c0_i32, %c0_i32_0 : i32, i32, i32, i32
  }
  func.func @transform_1(%arg0: i32, %arg1: i32) -> (i32, i32, i32) {
    %c0_i32 = arith.constant 0 : i32
    %c0_i32_0 = arith.constant 0 : i32
    %c0_i32_1 = arith.constant 0 : i32
    return %arg1, %c0_i32, %c0_i32_0 : i32, i32, i32
  }
  func.func @transform_2(%arg0: i32, %arg1: i32) -> (i32, i32) {
    %c0_i32 = arith.constant 0 : i32
    %c0_i32_0 = arith.constant 0 : i32
    %c0_i32_1 = arith.constant 0 : i32
    return %c0_i32, %c0_i32_0 : i32, i32
  }
  func.func @transform_3(%arg0: i32, %arg1: i32) -> (i32, i32) {
    %c0_i32 = arith.constant 0 : i32
    %c0_i32_0 = arith.constant 0 : i32
    %c0_i32_1 = arith.constant 0 : i32
    return %c0_i32, %c0_i32_0 : i32, i32
  }
  func.func @transform_4(%arg0: i32, %arg1: i32) -> (i32, i32) {
    %c0_i32 = arith.constant 0 : i32
    %c0_i32_0 = arith.constant 0 : i32
    %c0_i32_1 = arith.constant 0 : i32
    return %c0_i32, %c0_i32_0 : i32, i32
  }
  func.func @transform_5(%arg0: i32, %arg1: i32) -> (i32, i32) {
    %c0_i32 = arith.constant 0 : i32
    %c0_i32_0 = arith.constant 0 : i32
    %c0_i32_1 = arith.constant 0 : i32
    return %c0_i32, %c0_i32_0 : i32, i32
  }
  func.func @transform_6(%arg0: i32, %arg1: i32) -> (i32, i32) {
    %c0_i32 = arith.constant 0 : i32
    %c0_i32_0 = arith.constant 0 : i32
    %c0_i32_1 = arith.constant 0 : i32
    return %c0_i32, %c0_i32_0 : i32, i32
  }
  func.func @transform_7(%arg0: i32, %arg1: i32) -> (i32, i32) {
    %c0_i32 = arith.constant 0 : i32
    %c0_i32_0 = arith.constant 0 : i32
    %c0_i32_1 = arith.constant 0 : i32
    return %c0_i32, %c0_i32_0 : i32, i32
  }
  func.func @transform_8(%arg0: i32, %arg1: i32) -> (i32, i32, i32, i32) {
    %c0_i32 = arith.constant 0 : i32
    %c0_i32_0 = arith.constant 0 : i32
    %c0_i32_1 = arith.constant 0 : i32
    return %arg0, %c0_i32, %arg1, %c0_i32_0 : i32, i32, i32, i32
  }
}

</mosaic_0001>

<llo_original>
// kernel: srcnn_forward.1
$region0: #{srcnn_forward.1}
  #allocation0 [shape = 'u32[]', space=smem, size = 0x4, offset = 0x4, fixed_abs, tag = 'smem constant byte address 0x4 - core index']
  #allocation1 [shape = 'u32[144,128]{1,0:T(1,128)}', space=vmem, size = 0x12000, scoped, tag = 'internal scratch']
  #allocation2 [shape = 'f32[243,336]{1,0:T(8,128)}', space=vmem, size = 0x5d000, scoped, tag = 'scratch operand']
  #allocation3 [shape = 'f32[400,212]{1,0:T(8,128)}', space=vmem, size = 0x64000, scoped, tag = 'scratch operand']
  %s0 = inlined_call_operand.vmem [shape: f32[2,2,3,588], index: 0, kind: input, shape index: {}]
  %s1 = inlined_call_operand.vmem [shape: f32[2,1,336], index: 1, kind: input, shape index: {}]
  %s2 = inlined_call_operand.vmem [shape: bf16[32,243], index: 2, kind: input, shape index: {}]
  %s3 = inlined_call_operand.vmem [shape: f32[32,1], index: 3, kind: input, shape index: {}]
  %s4 = inlined_call_operand.vmem [shape: bf16[16,32], index: 4, kind: input, shape index: {}]
  %s5 = inlined_call_operand.vmem [shape: f32[16,1], index: 5, kind: input, shape index: {}]
  %s6 = inlined_call_operand.vmem [shape: bf16[3,400], index: 6, kind: input, shape index: {}]
  %s7 = inlined_call_operand.vmem [shape: f32[3,1], index: 7, kind: input, shape index: {}]
  %s8 = inlined_call_operand.hbm [shape: f32[2,3,16,16], index: 8, kind: output, shape index: {}]
  %s9 = sld [smem:[#allocation0]]
  $region65: #{srcnn_forward.1} parent=0
    _
  %s11 = ssub.s32 1, %s9
  %s12 = scalar_select 0, %s11, %s9
  $region1: #{srcnn_forward.1} parent=0
    #allocation4 [shape = 'u8[24576]{0}', space=vmem, size = 0x6000, scoped, tag = 'output window, operand 0']
    #allocation5 [shape = 's32[2]{0}', space=sflag, size = 0x8, scoped, tag = 'scoped memory for srcnn_forward.1']
    %13 = vsyncpa [#allocation5], 0
    %s14 = scalar_lea.sflag [#allocation5], 1
    %15 = vsyncpa %s14, 0
    loop: start=0, step=1, limit=6
    $region2: #{srcnn_forward.1} parent=1 // loop_pre_header
      _
    $region3: #{srcnn_forward.1} parent=1 // loop_header
      %s17 = sphi 0, %s21
      %p18 = scmp.ge.s32.totalorder %s17, 6
      %s24 = sphi 0, %s36
      %s25 = sphi 0, %s32
      %s26 = sphi 0, %s24
      %s27 = sphi 0, %s25
      %s28 = sphi 0, %s26
      %s29 = sphi 0, %s27
      %s41 = sphi 0, %s43
      %s44 = sphi 0, %s41
      %s45 = sphi 0, %s44
      %s61 = sphi 0, %s45
      %s67 = sphi 0, %s69
      %s70 = sphi 0, %s67
      %s71 = sphi 0, %s70
      %s87 = sphi 0, %s71
      %s91 = sphi 0, %s91
      %s93 = sphi 0, %s91
      %s94 = sphi 0, %s93
      %s108 = sphi 0, %s94
      %s112 = sphi 0, %s112
      %s114 = sphi 0, %s112
      %s115 = sphi 0, %s114
      %s129 = sphi 0, %s115
      %s133 = sphi 0, %s133
      %s135 = sphi 0, %s133
      %s136 = sphi 0, %s135
      %s150 = sphi 0, %s136
      %s154 = sphi 0, %s154
      %s156 = sphi 0, %s154
      %s157 = sphi 0, %s156
      %s171 = sphi 0, %s157
      %s175 = sphi 0, %s175
      %s177 = sphi 0, %s175
      %s178 = sphi 0, %s177
      %s192 = sphi 0, %s178
      %s196 = sphi 0, %s196
      %s198 = sphi 0, %s196
      %s199 = sphi 0, %s198
      %s213 = sphi 0, %s199
      %s221 = sphi 0, %s223
      %s224 = sphi 0, %s221
      %s225 = sphi 0, %s224
      %s241 = sphi 0, %s225
    $region4: #{srcnn_forward.1} parent=1 // loop_header_branch
      %20 = sbr.rel (%p18) target = $region8
    $region5: #{srcnn_forward.1} parent=1 // loop_body
      %s22 = ssub.s32 %s17, 1
      %s23 = ssub.s32 %s17, 2
      %s30 = sadd.s32 1, %s25
      %p31 = scmp.ge.s32.totalorder %s30, 2
      %s32 = scalar_select %p31, 0, %s30
      %s33 = sadd.s32 1, %s24
      %s34 = scalar_select %p31, %s33, %s24
      %p35 = scmp.ge.s32.totalorder %s34, 2
      %s36 = scalar_select %p35, 0, %s34
      %s37 = ssub.s32 %s24, %s36
      %s38 = ssub.s32 %s25, %s32
      %s39 = sor.u32 %s37, %s38
      %p40 = scmp.eq.s32.totalorder %s39, 0
      %s42 = sadd.s32 %s41, 1
      %s43 = scalar_select %p40, %s41, %s42
      %p46 = pneg %p40
      %p47 = scmp.eq.s32.totalorder %s17, 3
      %p48 = por %p46, %p47
      %p49 = scmp.ne.s32.totalorder %s41, %s44
      %p50 = scmp.eq.s32.totalorder %s17, 0
      %p51 = por %p49, %p50
      %p52 = scmp.ne.s32.totalorder %s41, %s44
      %p53 = scmp.eq.s32.totalorder %s22, 3
      %p54 = por %p52, %p53
      %p55 = scmp.ne.s32.totalorder %s44, %s45
      %p56 = scmp.eq.s32.totalorder %s22, 0
      %p57 = por %p55, %p56
      %p58 = scmp.ne.s32.totalorder %s44, %s45
      %p59 = scmp.eq.s32.totalorder %s23, 3
      %p60 = por %p58, %p59
      %p62 = scmp.ne.s32.totalorder %s45, %s61
      %p63 = scmp.eq.s32.totalorder %s23, 0
      %p64 = por %p62, %p63
      %s65 = ssub.s32 %s25, %s32
      %p66 = scmp.eq.s32.totalorder %s65, 0
      %s68 = sadd.s32 %s67, 1
      %s69 = scalar_select %p66, %s67, %s68
      %p72 = pneg %p66
      %p73 = scmp.eq.s32.totalorder %s17, 3
      %p74 = por %p72, %p73
      %p75 = scmp.ne.s32.totalorder %s67, %s70
      %p76 = scmp.eq.s32.totalorder %s17, 0
      %p77 = por %p75, %p76
      %p78 = scmp.ne.s32.totalorder %s67, %s70
      %p79 = scmp.eq.s32.totalorder %s22, 3
      %p80 = por %p78, %p79
      %p81 = scmp.ne.s32.totalorder %s70, %s71
      %p82 = scmp.eq.s32.totalorder %s22, 0
      %p83 = por %p81, %p82
      %p84 = scmp.ne.s32.totalorder %s70, %s71
      %p85 = scmp.eq.s32.totalorder %s23, 3
      %p86 = por %p84, %p85
      %p88 = scmp.ne.s32.totalorder %s71, %s87
      %p89 = scmp.eq.s32.totalorder %s23, 0
      %p90 = por %p88, %p89
      %s92 = sadd.s32 %s91, 1
      %p95 = scmp.eq.s32.totalorder %s17, 3
      %p96 = scmp.ne.s32.totalorder %s91, %s93
      %p97 = scmp.eq.s32.totalorder %s17, 0
      %p98 = por %p96, %p97
      %p99 = scmp.ne.s32.totalorder %s91, %s93
      %p100 = scmp.eq.s32.totalorder %s22, 3
      %p101 = por %p99, %p100
      %p102 = scmp.ne.s32.totalorder %s93, %s94
      %p103 = scmp.eq.s32.totalorder %s22, 0
      %p104 = por %p102, %p103
      %p105 = scmp.ne.s32.totalorder %s93, %s94
      %p106 = scmp.eq.s32.totalorder %s23, 3
      %p107 = por %p105, %p106
      %p109 = scmp.ne.s32.totalorder %s94, %s108
      %p110 = scmp.eq.s32.totalorder %s23, 0
      %p111 = por %p109, %p110
      %s113 = sadd.s32 %s112, 1
      %p116 = scmp.eq.s32.totalorder %s17, 3
      %p117 = scmp.ne.s32.totalorder %s112, %s114
      %p118 = scmp.eq.s32.totalorder %s17, 0
      %p119 = por %p117, %p118
      %p120 = scmp.ne.s32.totalorder %s112, %s114
      %p121 = scmp.eq.s32.totalorder %s22, 3
      %p122 = por %p120, %p121
      %p123 = scmp.ne.s32.totalorder %s114, %s115
      %p124 = scmp.eq.s32.totalorder %s22, 0
      %p125 = por %p123, %p124
      %p126 = scmp.ne.s32.totalorder %s114, %s115
      %p127 = scmp.eq.s32.totalorder %s23, 3
      %p128 = por %p126, %p127
      %p130 = scmp.ne.s32.totalorder %s115, %s129
      %p131 = scmp.eq.s32.totalorder %s23, 0
      %p132 = por %p130, %p131
      %s134 = sadd.s32 %s133, 1
      %p137 = scmp.eq.s32.totalorder %s17, 3
      %p138 = scmp.ne.s32.totalorder %s133, %s135
      %p139 = scmp.eq.s32.totalorder %s17, 0
      %p140 = por %p138, %p139
      %p141 = scmp.ne.s32.totalorder %s133, %s135
      %p142 = scmp.eq.s32.totalorder %s22, 3
      %p143 = por %p141, %p142
      %p144 = scmp.ne.s32.totalorder %s135, %s136
      %p145 = scmp.eq.s32.totalorder %s22, 0
      %p146 = por %p144, %p145
      %p147 = scmp.ne.s32.totalorder %s135, %s136
      %p148 = scmp.eq.s32.totalorder %s23, 3
      %p149 = por %p147, %p148
      %p151 = scmp.ne.s32.totalorder %s136, %s150
      %p152 = scmp.eq.s32.totalorder %s23, 0
      %p153 = por %p151, %p152
      %s155 = sadd.s32 %s154, 1
      %p158 = scmp.eq.s32.totalorder %s17, 3
      %p159 = scmp.ne.s32.totalorder %s154, %s156
      %p160 = scmp.eq.s32.totalorder %s17, 0
      %p161 = por %p159, %p160
      %p162 = scmp.ne.s32.totalorder %s154, %s156
      %p163 = scmp.eq.s32.totalorder %s22, 3
      %p164 = por %p162, %p163
      %p165 = scmp.ne.s32.totalorder %s156, %s157
      %p166 = scmp.eq.s32.totalorder %s22, 0
      %p167 = por %p165, %p166
      %p168 = scmp.ne.s32.totalorder %s156, %s157
      %p169 = scmp.eq.s32.totalorder %s23, 3
      %p170 = por %p168, %p169
      %p172 = scmp.ne.s32.totalorder %s157, %s171
      %p173 = scmp.eq.s32.totalorder %s23, 0
      %p174 = por %p172, %p173
      %s176 = sadd.s32 %s175, 1
      %p179 = scmp.eq.s32.totalorder %s17, 3
      %p180 = scmp.ne.s32.totalorder %s175, %s177
      %p181 = scmp.eq.s32.totalorder %s17, 0
      %p182 = por %p180, %p181
      %p183 = scmp.ne.s32.totalorder %s175, %s177
      %p184 = scmp.eq.s32.totalorder %s22, 3
      %p185 = por %p183, %p184
      %p186 = scmp.ne.s32.totalorder %s177, %s178
      %p187 = scmp.eq.s32.totalorder %s22, 0
      %p188 = por %p186, %p187
      %p189 = scmp.ne.s32.totalorder %s177, %s178
      %p190 = scmp.eq.s32.totalorder %s23, 3
      %p191 = por %p189, %p190
      %p193 = scmp.ne.s32.totalorder %s178, %s192
      %p194 = scmp.eq.s32.totalorder %s23, 0
      %p195 = por %p193, %p194
      %s197 = sadd.s32 %s196, 1
      %p200 = scmp.eq.s32.totalorder %s17, 3
      %p201 = scmp.ne.s32.totalorder %s196, %s198
      %p202 = scmp.eq.s32.totalorder %s17, 0
      %p203 = por %p201, %p202
      %p204 = scmp.ne.s32.totalorder %s196, %s198
      %p205 = scmp.eq.s32.totalorder %s22, 3
      %p206 = por %p204, %p205
      %p207 = scmp.ne.s32.totalorder %s198, %s199
      %p208 = scmp.eq.s32.totalorder %s22, 0
      %p209 = por %p207, %p208
      %p210 = scmp.ne.s32.totalorder %s198, %s199
      %p211 = scmp.eq.s32.totalorder %s23, 3
      %p212 = por %p210, %p211
      %p214 = scmp.ne.s32.totalorder %s199, %s213
      %p215 = scmp.eq.s32.totalorder %s23, 0
      %p216 = por %p214, %p215
      %s217 = ssub.s32 %s24, %s36
      %s218 = ssub.s32 %s25, %s32
      %s219 = sor.u32 %s217, %s218
      %p220 = scmp.eq.s32.totalorder %s219, 0
      %s222 = sadd.s32 %s221, 1
      %s223 = scalar_select %p220, %s221, %s222
      %p226 = pneg %p220
      %p227 = scmp.eq.s32.totalorder %s17, 3
      %p228 = por %p226, %p227
      %p229 = scmp.ne.s32.totalorder %s221, %s224
      %p230 = scmp.eq.s32.totalorder %s17, 0
      %p231 = por %p229, %p230
      %p232 = scmp.ne.s32.totalorder %s221, %s224
      %p233 = scmp.eq.s32.totalorder %s22, 3
      %p234 = por %p232, %p233
      %p235 = scmp.ne.s32.totalorder %s224, %s225
      %p236 = scmp.eq.s32.totalorder %s22, 0
      %p237 = por %p235, %p236
      %p238 = scmp.ne.s32.totalorder %s224, %s225
      %p239 = scmp.eq.s32.totalorder %s23, 3
      %p240 = por %p238, %p239
      %p242 = scmp.ne.s32.totalorder %s225, %s241
      %p243 = scmp.eq.s32.totalorder %s23, 0
      %p244 = por %p242, %p243
      %p245 = scmp.le.s32.totalorder 1, %s17
      %p246 = scmp.lt.s32.totalorder %s17, 5
      %p247 = pnand %p245, %p246
      %p248 = pneg %p247
      // Predicated region
      $region9: #{srcnn_forward.1} parent=5 // pred_check
        _
      $region10: #{srcnn_forward.1} parent=5 // pred_check_branch
        %250 = sbr.rel (%p247) target = $region12
      $region11: #{srcnn_forward.1} parent=5 // pred_region
        %s251 = ssub.s32 %s17, 1
        // Predicated region
        $region13: #{srcnn_forward.1} parent=11 // pred_check
          %p252 = pneg %p104
        $region14: #{srcnn_forward.1} parent=11 // pred_check_branch
          %254 = sbr.rel (%p252) target = $region16
        $region15: #{srcnn_forward.1} parent=11 // pred_region
          _
        $region16: #{srcnn_forward.1} parent=11 // pred_fallthru
          _
        // Predicated region
        $region17: #{srcnn_forward.1} parent=11 // pred_check
          %p255 = pneg %p125
        $region18: #{srcnn_forward.1} parent=11 // pred_check_branch
          %257 = sbr.rel (%p255) target = $region20
        $region19: #{srcnn_forward.1} parent=11 // pred_region
          _
        $region20: #{srcnn_forward.1} parent=11 // pred_fallthru
          _
        // Predicated region
        $region21: #{srcnn_forward.1} parent=11 // pred_check
          %p258 = pneg %p146
        $region22: #{srcnn_forward.1} parent=11 // pred_check_branch
          %260 = sbr.rel (%p258) target = $region24
        $region23: #{srcnn_forward.1} parent=11 // pred_region
          _
        $region24: #{srcnn_forward.1} parent=11 // pred_fallthru
          _
        // Predicated region
        $region25: #{srcnn_forward.1} parent=11 // pred_check
          %p261 = pneg %p167
        $region26: #{srcnn_forward.1} parent=11 // pred_check_branch
          %263 = sbr.rel (%p261) target = $region28
        $region27: #{srcnn_forward.1} parent=11 // pred_region
          _
        $region28: #{srcnn_forward.1} parent=11 // pred_fallthru
          _
        // Predicated region
        $region29: #{srcnn_forward.1} parent=11 // pred_check
          %p264 = pneg %p188
        $region30: #{srcnn_forward.1} parent=11 // pred_check_branch
          %266 = sbr.rel (%p264) target = $region32
        $region31: #{srcnn_forward.1} parent=11 // pred_region
          _
        $region32: #{srcnn_forward.1} parent=11 // pred_fallthru
          _
        // Predicated region
        $region33: #{srcnn_forward.1} parent=11 // pred_check
          %p267 = pneg %p209
        $region34: #{srcnn_forward.1} parent=11 // pred_check_branch
          %269 = sbr.rel (%p267) target = $region36
        $region35: #{srcnn_forward.1} parent=11 // pred_region
          _
        $region36: #{srcnn_forward.1} parent=11 // pred_fallthru
          _
      $region12: #{srcnn_forward.1} parent=5 // pred_fallthru
        _
      %p270 = scmp.lt.s32.totalorder %s17, 4
      // Predicated region
      $region37: #{srcnn_forward.1} parent=5 // pred_check
        %p271 = pneg %p270
      $region38: #{srcnn_forward.1} parent=5 // pred_check_branch
        %273 = sbr.rel (%p271) target = $region40
      $region39: #{srcnn_forward.1} parent=5 // pred_region
        // Predicated region
        $region41: #{srcnn_forward.1} parent=39 // pred_check
          %p274 = pneg %p51
        $region42: #{srcnn_forward.1} parent=39 // pred_check_branch
          %276 = sbr.rel (%p274) target = $region44
        $region43: #{srcnn_forward.1} parent=39 // pred_region
          %p277 = scmp.lt.s32.totalorder %s24, 1
          %s278 = scalar_select %p277, %s24, 1
          %p279 = scmp.lt.s32.totalorder %s25, 1
          %s280 = scalar_select %p279, %s25, 1
          %s281 = smul.addr %s280, 5
          %s282 = smul.addr %s278, 10
          %s283 = sadd.s32 %s281, %s282
          %s284 = smul.addr %s283, 4
          %s285 = scalar_lea.vmem %s0, %s284
        $region44: #{srcnn_forward.1} parent=39 // pred_fallthru
          _
        // Predicated region
        $region45: #{srcnn_forward.1} parent=39 // pred_check
          %p286 = pneg %p77
        $region46: #{srcnn_forward.1} parent=39 // pred_check_branch
          %288 = sbr.rel (%p286) target = $region48
        $region47: #{srcnn_forward.1} parent=39 // pred_region
          %p289 = scmp.lt.s32.totalorder %s25, 1
          %s290 = scalar_select %p289, %s25, 1
          %s291 = smul.addr %s290, 3
          %s292 = scalar_lea.vmem %s1, %s291
        $region48: #{srcnn_forward.1} parent=39 // pred_fallthru
          _
      $region40: #{srcnn_forward.1} parent=5 // pred_fallthru
        _
      %p293 = scmp.le.s32.totalorder 1, %s17
      %p294 = scmp.lt.s32.totalorder %s17, 5
      %p295 = pnand %p293, %p294
      %p296 = pneg %p295
      // Predicated region
      $region49: #{srcnn_forward.1} parent=5 // pred_check
        _
      $region50: #{srcnn_forward.1} parent=5 // pred_check_branch
        %298 = sbr.rel (%p295) target = $region52
      $region51: #{srcnn_forward.1} parent=5 // pred_region
        %s299 = ssub.s32 %s17, 1
        %p300 = scmp.lt.s32.totalorder %s26, 1
        %s301 = scalar_select %p300, %s26, 1
        %p302 = scmp.lt.s32.totalorder %s27, 1
        %s303 = scalar_select %p302, %s27, 1
        %s304 = smul.addr %s303, 5
        %s305 = smul.addr %s301, 10
        %s306 = sadd.s32 %s304, %s305
        %s307 = smul.addr %s306, 4
        %s308 = scalar_lea.vmem %s0, %s307
        %p309 = pneg %p57
        %p310 = pneg %p54
        %p311 = scmp.lt.s32.totalorder %s27, 1
        %s312 = scalar_select %p311, %s27, 1
        %s313 = smul.addr %s312, 3
        %s314 = scalar_lea.vmem %s1, %s313
        %p315 = pneg %p83
        %p316 = pneg %p80
        %p317 = pneg %p104
        %p318 = pneg %p101
        %p319 = pneg %p125
        %p320 = pneg %p122
        %p321 = pneg %p146
        %p322 = pneg %p143
        %p323 = pneg %p167
        %p324 = pneg %p164
        %p325 = pneg %p188
        %p326 = pneg %p185
        %p327 = pneg %p209
        %p328 = pneg %p206
        %p329 = pneg %p237
        %p330 = pneg %p234
        %s331 = sand.u32 %s224, 1
        %s332 = scalar_lea.sflag [#allocation5], %s331
        %s333 = sand.u32 %s224, 1
        %s334 = smul.addr %s333, 24
        %s335 = scalar_lea.vmem [#allocation4], %s334
        %p336 = scmp.lt.s32.totalorder %s26, 1
        %s337 = scalar_select %p336, %s26, 1
        %p338 = scmp.lt.s32.totalorder %s27, 1
        %s339 = scalar_select %p338, %s27, 1
        %s340 = smul.addr %s339, 5
        %s341 = smul.addr %s337, 10
        %s342 = sadd.s32 %s340, %s341
        %s343 = smul.addr %s342, 4
        %s344 = scalar_lea.vmem %s0, %s343
        %p345 = scmp.lt.s32.totalorder %s27, 1
        %s346 = scalar_select %p345, %s27, 1
        %s347 = smul.addr %s346, 3
        %s348 = scalar_lea.vmem %s1, %s347
        %v350 = vld [vmem:[%s344] sm:$0x77]
        %v351 = vld [vmem:[%s344 + $0x8] sm:$0x77]
        %v352 = vld [vmem:[%s344 + $0x10] sm:$0x7]
        %v355 = vcombine.high %v350, %v350
        %357 = vst [vmem:[#allocation2] sm:$0x7] %v350
        %358 = vst [vmem:[#allocation2 + $0x8] sm:$0x7] %v355
        %vm359 = vcmask 649216
        %360 = vst.msk [vmem:[#allocation2 + $0x10] sm:$0x7] %vm359, %v351
        %v361 = vrot.slane %v350, 5
        %v362 = vrot.slane %v355, 5
        %v363 = vrot.slane %v351, 5
        %364 = vrot.lane.b32.xlu0 %v361, 127
        %v365 = vpop.permute.xlu0 %364
        %366 = vrot.lane.b32.xlu0 %v362, 127
        %v367 = vpop.permute.xlu0 %366
        %368 = vrot.lane.b32.xlu0 %v363, 127
        %v369 = vpop.permute.xlu0 %368
        %vm370 = vcmask 1039360
        %v371 = vsel %vm370, %v365, %v367
        %v372 = vsel %vm370, %v367, %v369
        %376 = vst [vmem:[#allocation2] sm:$0x38] %v371
        %377 = vst [vmem:[#allocation2 + $0x8] sm:$0x38] %v372
        %vm378 = vcmask 652291
        %379 = vst.msk [vmem:[#allocation2 + $0x10] sm:$0x38] %vm378, %v369
        %v380 = vrot.slane %v350, 2
        %v381 = vrot.slane %v355, 2
        %v382 = vrot.slane %v351, 2
        %383 = vrot.lane.b32.xlu0 %v380, 126
        %v384 = vpop.permute.xlu0 %383
        %385 = vrot.lane.b32.xlu0 %v381, 126
        %v386 = vpop.permute.xlu0 %385
        %387 = vrot.lane.b32.xlu0 %v382, 126
        %v388 = vpop.permute.xlu0 %387
        %vm389 = vcmask 1031168
        %v390 = vsel %vm389, %v384, %v386
        %v391 = vsel %vm389, %v386, %v388
        %395 = vst [vmem:[#allocation2] sm:$0xc0] %v390
        %396 = vst [vmem:[#allocation2 + $0x8] sm:$0xc0] %v391
        %vm397 = vcmask 654342
        %398 = vst.msk [vmem:[#allocation2 + $0x10] sm:$0xc0] %vm397, %v388
        %399 = vst [vmem:[#allocation2 + $0x18] sm:$0x1] %v390
        %400 = vst [vmem:[#allocation2 + $0x20] sm:$0x1] %v391
        %vm401 = vcmask 647168
        %402 = vst.msk [vmem:[#allocation2 + $0x28] sm:$0x1] %vm401, %v388
        %v403 = vrot.slane %v350, 7
        %v404 = vrot.slane %v355, 7
        %v405 = vrot.slane %v351, 7
        %406 = vrot.lane.b32.xlu0 %v403, 125
        %v407 = vpop.permute.xlu0 %406
        %408 = vrot.lane.b32.xlu0 %v404, 125
        %v409 = vpop.permute.xlu0 %408
        %410 = vrot.lane.b32.xlu0 %v405, 125
        %v411 = vpop.permute.xlu0 %410
        %vm412 = vcmask 1022976
        %v413 = vsel %vm412, %v407, %v409
        %v414 = vsel %vm412, %v409, %v411
        %418 = vst [vmem:[#allocation2 + $0x18] sm:$0xe] %v413
        %419 = vst [vmem:[#allocation2 + $0x20] sm:$0xe] %v414
        %vm420 = vcmask 650241
        %421 = vst.msk [vmem:[#allocation2 + $0x28] sm:$0xe] %vm420, %v411
        %v422 = vcombine.low %v350, %v350
        %v423 = vcombine.low %v351, %v351
        %424 = vrot.lane.b32.xlu0 %v422, 124
        %v425 = vpop.permute.xlu0 %424
        %426 = vrot.lane.b32.xlu0 %v350, 124
        %v427 = vpop.permute.xlu0 %426
        %428 = vrot.lane.b32.xlu0 %v423, 124
        %v429 = vpop.permute.xlu0 %428
        %vm430 = vcmask 1014784
        %v431 = vsel %vm430, %v425, %v427
        %v432 = vsel %vm430, %v427, %v429
        %436 = vst [vmem:[#allocation2 + $0x18] sm:$0x70] %v431
        %437 = vst [vmem:[#allocation2 + $0x20] sm:$0x70] %v432
        %vm438 = vcmask 653316
        %439 = vst.msk [vmem:[#allocation2 + $0x28] sm:$0x70] %vm438, %v429
        %v440 = vrot.slane %v350, 1
        %v441 = vrot.slane %v355, 1
        %v442 = vrot.slane %v351, 1
        %443 = vrot.lane.b32.xlu0 %v440, 123
        %v444 = vpop.permute.xlu0 %443
        %445 = vrot.lane.b32.xlu0 %v441, 123
        %v446 = vpop.permute.xlu0 %445
        %447 = vrot.lane.b32.xlu0 %v442, 123
        %v448 = vpop.permute.xlu0 %447
        %vm449 = vcmask 1006592
        %v450 = vsel %vm449, %v444, %v446
        %v451 = vsel %vm449, %v446, %v448
        %455 = vst [vmem:[#allocation2 + $0x18] sm:$0x80] %v450
        %456 = vst [vmem:[#allocation2 + $0x20] sm:$0x80] %v451
        %vm457 = vcmask 654343
        %458 = vst.msk [vmem:[#allocation2 + $0x28] sm:$0x80] %vm457, %v448
        %459 = vst [vmem:[#allocation2 + $0x30] sm:$0x3] %v450
        %460 = vst [vmem:[#allocation2 + $0x38] sm:$0x3] %v451
        %vm461 = vcmask 648192
        %462 = vst.msk [vmem:[#allocation2 + $0x40] sm:$0x3] %vm461, %v448
        %v463 = vrot.slane %v350, 6
        %v464 = vrot.slane %v355, 6
        %v465 = vrot.slane %v351, 6
        %466 = vrot.lane.b32.xlu0 %v463, 122
        %v467 = vpop.permute.xlu0 %466
        %468 = vrot.lane.b32.xlu0 %v464, 122
        %v469 = vpop.permute.xlu0 %468
        %470 = vrot.lane.b32.xlu0 %v465, 122
        %v471 = vpop.permute.xlu0 %470
        %vm472 = vcmask 998400
        %v473 = vsel %vm472, %v467, %v469
        %v474 = vsel %vm472, %v469, %v471
        %478 = vst [vmem:[#allocation2 + $0x30] sm:$0x1c] %v473
        %479 = vst [vmem:[#allocation2 + $0x38] sm:$0x1c] %v474
        %vm480 = vcmask 651266
        %481 = vst.msk [vmem:[#allocation2 + $0x40] sm:$0x1c] %vm480, %v471
        %v482 = vrot.slane %v350, 3
        %v483 = vrot.slane %v355, 3
        %v484 = vrot.slane %v351, 3
        %485 = vrot.lane.b32.xlu0 %v482, 121
        %v486 = vpop.permute.xlu0 %485
        %487 = vrot.lane.b32.xlu0 %v483, 121
        %v488 = vpop.permute.xlu0 %487
        %489 = vrot.lane.b32.xlu0 %v484, 121
        %v490 = vpop.permute.xlu0 %489
        %vm491 = vcmask 990208
        %v492 = vsel %vm491, %v486, %v488
        %v493 = vsel %vm491, %v488, %v490
        %497 = vst [vmem:[#allocation2 + $0x30] sm:$0xe0] %v492
        %498 = vst [vmem:[#allocation2 + $0x38] sm:$0xe0] %v493
        %vm499 = vcmask 654341
        %500 = vst.msk [vmem:[#allocation2 + $0x40] sm:$0xe0] %vm499, %v490
        %501 = vrot.lane.b32.xlu0 %v350, 120
        %v502 = vpop.permute.xlu0 %501
        %503 = vrot.lane.b32.xlu0 %v355, 120
        %v504 = vpop.permute.xlu0 %503
        %505 = vrot.lane.b32.xlu0 %v351, 120
        %v506 = vpop.permute.xlu0 %505
        %vm507 = vcmask 982016
        %v508 = vsel %vm507, %v502, %v504
        %v509 = vsel %vm507, %v504, %v506
        %513 = vst [vmem:[#allocation2 + $0x48] sm:$0x7] %v508
        %514 = vst [vmem:[#allocation2 + $0x50] sm:$0x7] %v509
        %515 = vst.msk [vmem:[#allocation2 + $0x58] sm:$0x7] %vm359, %v506
        %516 = vrot.lane.b32.xlu0 %v361, 100
        %v517 = vpop.permute.xlu0 %516
        %518 = vrot.lane.b32.xlu0 %v362, 100
        %v519 = vpop.permute.xlu0 %518
        %520 = vrot.lane.b32.xlu0 %v363, 100
        %v521 = vpop.permute.xlu0 %520
        %vm522 = vcmask 818176
        %v523 = vsel %vm522, %v517, %v519
        %v524 = vsel %vm522, %v519, %v521
        %528 = vst [vmem:[#allocation2 + $0x48] sm:$0x38] %v523
        %529 = vst [vmem:[#allocation2 + $0x50] sm:$0x38] %v524
        %530 = vst.msk [vmem:[#allocation2 + $0x58] sm:$0x38] %vm378, %v521
        %531 = vrot.lane.b32.xlu0 %v380, 99
        %v532 = vpop.permute.xlu0 %531
        %533 = vrot.lane.b32.xlu0 %v381, 99
        %v534 = vpop.permute.xlu0 %533
        %535 = vrot.lane.b32.xlu0 %v382, 99
        %v536 = vpop.permute.xlu0 %535
        %vm537 = vcmask 809984
        %v538 = vsel %vm537, %v532, %v534
        %v539 = vsel %vm537, %v534, %v536
        %543 = vst [vmem:[#allocation2 + $0x48] sm:$0xc0] %v538
        %544 = vst [vmem:[#allocation2 + $0x50] sm:$0xc0] %v539
        %545 = vst.msk [vmem:[#allocation2 + $0x58] sm:$0xc0] %vm397, %v536
        %546 = vst [vmem:[#allocation2 + $0x60] sm:$0x1] %v538
        %547 = vst [vmem:[#allocation2 + $0x68] sm:$0x1] %v539
        %548 = vst.msk [vmem:[#allocation2 + $0x70] sm:$0x1] %vm401, %v536
        %549 = vrot.lane.b32.xlu0 %v403, 98
        %v550 = vpop.permute.xlu0 %549
        %551 = vrot.lane.b32.xlu0 %v404, 98
        %v552 = vpop.permute.xlu0 %551
        %553 = vrot.lane.b32.xlu0 %v405, 98
        %v554 = vpop.permute.xlu0 %553
        %vm555 = vcmask 801792
        %v556 = vsel %vm555, %v550, %v552
        %v557 = vsel %vm555, %v552, %v554
        %561 = vst [vmem:[#allocation2 + $0x60] sm:$0xe] %v556
        %562 = vst [vmem:[#allocation2 + $0x68] sm:$0xe] %v557
        %563 = vst.msk [vmem:[#allocation2 + $0x70] sm:$0xe] %vm420, %v554
        %564 = vrot.lane.b32.xlu0 %v422, 97
        %v565 = vpop.permute.xlu0 %564
        %566 = vrot.lane.b32.xlu0 %v350, 97
        %v567 = vpop.permute.xlu0 %566
        %568 = vrot.lane.b32.xlu0 %v423, 97
        %v569 = vpop.permute.xlu0 %568
        %vm570 = vcmask 793600
        %v571 = vsel %vm570, %v565, %v567
        %v572 = vsel %vm570, %v567, %v569
        %576 = vst [vmem:[#allocation2 + $0x60] sm:$0x70] %v571
        %577 = vst [vmem:[#allocation2 + $0x68] sm:$0x70] %v572
        %578 = vst.msk [vmem:[#allocation2 + $0x70] sm:$0x70] %vm438, %v569
        %579 = vrot.lane.b32.xlu0 %v440, 96
        %v580 = vpop.permute.xlu0 %579
        %581 = vrot.lane.b32.xlu0 %v441, 96
        %v582 = vpop.permute.xlu0 %581
        %583 = vrot.lane.b32.xlu0 %v442, 96
        %v584 = vpop.permute.xlu0 %583
        %vm585 = vcmask 785408
        %v586 = vsel %vm585, %v580, %v582
        %v587 = vsel %vm585, %v582, %v584
        %591 = vst [vmem:[#allocation2 + $0x60] sm:$0x80] %v586
        %592 = vst [vmem:[#allocation2 + $0x68] sm:$0x80] %v587
        %593 = vst.msk [vmem:[#allocation2 + $0x70] sm:$0x80] %vm457, %v584
        %594 = vst [vmem:[#allocation2 + $0x78] sm:$0x3] %v586
        %595 = vst [vmem:[#allocation2 + $0x80] sm:$0x3] %v587
        %596 = vst.msk [vmem:[#allocation2 + $0x88] sm:$0x3] %vm461, %v584
        %597 = vrot.lane.b32.xlu0 %v463, 95
        %v598 = vpop.permute.xlu0 %597
        %599 = vrot.lane.b32.xlu0 %v464, 95
        %v600 = vpop.permute.xlu0 %599
        %601 = vrot.lane.b32.xlu0 %v465, 95
        %v602 = vpop.permute.xlu0 %601
        %vm603 = vcmask 777216
        %v604 = vsel %vm603, %v598, %v600
        %v605 = vsel %vm603, %v600, %v602
        %609 = vst [vmem:[#allocation2 + $0x78] sm:$0x1c] %v604
        %610 = vst [vmem:[#allocation2 + $0x80] sm:$0x1c] %v605
        %611 = vst.msk [vmem:[#allocation2 + $0x88] sm:$0x1c] %vm480, %v602
        %612 = vrot.lane.b32.xlu0 %v482, 94
        %v613 = vpop.permute.xlu0 %612
        %614 = vrot.lane.b32.xlu0 %v483, 94
        %v615 = vpop.permute.xlu0 %614
        %616 = vrot.lane.b32.xlu0 %v484, 94
        %v617 = vpop.permute.xlu0 %616
        %vm618 = vcmask 769024
        %v619 = vsel %vm618, %v613, %v615
        %v620 = vsel %vm618, %v615, %v617
        %624 = vst [vmem:[#allocation2 + $0x78] sm:$0xe0] %v619
        %625 = vst [vmem:[#allocation2 + $0x80] sm:$0xe0] %v620
        %626 = vst.msk [vmem:[#allocation2 + $0x88] sm:$0xe0] %vm499, %v617
        %627 = vrot.lane.b32.xlu0 %v350, 93
        %v628 = vpop.permute.xlu0 %627
        %629 = vrot.lane.b32.xlu0 %v355, 93
        %v630 = vpop.permute.xlu0 %629
        %631 = vrot.lane.b32.xlu0 %v351, 93
        %v632 = vpop.permute.xlu0 %631
        %vm633 = vcmask 760832
        %v634 = vsel %vm633, %v628, %v630
        %v635 = vsel %vm633, %v630, %v632
        %639 = vst [vmem:[#allocation2 + $0x90] sm:$0x7] %v634
        %640 = vst [vmem:[#allocation2 + $0x98] sm:$0x7] %v635
        %641 = vst.msk [vmem:[#allocation2 + $0xa0] sm:$0x7] %vm359, %v632
        %642 = vrot.lane.b32.xlu0 %v361, 92
        %v643 = vpop.permute.xlu0 %642
        %644 = vrot.lane.b32.xlu0 %v362, 92
        %v645 = vpop.permute.xlu0 %644
        %646 = vrot.lane.b32.xlu0 %v363, 92
        %v647 = vpop.permute.xlu0 %646
        %vm648 = vcmask 752640
        %v649 = vsel %vm648, %v643, %v645
        %v650 = vsel %vm648, %v645, %v647
        %654 = vst [vmem:[#allocation2 + $0x90] sm:$0x38] %v649
        %655 = vst [vmem:[#allocation2 + $0x98] sm:$0x38] %v650
        %656 = vst.msk [vmem:[#allocation2 + $0xa0] sm:$0x38] %vm378, %v647
        %v657 = vcombine.high %v351, %v351
        %v658 = vrot.slane %v657, 2
        %659 = vrot.lane.b32.xlu0 %v380, 72
        %v660 = vpop.permute.xlu0 %659
        %661 = vrot.lane.b32.xlu0 %v381, 72
        %v662 = vpop.permute.xlu0 %661
        %663 = vrot.lane.b32.xlu0 %v382, 72
        %v664 = vpop.permute.xlu0 %663
        %665 = vrot.lane.b32.xlu0 %v658, 72
        %v666 = vpop.permute.xlu0 %665
        %vm667 = vcmask 588800
        %v668 = vsel %vm667, %v660, %v662
        %v669 = vsel %vm667, %v662, %v664
        %v670 = vsel %vm667, %v664, %v666
        %674 = vst [vmem:[#allocation2 + $0x90] sm:$0xc0] %v668
        %675 = vst [vmem:[#allocation2 + $0x98] sm:$0xc0] %v669
        %676 = vst.msk [vmem:[#allocation2 + $0xa0] sm:$0xc0] %vm397, %v670
        %677 = vst [vmem:[#allocation2 + $0xa8] sm:$0x1] %v668
        %678 = vst [vmem:[#allocation2 + $0xb0] sm:$0x1] %v669
        %679 = vst.msk [vmem:[#allocation2 + $0xb8] sm:$0x1] %vm401, %v670
        %v680 = vrot.slane %v657, 7
        %681 = vrot.lane.b32.xlu0 %v403, 71
        %v682 = vpop.permute.xlu0 %681
        %683 = vrot.lane.b32.xlu0 %v404, 71
        %v684 = vpop.permute.xlu0 %683
        %685 = vrot.lane.b32.xlu0 %v405, 71
        %v686 = vpop.permute.xlu0 %685
        %687 = vrot.lane.b32.xlu0 %v680, 71
        %v688 = vpop.permute.xlu0 %687
        %vm689 = vcmask 580608
        %v690 = vsel %vm689, %v682, %v684
        %v691 = vsel %vm689, %v684, %v686
        %v692 = vsel %vm689, %v686, %v688
        %696 = vst [vmem:[#allocation2 + $0xa8] sm:$0xe] %v690
        %697 = vst [vmem:[#allocation2 + $0xb0] sm:$0xe] %v691
        %698 = vst.msk [vmem:[#allocation2 + $0xb8] sm:$0xe] %vm420, %v692
        %699 = vrot.lane.b32.xlu0 %v422, 70
        %v700 = vpop.permute.xlu0 %699
        %701 = vrot.lane.b32.xlu0 %v350, 70
        %v702 = vpop.permute.xlu0 %701
        %703 = vrot.lane.b32.xlu0 %v423, 70
        %v704 = vpop.permute.xlu0 %703
        %705 = vrot.lane.b32.xlu0 %v351, 70
        %v706 = vpop.permute.xlu0 %705
        %vm707 = vcmask 572416
        %v708 = vsel %vm707, %v700, %v702
        %v709 = vsel %vm707, %v702, %v704
        %v710 = vsel %vm707, %v704, %v706
        %714 = vst [vmem:[#allocation2 + $0xa8] sm:$0x70] %v708
        %715 = vst [vmem:[#allocation2 + $0xb0] sm:$0x70] %v709
        %716 = vst.msk [vmem:[#allocation2 + $0xb8] sm:$0x70] %vm438, %v710
        %v717 = vrot.slane %v657, 1
        %718 = vrot.lane.b32.xlu0 %v440, 69
        %v719 = vpop.permute.xlu0 %718
        %720 = vrot.lane.b32.xlu0 %v441, 69
        %v721 = vpop.permute.xlu0 %720
        %722 = vrot.lane.b32.xlu0 %v442, 69
        %v723 = vpop.permute.xlu0 %722
        %724 = vrot.lane.b32.xlu0 %v717, 69
        %v725 = vpop.permute.xlu0 %724
        %vm726 = vcmask 564224
        %v727 = vsel %vm726, %v719, %v721
        %v728 = vsel %vm726, %v721, %v723
        %v729 = vsel %vm726, %v723, %v725
        %733 = vst [vmem:[#allocation2 + $0xa8] sm:$0x80] %v727
        %734 = vst [vmem:[#allocation2 + $0xb0] sm:$0x80] %v728
        %735 = vst.msk [vmem:[#allocation2 + $0xb8] sm:$0x80] %vm457, %v729
        %736 = vst [vmem:[#allocation2 + $0xc0] sm:$0x3] %v727
        %737 = vst [vmem:[#allocation2 + $0xc8] sm:$0x3] %v728
        %738 = vst.msk [vmem:[#allocation2 + $0xd0] sm:$0x3] %vm461, %v729
        %v739 = vrot.slane %v657, 6
        %740 = vrot.lane.b32.xlu0 %v463, 68
        %v741 = vpop.permute.xlu0 %740
        %742 = vrot.lane.b32.xlu0 %v464, 68
        %v743 = vpop.permute.xlu0 %742
        %744 = vrot.lane.b32.xlu0 %v465, 68
        %v745 = vpop.permute.xlu0 %744
        %746 = vrot.lane.b32.xlu0 %v739, 68
        %v747 = vpop.permute.xlu0 %746
        %vm748 = vcmask 556032
        %v749 = vsel %vm748, %v741, %v743
        %v750 = vsel %vm748, %v743, %v745
        %v751 = vsel %vm748, %v745, %v747
        %755 = vst [vmem:[#allocation2 + $0xc0] sm:$0x1c] %v749
        %756 = vst [vmem:[#allocation2 + $0xc8] sm:$0x1c] %v750
        %757 = vst.msk [vmem:[#allocation2 + $0xd0] sm:$0x1c] %vm480, %v751
        %v758 = vrot.slane %v657, 3
        %759 = vrot.lane.b32.xlu0 %v482, 67
        %v760 = vpop.permute.xlu0 %759
        %761 = vrot.lane.b32.xlu0 %v483, 67
        %v762 = vpop.permute.xlu0 %761
        %763 = vrot.lane.b32.xlu0 %v484, 67
        %v764 = vpop.permute.xlu0 %763
        %765 = vrot.lane.b32.xlu0 %v758, 67
        %v766 = vpop.permute.xlu0 %765
        %vm767 = vcmask 547840
        %v768 = vsel %vm767, %v760, %v762
        %v769 = vsel %vm767, %v762, %v764
        %v770 = vsel %vm767, %v764, %v766
        %774 = vst [vmem:[#allocation2 + $0xc0] sm:$0xe0] %v768
        %775 = vst [vmem:[#allocation2 + $0xc8] sm:$0xe0] %v769
        %776 = vst.msk [vmem:[#allocation2 + $0xd0] sm:$0xe0] %vm499, %v770
        %777 = vrot.lane.b32.xlu0 %v350, 66
        %v778 = vpop.permute.xlu0 %777
        %779 = vrot.lane.b32.xlu0 %v355, 66
        %v780 = vpop.permute.xlu0 %779
        %781 = vrot.lane.b32.xlu0 %v351, 66
        %v782 = vpop.permute.xlu0 %781
        %783 = vrot.lane.b32.xlu0 %v657, 66
        %v784 = vpop.permute.xlu0 %783
        %vm785 = vcmask 539648
        %v786 = vsel %vm785, %v778, %v780
        %v787 = vsel %vm785, %v780, %v782
        %v788 = vsel %vm785, %v782, %v784
        %792 = vst [vmem:[#allocation2 + $0xd8] sm:$0x7] %v786
        %793 = vst [vmem:[#allocation2 + $0xe0] sm:$0x7] %v787
        %794 = vst.msk [vmem:[#allocation2 + $0xe8] sm:$0x7] %vm359, %v788
        %v795 = vrot.slane %v657, 5
        %796 = vrot.lane.b32.xlu0 %v361, 65
        %v797 = vpop.permute.xlu0 %796
        %798 = vrot.lane.b32.xlu0 %v362, 65
        %v799 = vpop.permute.xlu0 %798
        %800 = vrot.lane.b32.xlu0 %v363, 65
        %v801 = vpop.permute.xlu0 %800
        %802 = vrot.lane.b32.xlu0 %v795, 65
        %v803 = vpop.permute.xlu0 %802
        %vm804 = vcmask 531456
        %v805 = vsel %vm804, %v797, %v799
        %v806 = vsel %vm804, %v799, %v801
        %v807 = vsel %vm804, %v801, %v803
        %811 = vst [vmem:[#allocation2 + $0xd8] sm:$0x38] %v805
        %812 = vst [vmem:[#allocation2 + $0xe0] sm:$0x38] %v806
        %813 = vst.msk [vmem:[#allocation2 + $0xe8] sm:$0x38] %vm378, %v807
        %814 = vrot.lane.b32.xlu0 %v380, 64
        %v815 = vpop.permute.xlu0 %814
        %816 = vrot.lane.b32.xlu0 %v381, 64
        %v817 = vpop.permute.xlu0 %816
        %818 = vrot.lane.b32.xlu0 %v382, 64
        %v819 = vpop.permute.xlu0 %818
        %820 = vrot.lane.b32.xlu0 %v658, 64
        %v821 = vpop.permute.xlu0 %820
        %vm822 = vcmask 523264
        %v823 = vsel %vm822, %v815, %v817
        %v824 = vsel %vm822, %v817, %v819
        %v825 = vsel %vm822, %v819, %v821
        %829 = vst [vmem:[#allocation2 + $0xd8] sm:$0xc0] %v823
        %830 = vst [vmem:[#allocation2 + $0xe0] sm:$0xc0] %v824
        %831 = vst.msk [vmem:[#allocation2 + $0xe8] sm:$0xc0] %vm397, %v825
        %832 = vst [vmem:[#allocation2 + $0xf0] sm:$0x1] %v823
        %833 = vst [vmem:[#allocation2 + $0xf8] sm:$0x1] %v824
        %834 = vst.msk [vmem:[#allocation2 + $0x100] sm:$0x1] %vm401, %v825
        %835 = vrot.lane.b32.xlu0 %v403, 44
        %v836 = vpop.permute.xlu0 %835
        %837 = vrot.lane.b32.xlu0 %v404, 44
        %v838 = vpop.permute.xlu0 %837
        %839 = vrot.lane.b32.xlu0 %v405, 44
        %v840 = vpop.permute.xlu0 %839
        %841 = vrot.lane.b32.xlu0 %v680, 44
        %v842 = vpop.permute.xlu0 %841
        %vm843 = vcmask 359424
        %v844 = vsel %vm843, %v836, %v838
        %v845 = vsel %vm843, %v838, %v840
        %v846 = vsel %vm843, %v840, %v842
        %850 = vst [vmem:[#allocation2 + $0xf0] sm:$0xe] %v844
        %851 = vst [vmem:[#allocation2 + $0xf8] sm:$0xe] %v845
        %852 = vst.msk [vmem:[#allocation2 + $0x100] sm:$0xe] %vm420, %v846
        %853 = vrot.lane.b32.xlu0 %v422, 43
        %v854 = vpop.permute.xlu0 %853
        %855 = vrot.lane.b32.xlu0 %v350, 43
        %v856 = vpop.permute.xlu0 %855
        %857 = vrot.lane.b32.xlu0 %v423, 43
        %v858 = vpop.permute.xlu0 %857
        %859 = vrot.lane.b32.xlu0 %v351, 43
        %v860 = vpop.permute.xlu0 %859
        %vm861 = vcmask 351232
        %v862 = vsel %vm861, %v854, %v856
        %v863 = vsel %vm861, %v856, %v858
        %v864 = vsel %vm861, %v858, %v860
        %868 = vst [vmem:[#allocation2 + $0xf0] sm:$0x70] %v862
        %869 = vst [vmem:[#allocation2 + $0xf8] sm:$0x70] %v863
        %870 = vst.msk [vmem:[#allocation2 + $0x100] sm:$0x70] %vm438, %v864
        %871 = vrot.lane.b32.xlu0 %v440, 42
        %v872 = vpop.permute.xlu0 %871
        %873 = vrot.lane.b32.xlu0 %v441, 42
        %v874 = vpop.permute.xlu0 %873
        %875 = vrot.lane.b32.xlu0 %v442, 42
        %v876 = vpop.permute.xlu0 %875
        %877 = vrot.lane.b32.xlu0 %v717, 42
        %v878 = vpop.permute.xlu0 %877
        %vm879 = vcmask 343040
        %v880 = vsel %vm879, %v872, %v874
        %v881 = vsel %vm879, %v874, %v876
        %v882 = vsel %vm879, %v876, %v878
        %886 = vst [vmem:[#allocation2 + $0xf0] sm:$0x80] %v880
        %887 = vst [vmem:[#allocation2 + $0xf8] sm:$0x80] %v881
        %888 = vst.msk [vmem:[#allocation2 + $0x100] sm:$0x80] %vm457, %v882
        %889 = vst [vmem:[#allocation2 + $0x108] sm:$0x3] %v880
        %890 = vst [vmem:[#allocation2 + $0x110] sm:$0x3] %v881
        %891 = vst.msk [vmem:[#allocation2 + $0x118] sm:$0x3] %vm461, %v882
        %892 = vrot.lane.b32.xlu0 %v463, 41
        %v893 = vpop.permute.xlu0 %892
        %894 = vrot.lane.b32.xlu0 %v464, 41
        %v895 = vpop.permute.xlu0 %894
        %896 = vrot.lane.b32.xlu0 %v465, 41
        %v897 = vpop.permute.xlu0 %896
        %898 = vrot.lane.b32.xlu0 %v739, 41
        %v899 = vpop.permute.xlu0 %898
        %vm900 = vcmask 334848
        %v901 = vsel %vm900, %v893, %v895
        %v902 = vsel %vm900, %v895, %v897
        %v903 = vsel %vm900, %v897, %v899
        %907 = vst [vmem:[#allocation2 + $0x108] sm:$0x1c] %v901
        %908 = vst [vmem:[#allocation2 + $0x110] sm:$0x1c] %v902
        %909 = vst.msk [vmem:[#allocation2 + $0x118] sm:$0x1c] %vm480, %v903
        %910 = vrot.lane.b32.xlu0 %v482, 40
        %v911 = vpop.permute.xlu0 %910
        %912 = vrot.lane.b32.xlu0 %v483, 40
        %v913 = vpop.permute.xlu0 %912
        %914 = vrot.lane.b32.xlu0 %v484, 40
        %v915 = vpop.permute.xlu0 %914
        %916 = vrot.lane.b32.xlu0 %v758, 40
        %v917 = vpop.permute.xlu0 %916
        %vm918 = vcmask 326656
        %v919 = vsel %vm918, %v911, %v913
        %v920 = vsel %vm918, %v913, %v915
        %v921 = vsel %vm918, %v915, %v917
        %925 = vst [vmem:[#allocation2 + $0x108] sm:$0xe0] %v919
        %926 = vst [vmem:[#allocation2 + $0x110] sm:$0xe0] %v920
        %927 = vst.msk [vmem:[#allocation2 + $0x118] sm:$0xe0] %vm499, %v921
        %928 = vrot.lane.b32.xlu0 %v350, 39
        %v929 = vpop.permute.xlu0 %928
        %930 = vrot.lane.b32.xlu0 %v355, 39
        %v931 = vpop.permute.xlu0 %930
        %932 = vrot.lane.b32.xlu0 %v351, 39
        %v933 = vpop.permute.xlu0 %932
        %934 = vrot.lane.b32.xlu0 %v657, 39
        %v935 = vpop.permute.xlu0 %934
        %vm936 = vcmask 318464
        %v937 = vsel %vm936, %v929, %v931
        %v938 = vsel %vm936, %v931, %v933
        %v939 = vsel %vm936, %v933, %v935
        %943 = vst [vmem:[#allocation2 + $0x120] sm:$0x7] %v937
        %944 = vst [vmem:[#allocation2 + $0x128] sm:$0x7] %v938
        %945 = vst.msk [vmem:[#allocation2 + $0x130] sm:$0x7] %vm359, %v939
        %946 = vrot.lane.b32.xlu0 %v361, 38
        %v947 = vpop.permute.xlu0 %946
        %948 = vrot.lane.b32.xlu0 %v362, 38
        %v949 = vpop.permute.xlu0 %948
        %950 = vrot.lane.b32.xlu0 %v363, 38
        %v951 = vpop.permute.xlu0 %950
        %952 = vrot.lane.b32.xlu0 %v795, 38
        %v953 = vpop.permute.xlu0 %952
        %vm954 = vcmask 310272
        %v955 = vsel %vm954, %v947, %v949
        %v956 = vsel %vm954, %v949, %v951
        %v957 = vsel %vm954, %v951, %v953
        %961 = vst [vmem:[#allocation2 + $0x120] sm:$0x38] %v955
        %962 = vst [vmem:[#allocation2 + $0x128] sm:$0x38] %v956
        %963 = vst.msk [vmem:[#allocation2 + $0x130] sm:$0x38] %vm378, %v957
        %964 = vrot.lane.b32.xlu0 %v380, 37
        %v965 = vpop.permute.xlu0 %964
        %966 = vrot.lane.b32.xlu0 %v381, 37
        %v967 = vpop.permute.xlu0 %966
        %968 = vrot.lane.b32.xlu0 %v382, 37
        %v969 = vpop.permute.xlu0 %968
        %970 = vrot.lane.b32.xlu0 %v658, 37
        %v971 = vpop.permute.xlu0 %970
        %vm972 = vcmask 302080
        %v973 = vsel %vm972, %v965, %v967
        %v974 = vsel %vm972, %v967, %v969
        %v975 = vsel %vm972, %v969, %v971
        %979 = vst [vmem:[#allocation2 + $0x120] sm:$0xc0] %v973
        %980 = vst [vmem:[#allocation2 + $0x128] sm:$0xc0] %v974
        %981 = vst.msk [vmem:[#allocation2 + $0x130] sm:$0xc0] %vm397, %v975
        %982 = vst [vmem:[#allocation2 + $0x138] sm:$0x1] %v973
        %983 = vst [vmem:[#allocation2 + $0x140] sm:$0x1] %v974
        %984 = vst.msk [vmem:[#allocation2 + $0x148] sm:$0x1] %vm401, %v975
        %985 = vrot.lane.b32.xlu0 %v403, 36
        %v986 = vpop.permute.xlu0 %985
        %987 = vrot.lane.b32.xlu0 %v404, 36
        %v988 = vpop.permute.xlu0 %987
        %989 = vrot.lane.b32.xlu0 %v405, 36
        %v990 = vpop.permute.xlu0 %989
        %991 = vrot.lane.b32.xlu0 %v680, 36
        %v992 = vpop.permute.xlu0 %991
        %vm993 = vcmask 293888
        %v994 = vsel %vm993, %v986, %v988
        %v995 = vsel %vm993, %v988, %v990
        %v996 = vsel %vm993, %v990, %v992
        %1000 = vst [vmem:[#allocation2 + $0x138] sm:$0xe] %v994
        %1001 = vst [vmem:[#allocation2 + $0x140] sm:$0xe] %v995
        %1002 = vst.msk [vmem:[#allocation2 + $0x148] sm:$0xe] %vm420, %v996
        %1003 = vrot.lane.b32.xlu0 %v422, 16
        %v1004 = vpop.permute.xlu0 %1003
        %1005 = vrot.lane.b32.xlu0 %v350, 16
        %v1006 = vpop.permute.xlu0 %1005
        %1007 = vrot.lane.b32.xlu0 %v423, 16
        %v1008 = vpop.permute.xlu0 %1007
        %1009 = vrot.lane.b32.xlu0 %v351, 16
        %v1010 = vpop.permute.xlu0 %1009
        %vm1011 = vcmask 130048
        %v1012 = vsel %vm1011, %v1004, %v1006
        %v1013 = vsel %vm1011, %v1006, %v1008
        %v1014 = vsel %vm1011, %v1008, %v1010
        %1018 = vst [vmem:[#allocation2 + $0x138] sm:$0x70] %v1012
        %1019 = vst [vmem:[#allocation2 + $0x140] sm:$0x70] %v1013
        %1020 = vst.msk [vmem:[#allocation2 + $0x148] sm:$0x70] %vm438, %v1014
        %1021 = vrot.lane.b32.xlu0 %v440, 15
        %v1022 = vpop.permute.xlu0 %1021
        %1023 = vrot.lane.b32.xlu0 %v441, 15
        %v1024 = vpop.permute.xlu0 %1023
        %1025 = vrot.lane.b32.xlu0 %v442, 15
        %v1026 = vpop.permute.xlu0 %1025
        %1027 = vrot.lane.b32.xlu0 %v717, 15
        %v1028 = vpop.permute.xlu0 %1027
        %vm1029 = vcmask 121856
        %v1030 = vsel %vm1029, %v1022, %v1024
        %v1031 = vsel %vm1029, %v1024, %v1026
        %v1032 = vsel %vm1029, %v1026, %v1028
        %1036 = vst [vmem:[#allocation2 + $0x138] sm:$0x80] %v1030
        %1037 = vst [vmem:[#allocation2 + $0x140] sm:$0x80] %v1031
        %1038 = vst.msk [vmem:[#allocation2 + $0x148] sm:$0x80] %vm457, %v1032
        %1039 = vst [vmem:[#allocation2 + $0x150] sm:$0x3] %v1030
        %1040 = vst [vmem:[#allocation2 + $0x158] sm:$0x3] %v1031
        %1041 = vst.msk [vmem:[#allocation2 + $0x160] sm:$0x3] %vm461, %v1032
        %1042 = vrot.lane.b32.xlu0 %v463, 14
        %v1043 = vpop.permute.xlu0 %1042
        %1044 = vrot.lane.b32.xlu0 %v464, 14
        %v1045 = vpop.permute.xlu0 %1044
        %1046 = vrot.lane.b32.xlu0 %v465, 14
        %v1047 = vpop.permute.xlu0 %1046
        %1048 = vrot.lane.b32.xlu0 %v739, 14
        %v1049 = vpop.permute.xlu0 %1048
        %vm1050 = vcmask 113664
        %v1051 = vsel %vm1050, %v1043, %v1045
        %v1052 = vsel %vm1050, %v1045, %v1047
        %v1053 = vsel %vm1050, %v1047, %v1049
        %1057 = vst [vmem:[#allocation2 + $0x150] sm:$0x1c] %v1051
        %1058 = vst [vmem:[#allocation2 + $0x158] sm:$0x1c] %v1052
        %1059 = vst.msk [vmem:[#allocation2 + $0x160] sm:$0x1c] %vm480, %v1053
        %1060 = vrot.lane.b32.xlu0 %v482, 13
        %v1061 = vpop.permute.xlu0 %1060
        %1062 = vrot.lane.b32.xlu0 %v483, 13
        %v1063 = vpop.permute.xlu0 %1062
        %1064 = vrot.lane.b32.xlu0 %v484, 13
        %v1065 = vpop.permute.xlu0 %1064
        %1066 = vrot.lane.b32.xlu0 %v758, 13
        %v1067 = vpop.permute.xlu0 %1066
        %vm1068 = vcmask 105472
        %v1069 = vsel %vm1068, %v1061, %v1063
        %v1070 = vsel %vm1068, %v1063, %v1065
        %v1071 = vsel %vm1068, %v1065, %v1067
        %1075 = vst [vmem:[#allocation2 + $0x150] sm:$0xe0] %v1069
        %1076 = vst [vmem:[#allocation2 + $0x158] sm:$0xe0] %v1070
        %1077 = vst.msk [vmem:[#allocation2 + $0x160] sm:$0xe0] %vm499, %v1071
        %1078 = vrot.lane.b32.xlu0 %v350, 12
        %v1079 = vpop.permute.xlu0 %1078
        %1080 = vrot.lane.b32.xlu0 %v355, 12
        %v1081 = vpop.permute.xlu0 %1080
        %1082 = vrot.lane.b32.xlu0 %v351, 12
        %v1083 = vpop.permute.xlu0 %1082
        %1084 = vrot.lane.b32.xlu0 %v657, 12
        %v1085 = vpop.permute.xlu0 %1084
        %vm1086 = vcmask 97280
        %v1087 = vsel %vm1086, %v1079, %v1081
        %v1088 = vsel %vm1086, %v1081, %v1083
        %v1089 = vsel %vm1086, %v1083, %v1085
        %1093 = vst [vmem:[#allocation2 + $0x168] sm:$0x7] %v1087
        %1094 = vst [vmem:[#allocation2 + $0x170] sm:$0x7] %v1088
        %1095 = vst.msk [vmem:[#allocation2 + $0x178] sm:$0x7] %vm359, %v1089
        %1096 = vrot.lane.b32.xlu0 %v361, 11
        %v1097 = vpop.permute.xlu0 %1096
        %1098 = vrot.lane.b32.xlu0 %v362, 11
        %v1099 = vpop.permute.xlu0 %1098
        %1100 = vrot.lane.b32.xlu0 %v363, 11
        %v1101 = vpop.permute.xlu0 %1100
        %1102 = vrot.lane.b32.xlu0 %v795, 11
        %v1103 = vpop.permute.xlu0 %1102
        %vm1104 = vcmask 89088
        %v1105 = vsel %vm1104, %v1097, %v1099
        %v1106 = vsel %vm1104, %v1099, %v1101
        %v1107 = vsel %vm1104, %v1101, %v1103
        %1111 = vst [vmem:[#allocation2 + $0x168] sm:$0x38] %v1105
        %1112 = vst [vmem:[#allocation2 + $0x170] sm:$0x38] %v1106
        %1113 = vst.msk [vmem:[#allocation2 + $0x178] sm:$0x38] %vm378, %v1107
        %1114 = vrot.lane.b32.xlu0 %v380, 10
        %v1115 = vpop.permute.xlu0 %1114
        %1116 = vrot.lane.b32.xlu0 %v381, 10
        %v1117 = vpop.permute.xlu0 %1116
        %1118 = vrot.lane.b32.xlu0 %v382, 10
        %v1119 = vpop.permute.xlu0 %1118
        %1120 = vrot.lane.b32.xlu0 %v658, 10
        %v1121 = vpop.permute.xlu0 %1120
        %vm1122 = vcmask 80896
        %v1123 = vsel %vm1122, %v1115, %v1117
        %v1124 = vsel %vm1122, %v1117, %v1119
        %v1125 = vsel %vm1122, %v1119, %v1121
        %1129 = vst [vmem:[#allocation2 + $0x168] sm:$0xc0] %v1123
        %1130 = vst [vmem:[#allocation2 + $0x170] sm:$0xc0] %v1124
        %1131 = vst.msk [vmem:[#allocation2 + $0x178] sm:$0xc0] %vm397, %v1125
        %1132 = vst [vmem:[#allocation2 + $0x180] sm:$0x1] %v1123
        %1133 = vst [vmem:[#allocation2 + $0x188] sm:$0x1] %v1124
        %1134 = vst.msk [vmem:[#allocation2 + $0x190] sm:$0x1] %vm401, %v1125
        %1135 = vrot.lane.b32.xlu0 %v403, 9
        %v1136 = vpop.permute.xlu0 %1135
        %1137 = vrot.lane.b32.xlu0 %v404, 9
        %v1138 = vpop.permute.xlu0 %1137
        %1139 = vrot.lane.b32.xlu0 %v405, 9
        %v1140 = vpop.permute.xlu0 %1139
        %1141 = vrot.lane.b32.xlu0 %v680, 9
        %v1142 = vpop.permute.xlu0 %1141
        %vm1143 = vcmask 72704
        %v1144 = vsel %vm1143, %v1136, %v1138
        %v1145 = vsel %vm1143, %v1138, %v1140
        %v1146 = vsel %vm1143, %v1140, %v1142
        %1150 = vst [vmem:[#allocation2 + $0x180] sm:$0xe] %v1144
        %1151 = vst [vmem:[#allocation2 + $0x188] sm:$0xe] %v1145
        %1152 = vst.msk [vmem:[#allocation2 + $0x190] sm:$0xe] %vm420, %v1146
        %1153 = vrot.lane.b32.xlu0 %v422, 8
        %v1154 = vpop.permute.xlu0 %1153
        %1155 = vrot.lane.b32.xlu0 %v350, 8
        %v1156 = vpop.permute.xlu0 %1155
        %1157 = vrot.lane.b32.xlu0 %v423, 8
        %v1158 = vpop.permute.xlu0 %1157
        %1159 = vrot.lane.b32.xlu0 %v351, 8
        %v1160 = vpop.permute.xlu0 %1159
        %vm1161 = vcmask 64512
        %v1162 = vsel %vm1161, %v1154, %v1156
        %v1163 = vsel %vm1161, %v1156, %v1158
        %v1164 = vsel %vm1161, %v1158, %v1160
        %1168 = vst [vmem:[#allocation2 + $0x180] sm:$0x70] %v1162
        %1169 = vst [vmem:[#allocation2 + $0x188] sm:$0x70] %v1163
        %1170 = vst.msk [vmem:[#allocation2 + $0x190] sm:$0x70] %vm438, %v1164
        %1171 = vrot.lane.b32.xlu0 %v441, 116
        %v1172 = vpop.permute.xlu0 %1171
        %1173 = vrot.lane.b32.xlu0 %v442, 116
        %v1174 = vpop.permute.xlu0 %1173
        %1175 = vrot.lane.b32.xlu0 %v717, 116
        %v1176 = vpop.permute.xlu0 %1175
        %vm1177 = vcmask 949248
        %v1178 = vsel %vm1177, %v1172, %v1174
        %v1179 = vsel %vm1177, %v1174, %v1176
        %1183 = vst [vmem:[#allocation2 + $0x180] sm:$0x80] %v1178
        %1184 = vst [vmem:[#allocation2 + $0x188] sm:$0x80] %v1179
        %1185 = vst.msk [vmem:[#allocation2 + $0x190] sm:$0x80] %vm457, %v1176
        %1186 = vst [vmem:[#allocation2 + $0x198] sm:$0x3] %v1178
        %1187 = vst [vmem:[#allocation2 + $0x1a0] sm:$0x3] %v1179
        %1188 = vst.msk [vmem:[#allocation2 + $0x1a8] sm:$0x3] %vm461, %v1176
        %1189 = vrot.lane.b32.xlu0 %v464, 115
        %v1190 = vpop.permute.xlu0 %1189
        %1191 = vrot.lane.b32.xlu0 %v465, 115
        %v1192 = vpop.permute.xlu0 %1191
        %1193 = vrot.lane.b32.xlu0 %v739, 115
        %v1194 = vpop.permute.xlu0 %1193
        %vm1195 = vcmask 941056
        %v1196 = vsel %vm1195, %v1190, %v1192
        %v1197 = vsel %vm1195, %v1192, %v1194
        %1201 = vst [vmem:[#allocation2 + $0x198] sm:$0x1c] %v1196
        %1202 = vst [vmem:[#allocation2 + $0x1a0] sm:$0x1c] %v1197
        %1203 = vst.msk [vmem:[#allocation2 + $0x1a8] sm:$0x1c] %vm480, %v1194
        %1204 = vrot.lane.b32.xlu0 %v483, 114
        %v1205 = vpop.permute.xlu0 %1204
        %1206 = vrot.lane.b32.xlu0 %v484, 114
        %v1207 = vpop.permute.xlu0 %1206
        %1208 = vrot.lane.b32.xlu0 %v758, 114
        %v1209 = vpop.permute.xlu0 %1208
        %vm1210 = vcmask 932864
        %v1211 = vsel %vm1210, %v1205, %v1207
        %v1212 = vsel %vm1210, %v1207, %v1209
        %1216 = vst [vmem:[#allocation2 + $0x198] sm:$0xe0] %v1211
        %1217 = vst [vmem:[#allocation2 + $0x1a0] sm:$0xe0] %v1212
        %1218 = vst.msk [vmem:[#allocation2 + $0x1a8] sm:$0xe0] %vm499, %v1209
        %1219 = vrot.lane.b32.xlu0 %v355, 113
        %v1220 = vpop.permute.xlu0 %1219
        %1221 = vrot.lane.b32.xlu0 %v351, 113
        %v1222 = vpop.permute.xlu0 %1221
        %1223 = vrot.lane.b32.xlu0 %v657, 113
        %v1224 = vpop.permute.xlu0 %1223
        %vm1225 = vcmask 924672
        %v1226 = vsel %vm1225, %v1220, %v1222
        %v1227 = vsel %vm1225, %v1222, %v1224
        %1231 = vst [vmem:[#allocation2 + $0x1b0] sm:$0x7] %v1226
        %1232 = vst [vmem:[#allocation2 + $0x1b8] sm:$0x7] %v1227
        %1233 = vst.msk [vmem:[#allocation2 + $0x1c0] sm:$0x7] %vm359, %v1224
        %1234 = vrot.lane.b32.xlu0 %v362, 112
        %v1235 = vpop.permute.xlu0 %1234
        %1236 = vrot.lane.b32.xlu0 %v363, 112
        %v1237 = vpop.permute.xlu0 %1236
        %1238 = vrot.lane.b32.xlu0 %v795, 112
        %v1239 = vpop.permute.xlu0 %1238
        %vm1240 = vcmask 916480
        %v1241 = vsel %vm1240, %v1235, %v1237
        %v1242 = vsel %vm1240, %v1237, %v1239
        %1246 = vst [vmem:[#allocation2 + $0x1b0] sm:$0x38] %v1241
        %1247 = vst [vmem:[#allocation2 + $0x1b8] sm:$0x38] %v1242
        %1248 = vst.msk [vmem:[#allocation2 + $0x1c0] sm:$0x38] %vm378, %v1239
        %1249 = vrot.lane.b32.xlu0 %v381, 111
        %v1250 = vpop.permute.xlu0 %1249
        %1251 = vrot.lane.b32.xlu0 %v382, 111
        %v1252 = vpop.permute.xlu0 %1251
        %1253 = vrot.lane.b32.xlu0 %v658, 111
        %v1254 = vpop.permute.xlu0 %1253
        %vm1255 = vcmask 908288
        %v1256 = vsel %vm1255, %v1250, %v1252
        %v1257 = vsel %vm1255, %v1252, %v1254
        %1261 = vst [vmem:[#allocation2 + $0x1b0] sm:$0xc0] %v1256
        %1262 = vst [vmem:[#allocation2 + $0x1b8] sm:$0xc0] %v1257
        %1263 = vst.msk [vmem:[#allocation2 + $0x1c0] sm:$0xc0] %vm397, %v1254
        %1264 = vst [vmem:[#allocation2 + $0x1c8] sm:$0x1] %v1256
        %1265 = vst [vmem:[#allocation2 + $0x1d0] sm:$0x1] %v1257
        %1266 = vst.msk [vmem:[#allocation2 + $0x1d8] sm:$0x1] %vm401, %v1254
        %1267 = vrot.lane.b32.xlu0 %v404, 110
        %v1268 = vpop.permute.xlu0 %1267
        %1269 = vrot.lane.b32.xlu0 %v405, 110
        %v1270 = vpop.permute.xlu0 %1269
        %1271 = vrot.lane.b32.xlu0 %v680, 110
        %v1272 = vpop.permute.xlu0 %1271
        %vm1273 = vcmask 900096
        %v1274 = vsel %vm1273, %v1268, %v1270
        %v1275 = vsel %vm1273, %v1270, %v1272
        %1279 = vst [vmem:[#allocation2 + $0x1c8] sm:$0xe] %v1274
        %1280 = vst [vmem:[#allocation2 + $0x1d0] sm:$0xe] %v1275
        %1281 = vst.msk [vmem:[#allocation2 + $0x1d8] sm:$0xe] %vm420, %v1272
        %1282 = vrot.lane.b32.xlu0 %v350, 109
        %v1283 = vpop.permute.xlu0 %1282
        %1284 = vrot.lane.b32.xlu0 %v423, 109
        %v1285 = vpop.permute.xlu0 %1284
        %1286 = vrot.lane.b32.xlu0 %v351, 109
        %v1287 = vpop.permute.xlu0 %1286
        %vm1288 = vcmask 891904
        %v1289 = vsel %vm1288, %v1283, %v1285
        %v1290 = vsel %vm1288, %v1285, %v1287
        %1294 = vst [vmem:[#allocation2 + $0x1c8] sm:$0x70] %v1289
        %1295 = vst [vmem:[#allocation2 + $0x1d0] sm:$0x70] %v1290
        %1296 = vst.msk [vmem:[#allocation2 + $0x1d8] sm:$0x70] %vm438, %v1287
        %1297 = vrot.lane.b32.xlu0 %v441, 108
        %v1298 = vpop.permute.xlu0 %1297
        %1299 = vrot.lane.b32.xlu0 %v442, 108
        %v1300 = vpop.permute.xlu0 %1299
        %1301 = vrot.lane.b32.xlu0 %v717, 108
        %v1302 = vpop.permute.xlu0 %1301
        %vm1303 = vcmask 883712
        %v1304 = vsel %vm1303, %v1298, %v1300
        %v1305 = vsel %vm1303, %v1300, %v1302
        %1309 = vst [vmem:[#allocation2 + $0x1c8] sm:$0x80] %v1304
        %1310 = vst [vmem:[#allocation2 + $0x1d0] sm:$0x80] %v1305
        %1311 = vst.msk [vmem:[#allocation2 + $0x1d8] sm:$0x80] %vm457, %v1302
        %1312 = vst [vmem:[#allocation2 + $0x1e0] sm:$0x3] %v1304
        %1313 = vst [vmem:[#allocation2 + $0x1e8] sm:$0x3] %v1305
        %1314 = vst.msk [vmem:[#allocation2 + $0x1f0] sm:$0x3] %vm461, %v1302
        %1315 = vrot.lane.b32.xlu0 %v464, 88
        %v1316 = vpop.permute.xlu0 %1315
        %1317 = vrot.lane.b32.xlu0 %v465, 88
        %v1318 = vpop.permute.xlu0 %1317
        %1319 = vrot.lane.b32.xlu0 %v739, 88
        %v1320 = vpop.permute.xlu0 %1319
        %vm1321 = vcmask 719872
        %v1322 = vsel %vm1321, %v1316, %v1318
        %v1323 = vsel %vm1321, %v1318, %v1320
        %1327 = vst [vmem:[#allocation2 + $0x1e0] sm:$0x1c] %v1322
        %1328 = vst [vmem:[#allocation2 + $0x1e8] sm:$0x1c] %v1323
        %1329 = vst.msk [vmem:[#allocation2 + $0x1f0] sm:$0x1c] %vm480, %v1320
        %1330 = vrot.lane.b32.xlu0 %v483, 87
        %v1331 = vpop.permute.xlu0 %1330
        %1332 = vrot.lane.b32.xlu0 %v484, 87
        %v1333 = vpop.permute.xlu0 %1332
        %1334 = vrot.lane.b32.xlu0 %v758, 87
        %v1335 = vpop.permute.xlu0 %1334
        %vm1336 = vcmask 711680
        %v1337 = vsel %vm1336, %v1331, %v1333
        %v1338 = vsel %vm1336, %v1333, %v1335
        %1342 = vst [vmem:[#allocation2 + $0x1e0] sm:$0xe0] %v1337
        %1343 = vst [vmem:[#allocation2 + $0x1e8] sm:$0xe0] %v1338
        %1344 = vst.msk [vmem:[#allocation2 + $0x1f0] sm:$0xe0] %vm499, %v1335
        %1345 = vrot.lane.b32.xlu0 %v355, 86
        %v1346 = vpop.permute.xlu0 %1345
        %1347 = vrot.lane.b32.xlu0 %v351, 86
        %v1348 = vpop.permute.xlu0 %1347
        %1349 = vrot.lane.b32.xlu0 %v657, 86
        %v1350 = vpop.permute.xlu0 %1349
        %vm1351 = vcmask 703488
        %v1352 = vsel %vm1351, %v1346, %v1348
        %v1353 = vsel %vm1351, %v1348, %v1350
        %1357 = vst [vmem:[#allocation2 + $0x1f8] sm:$0x7] %v1352
        %1358 = vst [vmem:[#allocation2 + $0x200] sm:$0x7] %v1353
        %1359 = vst.msk [vmem:[#allocation2 + $0x208] sm:$0x7] %vm359, %v1350
        %1360 = vrot.lane.b32.xlu0 %v362, 85
        %v1361 = vpop.permute.xlu0 %1360
        %1362 = vrot.lane.b32.xlu0 %v363, 85
        %v1363 = vpop.permute.xlu0 %1362
        %1364 = vrot.lane.b32.xlu0 %v795, 85
        %v1365 = vpop.permute.xlu0 %1364
        %vm1366 = vcmask 695296
        %v1367 = vsel %vm1366, %v1361, %v1363
        %v1368 = vsel %vm1366, %v1363, %v1365
        %1372 = vst [vmem:[#allocation2 + $0x1f8] sm:$0x38] %v1367
        %1373 = vst [vmem:[#allocation2 + $0x200] sm:$0x38] %v1368
        %1374 = vst.msk [vmem:[#allocation2 + $0x208] sm:$0x38] %vm378, %v1365
        %1375 = vrot.lane.b32.xlu0 %v381, 84
        %v1376 = vpop.permute.xlu0 %1375
        %1377 = vrot.lane.b32.xlu0 %v382, 84
        %v1378 = vpop.permute.xlu0 %1377
        %1379 = vrot.lane.b32.xlu0 %v658, 84
        %v1380 = vpop.permute.xlu0 %1379
        %vm1381 = vcmask 687104
        %v1382 = vsel %vm1381, %v1376, %v1378
        %v1383 = vsel %vm1381, %v1378, %v1380
        %1387 = vst [vmem:[#allocation2 + $0x1f8] sm:$0xc0] %v1382
        %1388 = vst [vmem:[#allocation2 + $0x200] sm:$0xc0] %v1383
        %1389 = vst.msk [vmem:[#allocation2 + $0x208] sm:$0xc0] %vm397, %v1380
        %1390 = vst [vmem:[#allocation2 + $0x210] sm:$0x1] %v1382
        %1391 = vst [vmem:[#allocation2 + $0x218] sm:$0x1] %v1383
        %1392 = vst.msk [vmem:[#allocation2 + $0x220] sm:$0x1] %vm401, %v1380
        %1393 = vrot.lane.b32.xlu0 %v404, 83
        %v1394 = vpop.permute.xlu0 %1393
        %1395 = vrot.lane.b32.xlu0 %v405, 83
        %v1396 = vpop.permute.xlu0 %1395
        %1397 = vrot.lane.b32.xlu0 %v680, 83
        %v1398 = vpop.permute.xlu0 %1397
        %vm1399 = vcmask 678912
        %v1400 = vsel %vm1399, %v1394, %v1396
        %v1401 = vsel %vm1399, %v1396, %v1398
        %1405 = vst [vmem:[#allocation2 + $0x210] sm:$0xe] %v1400
        %1406 = vst [vmem:[#allocation2 + $0x218] sm:$0xe] %v1401
        %1407 = vst.msk [vmem:[#allocation2 + $0x220] sm:$0xe] %vm420, %v1398
        %1408 = vrot.lane.b32.xlu0 %v350, 82
        %v1409 = vpop.permute.xlu0 %1408
        %1410 = vrot.lane.b32.xlu0 %v423, 82
        %v1411 = vpop.permute.xlu0 %1410
        %1412 = vrot.lane.b32.xlu0 %v351, 82
        %v1413 = vpop.permute.xlu0 %1412
        %vm1414 = vcmask 670720
        %v1415 = vsel %vm1414, %v1409, %v1411
        %v1416 = vsel %vm1414, %v1411, %v1413
        %1420 = vst [vmem:[#allocation2 + $0x210] sm:$0x70] %v1415
        %1421 = vst [vmem:[#allocation2 + $0x218] sm:$0x70] %v1416
        %1422 = vst.msk [vmem:[#allocation2 + $0x220] sm:$0x70] %vm438, %v1413
        %1423 = vrot.lane.b32.xlu0 %v441, 81
        %v1424 = vpop.permute.xlu0 %1423
        %1425 = vrot.lane.b32.xlu0 %v442, 81
        %v1426 = vpop.permute.xlu0 %1425
        %1427 = vrot.lane.b32.xlu0 %v717, 81
        %v1428 = vpop.permute.xlu0 %1427
        %vm1429 = vcmask 662528
        %v1430 = vsel %vm1429, %v1424, %v1426
        %v1431 = vsel %vm1429, %v1426, %v1428
        %1435 = vst [vmem:[#allocation2 + $0x210] sm:$0x80] %v1430
        %1436 = vst [vmem:[#allocation2 + $0x218] sm:$0x80] %v1431
        %1437 = vst.msk [vmem:[#allocation2 + $0x220] sm:$0x80] %vm457, %v1428
        %1438 = vst [vmem:[#allocation2 + $0x228] sm:$0x3] %v1430
        %1439 = vst [vmem:[#allocation2 + $0x230] sm:$0x3] %v1431
        %1440 = vst.msk [vmem:[#allocation2 + $0x238] sm:$0x3] %vm461, %v1428
        %1441 = vrot.lane.b32.xlu0 %v464, 80
        %v1442 = vpop.permute.xlu0 %1441
        %1443 = vrot.lane.b32.xlu0 %v465, 80
        %v1444 = vpop.permute.xlu0 %1443
        %1445 = vrot.lane.b32.xlu0 %v739, 80
        %v1446 = vpop.permute.xlu0 %1445
        %vm1447 = vcmask 654336
        %v1448 = vsel %vm1447, %v1442, %v1444
        %v1449 = vsel %vm1447, %v1444, %v1446
        %1453 = vst [vmem:[#allocation2 + $0x228] sm:$0x1c] %v1448
        %1454 = vst [vmem:[#allocation2 + $0x230] sm:$0x1c] %v1449
        %1455 = vst.msk [vmem:[#allocation2 + $0x238] sm:$0x1c] %vm480, %v1446
        %v1457 = vrot.slane %v352, 3
        %1458 = vrot.lane.b32.xlu0 %v483, 60
        %v1459 = vpop.permute.xlu0 %1458
        %1460 = vrot.lane.b32.xlu0 %v484, 60
        %v1461 = vpop.permute.xlu0 %1460
        %1462 = vrot.lane.b32.xlu0 %v758, 60
        %v1463 = vpop.permute.xlu0 %1462
        %1464 = vrot.lane.b32.xlu0 %v1457, 60
        %v1465 = vpop.permute.xlu0 %1464
        %vm1466 = vcmask 490496
        %v1467 = vsel %vm1466, %v1459, %v1461
        %v1468 = vsel %vm1466, %v1461, %v1463
        %v1469 = vsel %vm1466, %v1463, %v1465
        %1473 = vst [vmem:[#allocation2 + $0x228] sm:$0xe0] %v1467
        %1474 = vst [vmem:[#allocation2 + $0x230] sm:$0xe0] %v1468
        %1475 = vst.msk [vmem:[#allocation2 + $0x238] sm:$0xe0] %vm499, %v1469
        %1476 = vrot.lane.b32.xlu0 %v355, 59
        %v1477 = vpop.permute.xlu0 %1476
        %1478 = vrot.lane.b32.xlu0 %v351, 59
        %v1479 = vpop.permute.xlu0 %1478
        %1480 = vrot.lane.b32.xlu0 %v657, 59
        %v1481 = vpop.permute.xlu0 %1480
        %1482 = vrot.lane.b32.xlu0 %v352, 59
        %v1483 = vpop.permute.xlu0 %1482
        %vm1484 = vcmask 482304
        %v1485 = vsel %vm1484, %v1477, %v1479
        %v1486 = vsel %vm1484, %v1479, %v1481
        %v1487 = vsel %vm1484, %v1481, %v1483
        %1491 = vst [vmem:[#allocation2 + $0x240] sm:$0x7] %v1485
        %1492 = vst [vmem:[#allocation2 + $0x248] sm:$0x7] %v1486
        %1493 = vst.msk [vmem:[#allocation2 + $0x250] sm:$0x7] %vm359, %v1487
        %v1494 = vrot.slane %v352, 5
        %1495 = vrot.lane.b32.xlu0 %v362, 58
        %v1496 = vpop.permute.xlu0 %1495
        %1497 = vrot.lane.b32.xlu0 %v363, 58
        %v1498 = vpop.permute.xlu0 %1497
        %1499 = vrot.lane.b32.xlu0 %v795, 58
        %v1500 = vpop.permute.xlu0 %1499
        %1501 = vrot.lane.b32.xlu0 %v1494, 58
        %v1502 = vpop.permute.xlu0 %1501
        %vm1503 = vcmask 474112
        %v1504 = vsel %vm1503, %v1496, %v1498
        %v1505 = vsel %vm1503, %v1498, %v1500
        %v1506 = vsel %vm1503, %v1500, %v1502
        %1510 = vst [vmem:[#allocation2 + $0x240] sm:$0x38] %v1504
        %1511 = vst [vmem:[#allocation2 + $0x248] sm:$0x38] %v1505
        %1512 = vst.msk [vmem:[#allocation2 + $0x250] sm:$0x38] %vm378, %v1506
        %v1513 = vrot.slane %v352, 2
        %1514 = vrot.lane.b32.xlu0 %v381, 57
        %v1515 = vpop.permute.xlu0 %1514
        %1516 = vrot.lane.b32.xlu0 %v382, 57
        %v1517 = vpop.permute.xlu0 %1516
        %1518 = vrot.lane.b32.xlu0 %v658, 57
        %v1519 = vpop.permute.xlu0 %1518
        %1520 = vrot.lane.b32.xlu0 %v1513, 57
        %v1521 = vpop.permute.xlu0 %1520
        %vm1522 = vcmask 465920
        %v1523 = vsel %vm1522, %v1515, %v1517
        %v1524 = vsel %vm1522, %v1517, %v1519
        %v1525 = vsel %vm1522, %v1519, %v1521
        %1529 = vst [vmem:[#allocation2 + $0x240] sm:$0xc0] %v1523
        %1530 = vst [vmem:[#allocation2 + $0x248] sm:$0xc0] %v1524
        %1531 = vst.msk [vmem:[#allocation2 + $0x250] sm:$0xc0] %vm397, %v1525
        %1532 = vst [vmem:[#allocation2 + $0x258] sm:$0x1] %v1523
        %1533 = vst [vmem:[#allocation2 + $0x260] sm:$0x1] %v1524
        %1534 = vst.msk [vmem:[#allocation2 + $0x268] sm:$0x1] %vm401, %v1525
        %v1535 = vrot.slane %v352, 7
        %1536 = vrot.lane.b32.xlu0 %v404, 56
        %v1537 = vpop.permute.xlu0 %1536
        %1538 = vrot.lane.b32.xlu0 %v405, 56
        %v1539 = vpop.permute.xlu0 %1538
        %1540 = vrot.lane.b32.xlu0 %v680, 56
        %v1541 = vpop.permute.xlu0 %1540
        %1542 = vrot.lane.b32.xlu0 %v1535, 56
        %v1543 = vpop.permute.xlu0 %1542
        %vm1544 = vcmask 457728
        %v1545 = vsel %vm1544, %v1537, %v1539
        %v1546 = vsel %vm1544, %v1539, %v1541
        %v1547 = vsel %vm1544, %v1541, %v1543
        %1551 = vst [vmem:[#allocation2 + $0x258] sm:$0xe] %v1545
        %1552 = vst [vmem:[#allocation2 + $0x260] sm:$0xe] %v1546
        %1553 = vst.msk [vmem:[#allocation2 + $0x268] sm:$0xe] %vm420, %v1547
        %v1554 = vcombine.low %v352, %v352
        %1555 = vrot.lane.b32.xlu0 %v350, 55
        %v1556 = vpop.permute.xlu0 %1555
        %1557 = vrot.lane.b32.xlu0 %v423, 55
        %v1558 = vpop.permute.xlu0 %1557
        %1559 = vrot.lane.b32.xlu0 %v351, 55
        %v1560 = vpop.permute.xlu0 %1559
        %1561 = vrot.lane.b32.xlu0 %v1554, 55
        %v1562 = vpop.permute.xlu0 %1561
        %vm1563 = vcmask 449536
        %v1564 = vsel %vm1563, %v1556, %v1558
        %v1565 = vsel %vm1563, %v1558, %v1560
        %v1566 = vsel %vm1563, %v1560, %v1562
        %1570 = vst [vmem:[#allocation2 + $0x258] sm:$0x70] %v1564
        %1571 = vst [vmem:[#allocation2 + $0x260] sm:$0x70] %v1565
        %1572 = vst.msk [vmem:[#allocation2 + $0x268] sm:$0x70] %vm438, %v1566
        %v1573 = vrot.slane %v352, 1
        %1574 = vrot.lane.b32.xlu0 %v441, 54
        %v1575 = vpop.permute.xlu0 %1574
        %1576 = vrot.lane.b32.xlu0 %v442, 54
        %v1577 = vpop.permute.xlu0 %1576
        %1578 = vrot.lane.b32.xlu0 %v717, 54
        %v1579 = vpop.permute.xlu0 %1578
        %1580 = vrot.lane.b32.xlu0 %v1573, 54
        %v1581 = vpop.permute.xlu0 %1580
        %vm1582 = vcmask 441344
        %v1583 = vsel %vm1582, %v1575, %v1577
        %v1584 = vsel %vm1582, %v1577, %v1579
        %v1585 = vsel %vm1582, %v1579, %v1581
        %1589 = vst [vmem:[#allocation2 + $0x258] sm:$0x80] %v1583
        %1590 = vst [vmem:[#allocation2 + $0x260] sm:$0x80] %v1584
        %1591 = vst.msk [vmem:[#allocation2 + $0x268] sm:$0x80] %vm457, %v1585
        %1592 = vst [vmem:[#allocation2 + $0x270] sm:$0x3] %v1583
        %1593 = vst [vmem:[#allocation2 + $0x278] sm:$0x3] %v1584
        %1594 = vst.msk [vmem:[#allocation2 + $0x280] sm:$0x3] %vm461, %v1585
        %v1595 = vrot.slane %v352, 6
        %1596 = vrot.lane.b32.xlu0 %v464, 53
        %v1597 = vpop.permute.xlu0 %1596
        %1598 = vrot.lane.b32.xlu0 %v465, 53
        %v1599 = vpop.permute.xlu0 %1598
        %1600 = vrot.lane.b32.xlu0 %v739, 53
        %v1601 = vpop.permute.xlu0 %1600
        %1602 = vrot.lane.b32.xlu0 %v1595, 53
        %v1603 = vpop.permute.xlu0 %1602
        %vm1604 = vcmask 433152
        %v1605 = vsel %vm1604, %v1597, %v1599
        %v1606 = vsel %vm1604, %v1599, %v1601
        %v1607 = vsel %vm1604, %v1601, %v1603
        %1611 = vst [vmem:[#allocation2 + $0x270] sm:$0x1c] %v1605
        %1612 = vst [vmem:[#allocation2 + $0x278] sm:$0x1c] %v1606
        %1613 = vst.msk [vmem:[#allocation2 + $0x280] sm:$0x1c] %vm480, %v1607
        %1614 = vrot.lane.b32.xlu0 %v483, 52
        %v1615 = vpop.permute.xlu0 %1614
        %1616 = vrot.lane.b32.xlu0 %v484, 52
        %v1617 = vpop.permute.xlu0 %1616
        %1618 = vrot.lane.b32.xlu0 %v758, 52
        %v1619 = vpop.permute.xlu0 %1618
        %1620 = vrot.lane.b32.xlu0 %v1457, 52
        %v1621 = vpop.permute.xlu0 %1620
        %vm1622 = vcmask 424960
        %v1623 = vsel %vm1622, %v1615, %v1617
        %v1624 = vsel %vm1622, %v1617, %v1619
        %v1625 = vsel %vm1622, %v1619, %v1621
        %1629 = vst [vmem:[#allocation2 + $0x270] sm:$0xe0] %v1623
        %1630 = vst [vmem:[#allocation2 + $0x278] sm:$0xe0] %v1624
        %1631 = vst.msk [vmem:[#allocation2 + $0x280] sm:$0xe0] %vm499, %v1625
        %1632 = vrot.lane.b32.xlu0 %v355, 32
        %v1633 = vpop.permute.xlu0 %1632
        %1634 = vrot.lane.b32.xlu0 %v351, 32
        %v1635 = vpop.permute.xlu0 %1634
        %1636 = vrot.lane.b32.xlu0 %v657, 32
        %v1637 = vpop.permute.xlu0 %1636
        %1638 = vrot.lane.b32.xlu0 %v352, 32
        %v1639 = vpop.permute.xlu0 %1638
        %vm1640 = vcmask 261120
        %v1641 = vsel %vm1640, %v1633, %v1635
        %v1642 = vsel %vm1640, %v1635, %v1637
        %v1643 = vsel %vm1640, %v1637, %v1639
        %1647 = vst [vmem:[#allocation2 + $0x288] sm:$0x7] %v1641
        %1648 = vst [vmem:[#allocation2 + $0x290] sm:$0x7] %v1642
        %1649 = vst.msk [vmem:[#allocation2 + $0x298] sm:$0x7] %vm359, %v1643
        %1650 = vrot.lane.b32.xlu0 %v362, 31
        %v1651 = vpop.permute.xlu0 %1650
        %1652 = vrot.lane.b32.xlu0 %v363, 31
        %v1653 = vpop.permute.xlu0 %1652
        %1654 = vrot.lane.b32.xlu0 %v795, 31
        %v1655 = vpop.permute.xlu0 %1654
        %1656 = vrot.lane.b32.xlu0 %v1494, 31
        %v1657 = vpop.permute.xlu0 %1656
        %vm1658 = vcmask 252928
        %v1659 = vsel %vm1658, %v1651, %v1653
        %v1660 = vsel %vm1658, %v1653, %v1655
        %v1661 = vsel %vm1658, %v1655, %v1657
        %1665 = vst [vmem:[#allocation2 + $0x288] sm:$0x38] %v1659
        %1666 = vst [vmem:[#allocation2 + $0x290] sm:$0x38] %v1660
        %1667 = vst.msk [vmem:[#allocation2 + $0x298] sm:$0x38] %vm378, %v1661
        %1668 = vrot.lane.b32.xlu0 %v381, 30
        %v1669 = vpop.permute.xlu0 %1668
        %1670 = vrot.lane.b32.xlu0 %v382, 30
        %v1671 = vpop.permute.xlu0 %1670
        %1672 = vrot.lane.b32.xlu0 %v658, 30
        %v1673 = vpop.permute.xlu0 %1672
        %1674 = vrot.lane.b32.xlu0 %v1513, 30
        %v1675 = vpop.permute.xlu0 %1674
        %vm1676 = vcmask 244736
        %v1677 = vsel %vm1676, %v1669, %v1671
        %v1678 = vsel %vm1676, %v1671, %v1673
        %v1679 = vsel %vm1676, %v1673, %v1675
        %1683 = vst [vmem:[#allocation2 + $0x288] sm:$0xc0] %v1677
        %1684 = vst [vmem:[#allocation2 + $0x290] sm:$0xc0] %v1678
        %1685 = vst.msk [vmem:[#allocation2 + $0x298] sm:$0xc0] %vm397, %v1679
        %1686 = vst [vmem:[#allocation2 + $0x2a0] sm:$0x1] %v1677
        %1687 = vst [vmem:[#allocation2 + $0x2a8] sm:$0x1] %v1678
        %1688 = vst.msk [vmem:[#allocation2 + $0x2b0] sm:$0x1] %vm401, %v1679
        %1689 = vrot.lane.b32.xlu0 %v404, 29
        %v1690 = vpop.permute.xlu0 %1689
        %1691 = vrot.lane.b32.xlu0 %v405, 29
        %v1692 = vpop.permute.xlu0 %1691
        %1693 = vrot.lane.b32.xlu0 %v680, 29
        %v1694 = vpop.permute.xlu0 %1693
        %1695 = vrot.lane.b32.xlu0 %v1535, 29
        %v1696 = vpop.permute.xlu0 %1695
        %vm1697 = vcmask 236544
        %v1698 = vsel %vm1697, %v1690, %v1692
        %v1699 = vsel %vm1697, %v1692, %v1694
        %v1700 = vsel %vm1697, %v1694, %v1696
        %1704 = vst [vmem:[#allocation2 + $0x2a0] sm:$0xe] %v1698
        %1705 = vst [vmem:[#allocation2 + $0x2a8] sm:$0xe] %v1699
        %1706 = vst.msk [vmem:[#allocation2 + $0x2b0] sm:$0xe] %vm420, %v1700
        %1707 = vrot.lane.b32.xlu0 %v350, 28
        %v1708 = vpop.permute.xlu0 %1707
        %1709 = vrot.lane.b32.xlu0 %v423, 28
        %v1710 = vpop.permute.xlu0 %1709
        %1711 = vrot.lane.b32.xlu0 %v351, 28
        %v1712 = vpop.permute.xlu0 %1711
        %1713 = vrot.lane.b32.xlu0 %v1554, 28
        %v1714 = vpop.permute.xlu0 %1713
        %vm1715 = vcmask 228352
        %v1716 = vsel %vm1715, %v1708, %v1710
        %v1717 = vsel %vm1715, %v1710, %v1712
        %v1718 = vsel %vm1715, %v1712, %v1714
        %1722 = vst [vmem:[#allocation2 + $0x2a0] sm:$0x70] %v1716
        %1723 = vst [vmem:[#allocation2 + $0x2a8] sm:$0x70] %v1717
        %1724 = vst.msk [vmem:[#allocation2 + $0x2b0] sm:$0x70] %vm438, %v1718
        %1725 = vrot.lane.b32.xlu0 %v441, 27
        %v1726 = vpop.permute.xlu0 %1725
        %1727 = vrot.lane.b32.xlu0 %v442, 27
        %v1728 = vpop.permute.xlu0 %1727
        %1729 = vrot.lane.b32.xlu0 %v717, 27
        %v1730 = vpop.permute.xlu0 %1729
        %1731 = vrot.lane.b32.xlu0 %v1573, 27
        %v1732 = vpop.permute.xlu0 %1731
        %vm1733 = vcmask 220160
        %v1734 = vsel %vm1733, %v1726, %v1728
        %v1735 = vsel %vm1733, %v1728, %v1730
        %v1736 = vsel %vm1733, %v1730, %v1732
        %1740 = vst [vmem:[#allocation2 + $0x2a0] sm:$0x80] %v1734
        %1741 = vst [vmem:[#allocation2 + $0x2a8] sm:$0x80] %v1735
        %1742 = vst.msk [vmem:[#allocation2 + $0x2b0] sm:$0x80] %vm457, %v1736
        %1743 = vst [vmem:[#allocation2 + $0x2b8] sm:$0x3] %v1734
        %1744 = vst [vmem:[#allocation2 + $0x2c0] sm:$0x3] %v1735
        %1745 = vst.msk [vmem:[#allocation2 + $0x2c8] sm:$0x3] %vm461, %v1736
        %1746 = vrot.lane.b32.xlu0 %v464, 26
        %v1747 = vpop.permute.xlu0 %1746
        %1748 = vrot.lane.b32.xlu0 %v465, 26
        %v1749 = vpop.permute.xlu0 %1748
        %1750 = vrot.lane.b32.xlu0 %v739, 26
        %v1751 = vpop.permute.xlu0 %1750
        %1752 = vrot.lane.b32.xlu0 %v1595, 26
        %v1753 = vpop.permute.xlu0 %1752
        %vm1754 = vcmask 211968
        %v1755 = vsel %vm1754, %v1747, %v1749
        %v1756 = vsel %vm1754, %v1749, %v1751
        %v1757 = vsel %vm1754, %v1751, %v1753
        %1761 = vst [vmem:[#allocation2 + $0x2b8] sm:$0x1c] %v1755
        %1762 = vst [vmem:[#allocation2 + $0x2c0] sm:$0x1c] %v1756
        %1763 = vst.msk [vmem:[#allocation2 + $0x2c8] sm:$0x1c] %vm480, %v1757
        %1764 = vrot.lane.b32.xlu0 %v483, 25
        %v1765 = vpop.permute.xlu0 %1764
        %1766 = vrot.lane.b32.xlu0 %v484, 25
        %v1767 = vpop.permute.xlu0 %1766
        %1768 = vrot.lane.b32.xlu0 %v758, 25
        %v1769 = vpop.permute.xlu0 %1768
        %1770 = vrot.lane.b32.xlu0 %v1457, 25
        %v1771 = vpop.permute.xlu0 %1770
        %vm1772 = vcmask 203776
        %v1773 = vsel %vm1772, %v1765, %v1767
        %v1774 = vsel %vm1772, %v1767, %v1769
        %v1775 = vsel %vm1772, %v1769, %v1771
        %1779 = vst [vmem:[#allocation2 + $0x2b8] sm:$0xe0] %v1773
        %1780 = vst [vmem:[#allocation2 + $0x2c0] sm:$0xe0] %v1774
        %1781 = vst.msk [vmem:[#allocation2 + $0x2c8] sm:$0xe0] %vm499, %v1775
        %1782 = vrot.lane.b32.xlu0 %v355, 24
        %v1783 = vpop.permute.xlu0 %1782
        %1784 = vrot.lane.b32.xlu0 %v351, 24
        %v1785 = vpop.permute.xlu0 %1784
        %1786 = vrot.lane.b32.xlu0 %v657, 24
        %v1787 = vpop.permute.xlu0 %1786
        %1788 = vrot.lane.b32.xlu0 %v352, 24
        %v1789 = vpop.permute.xlu0 %1788
        %vm1790 = vcmask 195584
        %v1791 = vsel %vm1790, %v1783, %v1785
        %v1792 = vsel %vm1790, %v1785, %v1787
        %v1793 = vsel %vm1790, %v1787, %v1789
        %1797 = vst [vmem:[#allocation2 + $0x2d0] sm:$0x7] %v1791
        %1798 = vst [vmem:[#allocation2 + $0x2d8] sm:$0x7] %v1792
        %1799 = vst.msk [vmem:[#allocation2 + $0x2e0] sm:$0x7] %vm359, %v1793
        %v1800 = vld [vmem:[%s2] sm:$0xff]
        %v1801 = vld [vmem:[%s2 + $0x8] sm:$0xff]
        %v1802 = vld [vmem:[%s2 + $0x10] sm:$0xff]
        %v1803 = vld [vmem:[%s2 + $0x18] sm:$0xff]
        %v1804 = vld [vmem:[#allocation2] sm:$0xff]
        %v1805 = vld [vmem:[#allocation2 + $0x8] sm:$0xff]
        %v1806 = vld [vmem:[#allocation2 + $0x10] sm:$0xff]
        %v1807 = vld [vmem:[#allocation2 + $0x18] sm:$0xff]
        %v1808 = vld [vmem:[#allocation2 + $0x20] sm:$0xff]
        %v1809 = vld [vmem:[#allocation2 + $0x28] sm:$0xff]
        %v1810 = vld [vmem:[#allocation2 + $0x30] sm:$0xff]
        %v1811 = vld [vmem:[#allocation2 + $0x38] sm:$0xff]
        %v1812 = vld [vmem:[#allocation2 + $0x40] sm:$0xff]
        %v1813 = vld [vmem:[#allocation2 + $0x48] sm:$0xff]
        %v1814 = vld [vmem:[#allocation2 + $0x50] sm:$0xff]
        %v1815 = vld [vmem:[#allocation2 + $0x58] sm:$0xff]
        %v1816 = vld [vmem:[#allocation2 + $0x60] sm:$0xff]
        %v1817 = vld [vmem:[#allocation2 + $0x68] sm:$0xff]
        %v1818 = vld [vmem:[#allocation2 + $0x70] sm:$0xff]
        %v1819 = vld [vmem:[#allocation2 + $0x78] sm:$0xff]
        %v1820 = vld [vmem:[#allocation2 + $0x80] sm:$0xff]
        %v1821 = vld [vmem:[#allocation2 + $0x88] sm:$0xff]
        %v1822 = vld [vmem:[#allocation2 + $0x90] sm:$0xff]
        %v1823 = vld [vmem:[#allocation2 + $0x98] sm:$0xff]
        %v1824 = vld [vmem:[#allocation2 + $0xa0] sm:$0xff]
        %v1825 = vld [vmem:[#allocation2 + $0xa8] sm:$0xff]
        %v1826 = vld [vmem:[#allocation2 + $0xb0] sm:$0xff]
        %v1827 = vld [vmem:[#allocation2 + $0xb8] sm:$0xff]
        %v1828 = vld [vmem:[#allocation2 + $0xc0] sm:$0xff]
        %v1829 = vld [vmem:[#allocation2 + $0xc8] sm:$0xff]
        %v1830 = vld [vmem:[#allocation2 + $0xd0] sm:$0xff]
        %v1831 = vld [vmem:[#allocation2 + $0xd8] sm:$0xff]
        %v1832 = vld [vmem:[#allocation2 + $0xe0] sm:$0xff]
        %v1833 = vld [vmem:[#allocation2 + $0xe8] sm:$0xff]
        %v1834 = vld [vmem:[#allocation2 + $0xf0] sm:$0xff]
        %v1835 = vld [vmem:[#allocation2 + $0xf8] sm:$0xff]
        %v1836 = vld [vmem:[#allocation2 + $0x100] sm:$0xff]
        %v1837 = vld [vmem:[#allocation2 + $0x108] sm:$0xff]
        %v1838 = vld [vmem:[#allocation2 + $0x110] sm:$0xff]
        %v1839 = vld [vmem:[#allocation2 + $0x118] sm:$0xff]
        %v1840 = vld [vmem:[#allocation2 + $0x120] sm:$0xff]
        %v1841 = vld [vmem:[#allocation2 + $0x128] sm:$0xff]
        %v1842 = vld [vmem:[#allocation2 + $0x130] sm:$0xff]
        %v1843 = vld [vmem:[#allocation2 + $0x138] sm:$0xff]
        %v1844 = vld [vmem:[#allocation2 + $0x140] sm:$0xff]
        %v1845 = vld [vmem:[#allocation2 + $0x148] sm:$0xff]
        %v1846 = vld [vmem:[#allocation2 + $0x150] sm:$0xff]
        %v1847 = vld [vmem:[#allocation2 + $0x158] sm:$0xff]
        %v1848 = vld [vmem:[#allocation2 + $0x160] sm:$0xff]
        %v1849 = vld [vmem:[#allocation2 + $0x168] sm:$0xff]
        %v1850 = vld [vmem:[#allocation2 + $0x170] sm:$0xff]
        %v1851 = vld [vmem:[#allocation2 + $0x178] sm:$0xff]
        %v1852 = vld [vmem:[#allocation2 + $0x180] sm:$0xff]
        %v1853 = vld [vmem:[#allocation2 + $0x188] sm:$0xff]
        %v1854 = vld [vmem:[#allocation2 + $0x190] sm:$0xff]
        %v1855 = vld [vmem:[#allocation2 + $0x198] sm:$0xff]
        %v1856 = vld [vmem:[#allocation2 + $0x1a0] sm:$0xff]
        %v1857 = vld [vmem:[#allocation2 + $0x1a8] sm:$0xff]
        %v1858 = vld [vmem:[#allocation2 + $0x1b0] sm:$0xff]
        %v1859 = vld [vmem:[#allocation2 + $0x1b8] sm:$0xff]
        %v1860 = vld [vmem:[#allocation2 + $0x1c0] sm:$0xff]
        %v1861 = vld [vmem:[#allocation2 + $0x1c8] sm:$0xff]
        %v1862 = vld [vmem:[#allocation2 + $0x1d0] sm:$0xff]
        %v1863 = vld [vmem:[#allocation2 + $0x1d8] sm:$0xff]
        %v1864 = vld [vmem:[#allocation2 + $0x1e0] sm:$0xff]
        %v1865 = vld [vmem:[#allocation2 + $0x1e8] sm:$0xff]
        %v1866 = vld [vmem:[#allocation2 + $0x1f0] sm:$0xff]
        %v1867 = vld [vmem:[#allocation2 + $0x1f8] sm:$0xff]
        %v1868 = vld [vmem:[#allocation2 + $0x200] sm:$0xff]
        %v1869 = vld [vmem:[#allocation2 + $0x208] sm:$0xff]
        %v1870 = vld [vmem:[#allocation2 + $0x210] sm:$0xff]
        %v1871 = vld [vmem:[#allocation2 + $0x218] sm:$0xff]
        %v1872 = vld [vmem:[#allocation2 + $0x220] sm:$0xff]
        %v1873 = vld [vmem:[#allocation2 + $0x228] sm:$0xff]
        %v1874 = vld [vmem:[#allocation2 + $0x230] sm:$0xff]
        %v1875 = vld [vmem:[#allocation2 + $0x238] sm:$0xff]
        %v1876 = vld [vmem:[#allocation2 + $0x240] sm:$0xff]
        %v1877 = vld [vmem:[#allocation2 + $0x248] sm:$0xff]
        %v1878 = vld [vmem:[#allocation2 + $0x250] sm:$0xff]
        %v1879 = vld [vmem:[#allocation2 + $0x258] sm:$0xff]
        %v1880 = vld [vmem:[#allocation2 + $0x260] sm:$0xff]
        %v1881 = vld [vmem:[#allocation2 + $0x268] sm:$0xff]
        %v1882 = vld [vmem:[#allocation2 + $0x270] sm:$0xff]
        %v1883 = vld [vmem:[#allocation2 + $0x278] sm:$0xff]
        %v1884 = vld [vmem:[#allocation2 + $0x280] sm:$0xff]
        %v1885 = vld [vmem:[#allocation2 + $0x288] sm:$0xff]
        %v1886 = vld [vmem:[#allocation2 + $0x290] sm:$0xff]
        %v1887 = vld [vmem:[#allocation2 + $0x298] sm:$0xff]
        %v1888 = vld [vmem:[#allocation2 + $0x2a0] sm:$0xff]
        %v1889 = vld [vmem:[#allocation2 + $0x2a8] sm:$0xff]
        %v1890 = vld [vmem:[#allocation2 + $0x2b0] sm:$0xff]
        %v1891 = vld [vmem:[#allocation2 + $0x2b8] sm:$0xff]
        %v1892 = vld [vmem:[#allocation2 + $0x2c0] sm:$0xff]
        %v1893 = vld [vmem:[#allocation2 + $0x2c8] sm:$0xff]
        %v1894 = vld [vmem:[#allocation2 + $0x2d0] sm:$0x7]
        %v1895 = vld [vmem:[#allocation2 + $0x2d8] sm:$0x7]
        %v1896 = vld [vmem:[#allocation2 + $0x2e0] sm:$0x7]
        %v1897 = vpack.c.bf16 %v1807, %v1804
        %v1898 = vpack.c.bf16 %v1808, %v1805
        %v1899 = vpack.c.bf16 %v1809, %v1806
        %v1900 = vpack.c.bf16 %v1813, %v1810
        %v1901 = vpack.c.bf16 %v1814, %v1811
        %v1902 = vpack.c.bf16 %v1815, %v1812
        %v1903 = vpack.c.bf16 %v1819, %v1816
        %v1904 = vpack.c.bf16 %v1820, %v1817
        %v1905 = vpack.c.bf16 %v1821, %v1818
        %v1906 = vpack.c.bf16 %v1825, %v1822
        %v1907 = vpack.c.bf16 %v1826, %v1823
        %v1908 = vpack.c.bf16 %v1827, %v1824
        %v1909 = vpack.c.bf16 %v1831, %v1828
        %v1910 = vpack.c.bf16 %v1832, %v1829
        %v1911 = vpack.c.bf16 %v1833, %v1830
        %v1912 = vpack.c.bf16 %v1837, %v1834
        %v1913 = vpack.c.bf16 %v1838, %v1835
        %v1914 = vpack.c.bf16 %v1839, %v1836
        %v1915 = vpack.c.bf16 %v1843, %v1840
        %v1916 = vpack.c.bf16 %v1844, %v1841
        %v1917 = vpack.c.bf16 %v1845, %v1842
        %v1918 = vpack.c.bf16 %v1849, %v1846
        %v1919 = vpack.c.bf16 %v1850, %v1847
        %v1920 = vpack.c.bf16 %v1851, %v1848
        %v1921 = vpack.c.bf16 %v1855, %v1852
        %v1922 = vpack.c.bf16 %v1856, %v1853
        %v1923 = vpack.c.bf16 %v1857, %v1854
        %v1924 = vpack.c.bf16 %v1861, %v1858
        %v1925 = vpack.c.bf16 %v1862, %v1859
        %v1926 = vpack.c.bf16 %v1863, %v1860
        %v1927 = vpack.c.bf16 %v1867, %v1864
        %v1928 = vpack.c.bf16 %v1868, %v1865
        %v1929 = vpack.c.bf16 %v1869, %v1866
        %v1930 = vpack.c.bf16 %v1873, %v1870
        %v1931 = vpack.c.bf16 %v1874, %v1871
        %v1932 = vpack.c.bf16 %v1875, %v1872
        %v1933 = vpack.c.bf16 %v1879, %v1876
        %v1934 = vpack.c.bf16 %v1880, %v1877
        %v1935 = vpack.c.bf16 %v1881, %v1878
        %v1936 = vpack.c.bf16 %v1885, %v1882
        %v1937 = vpack.c.bf16 %v1886, %v1883
        %v1938 = vpack.c.bf16 %v1887, %v1884
        %v1939 = vpack.c.bf16 %v1891, %v1888
        %v1940 = vpack.c.bf16 %v1892, %v1889
        %v1941 = vpack.c.bf16 %v1893, %v1890
        %v1942 = vpack.c.bf16 %v1894, %v1894
        %v1943 = vpack.c.bf16 %v1895, %v1895
        %v1944 = vpack.c.bf16 %v1896, %v1896
        %v1945 = vld [vmem:[%s3] sm:$0xff]
        %v1946 = vld [vmem:[%s3 + $0x8] sm:$0xff]
        %v1947 = vld [vmem:[%s3 + $0x10] sm:$0xff]
        %v1948 = vld [vmem:[%s3 + $0x18] sm:$0xff]
        %1950 = vset.pattern.permute.xlu0 0
        %1951 = vperm.xlu0 %1950, %v1945
        %v1952 = vpop.permute.xlu0 %1951
        %1955 = vset.pattern.permute.xlu0 0
        %1956 = vperm.xlu0 %1955, %v1946
        %v1957 = vpop.permute.xlu0 %1956
        %1960 = vset.pattern.permute.xlu0 0
        %1961 = vperm.xlu0 %1960, %v1947
        %v1962 = vpop.permute.xlu0 %1961
        %1965 = vset.pattern.permute.xlu0 0
        %1966 = vperm.xlu0 %1965, %v1948
        %v1967 = vpop.permute.xlu0 %1966
        %v1973 = vunpack.c.l.b16 %v1800
        %v1974 = vunpack.c.h.b16 %v1800
        %v1975 = vunpack.c.l.b16 %v1801
        %v1976 = vunpack.c.h.b16 %v1801
        %v1977 = vunpack.c.l.b16 %v1802
        %v1978 = vunpack.c.h.b16 %v1802
        %v1979 = vunpack.c.l.b16 %v1803
        %v1980 = vunpack.c.h.b16 %v1803
        %v1981 = vpack.c.b16 %v1975, %v1973
        %v1982 = vpack.c.b16 %v1976, %v1974
        %v1983 = vpack.c.b16 %v1979, %v1977
        %v1984 = vpack.c.b16 %v1980, %v1978
        %v1988 = vsel %vm1195, %v1982, 0
        %v1991 = vsel %vm1195, %v1984, 0
        %vm1993 = vcmask 1040384
        %vm1994 = vcmask 1041408
        %v1995 = vsel %vm1993, 4294967295, 65535
        %v1996 = vsel %vm1994, %v1995, 0
        %v1998 = vand.u32 %v1942, %v1996
        %v2001 = vand.u32 %v1943, %v1996
        %v2004 = vand.u32 %v1944, %v1996
        %2006 = vmatprep.subr.bf16.mxu0 %v1919
        %2007 = vmatpush1.bf16.msra.mxu0 %v1918
        %2008 = vmatprep.subr.bf16.mxu0 %v1916
        %2009 = vmatpush1.bf16.msra.mxu0 %v1915
        %2010 = vmatprep.subr.bf16.mxu0 %v1913
        %2011 = vmatpush1.bf16.msra.mxu0 %v1912
        %2012 = vmatprep.subr.bf16.mxu0 %v1910
        %2013 = vmatpush1.bf16.msra.mxu0 %v1909
        %2014 = vmatprep.subr.bf16.mxu0 %v1907
        %2015 = vmatpush1.bf16.msra.mxu0 %v1906
        %2016 = vmatprep.subr.bf16.mxu0 %v1904
        %2017 = vmatpush1.bf16.msra.mxu0 %v1903
        %2018 = vmatprep.subr.bf16.mxu0 %v1901
        %2019 = vmatpush1.bf16.msra.mxu0 %v1900
        %2020 = vmatprep.subr.bf16.mxu0 %v1898
        %2021 = vmatpush1.bf16.msra.mxu0 %v1897
        %2022 = vmatprep.subr.bf16.mxu0 %v2001
        %2023 = vmatpush2.bf16.msra.mxu0 %v1998
        %2024 = vmatprep.subr.bf16.mxu0 %v1940
        %2025 = vmatpush2.bf16.msra.mxu0 %v1939
        %2026 = vmatprep.subr.bf16.mxu0 %v1937
        %2027 = vmatpush2.bf16.msra.mxu0 %v1936
        %2028 = vmatprep.subr.bf16.mxu0 %v1934
        %2029 = vmatpush2.bf16.msra.mxu0 %v1933
        %2030 = vmatprep.subr.bf16.mxu0 %v1931
        %2031 = vmatpush2.bf16.msra.mxu0 %v1930
        %2032 = vmatprep.subr.bf16.mxu0 %v1928
        %2033 = vmatpush2.bf16.msra.mxu0 %v1927
        %2034 = vmatprep.subr.bf16.mxu0 %v1925
        %2035 = vmatpush2.bf16.msra.mxu0 %v1924
        %2036 = vmatprep.subr.bf16.mxu0 %v1922
        %2037 = vmatpush2.bf16.msra.mxu0 %v1921
        %2038 = vmatprep.mubr.bf16.mxu0 %v1988
        %2039 = vmatmul.mubr.bf16.gmra.mxu0 %v1981
        %v2040 = vpop.f32.mrf.mxu0
        %v2041 = vadd.f32 %v1952, %v2040
        %v2042 = vpop.f32.mrf.mxu0
        %v2043 = vadd.f32 %v1952, %v2042
        %v2044 = vpop.f32.mrf.mxu0
        %v2045 = vadd.f32 %v1957, %v2044
        %v2046 = vpop.f32.mrf.mxu0
        %v2047 = vadd.f32 %v1957, %v2046
        %2048 = vmatprep.mubr.bf16.mxu0 %v1991
        %2049 = vmatmul.mubr.bf16.gmra.mxu0 %v1983
        %v2050 = vpop.f32.mrf.mxu0
        %v2051 = vadd.f32 %v1962, %v2050
        %v2052 = vpop.f32.mrf.mxu0
        %v2053 = vadd.f32 %v1962, %v2052
        %v2054 = vpop.f32.mrf.mxu0
        %v2055 = vadd.f32 %v1967, %v2054
        %v2056 = vpop.f32.mrf.mxu0
        %v2057 = vadd.f32 %v1967, %v2056
        %2058 = vdwg.mxu0
        %2059 = vmatprep.subr.bf16.mxu0 0
        %2060 = vmatpush1.bf16.msra.mxu0 %v1920
        %2061 = vmatprep.subr.bf16.mxu0 0
        %2062 = vmatpush1.bf16.msra.mxu0 %v1917
        %2063 = vmatprep.subr.bf16.mxu0 0
        %2064 = vmatpush1.bf16.msra.mxu0 %v1914
        %2065 = vmatprep.subr.bf16.mxu0 0
        %2066 = vmatpush1.bf16.msra.mxu0 %v1911
        %2067 = vmatprep.subr.bf16.mxu0 0
        %2068 = vmatpush1.bf16.msra.mxu0 %v1908
        %2069 = vmatprep.subr.bf16.mxu0 0
        %2070 = vmatpush1.bf16.msra.mxu0 %v1905
        %2071 = vmatprep.subr.bf16.mxu0 0
        %2072 = vmatpush1.bf16.msra.mxu0 %v1902
        %2073 = vmatprep.subr.bf16.mxu0 0
        %2074 = vmatpush1.bf16.msra.mxu0 %v1899
        %2075 = vmatprep.subr.bf16.mxu0 0
        %2076 = vmatpush2.bf16.msra.mxu0 %v2004
        %2077 = vmatprep.subr.bf16.mxu0 0
        %2078 = vmatpush2.bf16.msra.mxu0 %v1941
        %2079 = vmatprep.subr.bf16.mxu0 0
        %2080 = vmatpush2.bf16.msra.mxu0 %v1938
        %2081 = vmatprep.subr.bf16.mxu0 0
        %2082 = vmatpush2.bf16.msra.mxu0 %v1935
        %2083 = vmatprep.subr.bf16.mxu0 0
        %2084 = vmatpush2.bf16.msra.mxu0 %v1932
        %2085 = vmatprep.subr.bf16.mxu0 0
        %2086 = vmatpush2.bf16.msra.mxu0 %v1929
        %2087 = vmatprep.subr.bf16.mxu0 0
        %2088 = vmatpush2.bf16.msra.mxu0 %v1926
        %2089 = vmatprep.subr.bf16.mxu0 0
        %2090 = vmatpush2.bf16.msra.mxu0 %v1923
        %2091 = vmatprep.mubr.bf16.mxu0 %v1988
        %2092 = vmatmul.mubr.bf16.gmra.mxu0 %v1981
        %v2093 = vpop.f32.mrf.mxu0
        %v2094 = vadd.f32 %v1952, %v2093
        %v2095 = vpop.f32.mrf.mxu0
        %v2096 = vpop.f32.mrf.mxu0
        %v2097 = vadd.f32 %v1957, %v2096
        %v2098 = vpop.f32.mrf.mxu0
        %2099 = vmatprep.mubr.bf16.mxu0 %v1991
        %2100 = vmatmul.mubr.bf16.gmra.mxu0 %v1983
        %v2101 = vpop.f32.mrf.mxu0
        %v2102 = vadd.f32 %v1962, %v2101
        %v2103 = vpop.f32.mrf.mxu0
        %v2104 = vpop.f32.mrf.mxu0
        %v2105 = vadd.f32 %v1967, %v2104
        %v2106 = vpop.f32.mrf.mxu0
        %2107 = vdwg.mxu0
        %v2108 = vmax.f32 %v2041, 0.0
        %v2109 = vmax.f32 %v2043, 0.0
        %v2110 = vmax.f32 %v2094, 0.0
        %v2111 = vmax.f32 %v2045, 0.0
        %v2112 = vmax.f32 %v2047, 0.0
        %v2113 = vmax.f32 %v2097, 0.0
        %v2114 = vmax.f32 %v2051, 0.0
        %v2115 = vmax.f32 %v2053, 0.0
        %v2116 = vmax.f32 %v2102, 0.0
        %v2117 = vmax.f32 %v2055, 0.0
        %v2118 = vmax.f32 %v2057, 0.0
        %v2119 = vmax.f32 %v2105, 0.0
        %v2120 = vld [vmem:[%s4] sm:$0xf]
        %v2121 = vld [vmem:[%s4 + $0x4] sm:$0xf]
        %v2122 = vpack.c.bf16 %v2111, %v2108
        %v2123 = vpack.c.bf16 %v2112, %v2109
        %v2124 = vpack.c.bf16 %v2113, %v2110
        %v2125 = vpack.c.bf16 %v2117, %v2114
        %v2126 = vpack.c.bf16 %v2118, %v2115
        %v2127 = vpack.c.bf16 %v2119, %v2116
        %v2128 = vld [vmem:[%s5] sm:$0xff]
        %v2129 = vld [vmem:[%s5 + $0x8] sm:$0xff]
        %2131 = vset.pattern.permute.xlu0 0
        %2132 = vperm.xlu0 %2131, %v2128
        %v2133 = vpop.permute.xlu0 %2132
        %2136 = vset.pattern.permute.xlu0 0
        %2137 = vperm.xlu0 %2136, %v2129
        %v2138 = vpop.permute.xlu0 %2137
        %v2142 = vunpack.c.l.b16 %v2120
        %v2143 = vunpack.c.l.b16 %v2121
        %v2144 = vpack.c.b16 %v2143, %v2142
        %v2146 = vsel %vm1640, %v2144, 0
        %2148 = vmatprep.subr.bf16.mxu0 0
        %2149 = vmatpush1.bf16.msra.mxu0 0
        %2150 = vmatprep.subr.bf16.mxu0 0
        %2151 = vmatpush1.bf16.msra.mxu0 0
        %2152 = vmatprep.subr.bf16.mxu0 0
        %2153 = vmatpush1.bf16.msra.mxu0 0
        %2154 = vmatprep.subr.bf16.mxu0 0
        %2155 = vmatpush1.bf16.msra.mxu0 0
        %2156 = vmatprep.subr.bf16.mxu0 0
        %2157 = vmatpush1.bf16.msra.mxu0 0
        %2158 = vmatprep.subr.bf16.mxu0 0
        %2159 = vmatpush1.bf16.msra.mxu0 0
        %2160 = vmatprep.subr.bf16.mxu0 %v2126
        %2161 = vmatpush1.bf16.msra.mxu0 %v2125
        %2162 = vmatprep.subr.bf16.mxu0 %v2123
        %2163 = vmatpush1.bf16.msra.mxu0 %v2122
        %2164 = vmatprep.subr.bf16.mxu0 0
        %2165 = vmatpush2.bf16.msra.mxu0 0
        %2166 = vmatprep.subr.bf16.mxu0 0
        %2167 = vmatpush2.bf16.msra.mxu0 0
        %2168 = vmatprep.subr.bf16.mxu0 0
        %2169 = vmatpush2.bf16.msra.mxu0 0
        %2170 = vmatprep.subr.bf16.mxu0 0
        %2171 = vmatpush2.bf16.msra.mxu0 0
        %2172 = vmatprep.subr.bf16.mxu0 0
        %2173 = vmatpush2.bf16.msra.mxu0 0
        %2174 = vmatprep.subr.bf16.mxu0 0
        %2175 = vmatpush2.bf16.msra.mxu0 0
        %2176 = vmatprep.subr.bf16.mxu0 0
        %2177 = vmatpush2.bf16.msra.mxu0 0
        %2178 = vmatprep.subr.bf16.mxu0 0
        %2179 = vmatpush2.bf16.msra.mxu0 0
        %2180 = vmatprep.mubr.bf16.mxu0 0
        %2181 = vmatmul.mubr.bf16.gmra.mxu0 %v2146
        %v2182 = vpop.f32.mrf.mxu0
        %v2183 = vadd.f32 %v2133, %v2182
        %v2184 = vpop.f32.mrf.mxu0
        %v2185 = vadd.f32 %v2133, %v2184
        %v2186 = vpop.f32.mrf.mxu0
        %v2187 = vadd.f32 %v2138, %v2186
        %v2188 = vpop.f32.mrf.mxu0
        %v2189 = vadd.f32 %v2138, %v2188
        %2190 = vdwg.mxu0
        %2191 = vmatprep.subr.bf16.mxu0 0
        %2192 = vmatpush1.bf16.msra.mxu0 0
        %2193 = vmatprep.subr.bf16.mxu0 0
        %2194 = vmatpush1.bf16.msra.mxu0 0
        %2195 = vmatprep.subr.bf16.mxu0 0
        %2196 = vmatpush1.bf16.msra.mxu0 0
        %2197 = vmatprep.subr.bf16.mxu0 0
        %2198 = vmatpush1.bf16.msra.mxu0 0
        %2199 = vmatprep.subr.bf16.mxu0 0
        %2200 = vmatpush1.bf16.msra.mxu0 0
        %2201 = vmatprep.subr.bf16.mxu0 0
        %2202 = vmatpush1.bf16.msra.mxu0 0
        %2203 = vmatprep.subr.bf16.mxu0 0
        %2204 = vmatpush1.bf16.msra.mxu0 %v2127
        %2205 = vmatprep.subr.bf16.mxu0 0
        %2206 = vmatpush1.bf16.msra.mxu0 %v2124
        %2207 = vmatprep.subr.bf16.mxu0 0
        %2208 = vmatpush2.bf16.msra.mxu0 0
        %2209 = vmatprep.subr.bf16.mxu0 0
        %2210 = vmatpush2.bf16.msra.mxu0 0
        %2211 = vmatprep.subr.bf16.mxu0 0
        %2212 = vmatpush2.bf16.msra.mxu0 0
        %2213 = vmatprep.subr.bf16.mxu0 0
        %2214 = vmatpush2.bf16.msra.mxu0 0
        %2215 = vmatprep.subr.bf16.mxu0 0
        %2216 = vmatpush2.bf16.msra.mxu0 0
        %2217 = vmatprep.subr.bf16.mxu0 0
        %2218 = vmatpush2.bf16.msra.mxu0 0
        %2219 = vmatprep.subr.bf16.mxu0 0
        %2220 = vmatpush2.bf16.msra.mxu0 0
        %2221 = vmatprep.subr.bf16.mxu0 0
        %2222 = vmatpush2.bf16.msra.mxu0 0
        %2223 = vmatprep.mubr.bf16.mxu0 0
        %2224 = vmatmul.mubr.bf16.gmra.mxu0 %v2146
        %v2225 = vpop.f32.mrf.mxu0
        %v2226 = vadd.f32 %v2133, %v2225
        %v2227 = vpop.f32.mrf.mxu0
        %v2228 = vpop.f32.mrf.mxu0
        %v2229 = vadd.f32 %v2138, %v2228
        %v2230 = vpop.f32.mrf.mxu0
        %2231 = vdwg.mxu0
        %v2232 = vmax.f32 %v2183, 0.0
        %v2233 = vmax.f32 %v2185, 0.0
        %v2234 = vmax.f32 %v2226, 0.0
        %v2235 = vmax.f32 %v2187, 0.0
        %v2236 = vmax.f32 %v2189, 0.0
        %v2237 = vmax.f32 %v2229, 0.0
        %v2238 = vld [vmem:[%s348] sm:$0x7]
        %v2240 = vlaneseq
        %v2241 = vshrl.u32 %v2240, 7
        %v2242 = vsub.s32 0, %v2241
        %v2243 = vrot.slane %v2238, %v2242
        %v2244 = vlaneseq
        %v2245 = vshrl.u32 %v2244, 7
        %v2246 = vsub.s32 1, %v2245
        %v2247 = vrot.slane %v2238, %v2246
        %v2248 = vlaneseq
        %v2249 = vshrl.u32 %v2248, 7
        %v2250 = vsub.s32 2, %v2249
        %v2251 = vrot.slane %v2238, %v2250
        %v2255 = vmul.f32 %v2232, %v2243
        %v2256 = vmul.f32 %v2233, %v2247
        %v2257 = vmul.f32 %v2234, %v2251
        %v2258 = vmul.f32 %v2235, %v2243
        %v2259 = vmul.f32 %v2236, %v2247
        %v2260 = vmul.f32 %v2237, %v2251
        %2261 = vst [vmem:[#allocation3] sm:$0xff] %v2255
        %2262 = vst.msk [vmem:[#allocation3 + $0x8] sm:$0xff] %vm1381, %v2256
        %2263 = vst [vmem:[#allocation3 + $0x10] sm:$0xff] %v2258
        %2264 = vst.msk [vmem:[#allocation3 + $0x18] sm:$0xff] %vm1381, %v2259
        %2269 = vrot.lane.b32.xlu0 %v2255, 127
        %v2270 = vpop.permute.xlu0 %2269
        %2271 = vrot.lane.b32.xlu0 %v2256, 127
        %v2272 = vpop.permute.xlu0 %2271
        %2273 = vrot.lane.b32.xlu0 %v2258, 127
        %v2274 = vpop.permute.xlu0 %2273
        %2275 = vrot.lane.b32.xlu0 %v2259, 127
        %v2276 = vpop.permute.xlu0 %2275
        %v2277 = vsel %vm370, %v2270, %v2272
        %v2278 = vsel %vm370, %v2274, %v2276
        %2283 = vst [vmem:[#allocation3 + $0x20] sm:$0xff] %v2277
        %2284 = vst.msk [vmem:[#allocation3 + $0x28] sm:$0xff] %vm1381, %v2272
        %2285 = vst [vmem:[#allocation3 + $0x30] sm:$0xff] %v2278
        %2286 = vst.msk [vmem:[#allocation3 + $0x38] sm:$0xff] %vm1381, %v2276
        %2287 = vrot.lane.b32.xlu0 %v2255, 126
        %v2288 = vpop.permute.xlu0 %2287
        %2289 = vrot.lane.b32.xlu0 %v2256, 126
        %v2290 = vpop.permute.xlu0 %2289
        %2291 = vrot.lane.b32.xlu0 %v2258, 126
        %v2292 = vpop.permute.xlu0 %2291
        %2293 = vrot.lane.b32.xlu0 %v2259, 126
        %v2294 = vpop.permute.xlu0 %2293
        %v2295 = vsel %vm389, %v2288, %v2290
        %v2296 = vsel %vm389, %v2292, %v2294
        %2301 = vst [vmem:[#allocation3 + $0x40] sm:$0xff] %v2295
        %2302 = vst.msk [vmem:[#allocation3 + $0x48] sm:$0xff] %vm1381, %v2290
        %2303 = vst [vmem:[#allocation3 + $0x50] sm:$0xff] %v2296
        %2304 = vst.msk [vmem:[#allocation3 + $0x58] sm:$0xff] %vm1381, %v2294
        %2305 = vrot.lane.b32.xlu0 %v2255, 125
        %v2306 = vpop.permute.xlu0 %2305
        %2307 = vrot.lane.b32.xlu0 %v2256, 125
        %v2308 = vpop.permute.xlu0 %2307
        %2309 = vrot.lane.b32.xlu0 %v2258, 125
        %v2310 = vpop.permute.xlu0 %2309
        %2311 = vrot.lane.b32.xlu0 %v2259, 125
        %v2312 = vpop.permute.xlu0 %2311
        %v2313 = vsel %vm412, %v2306, %v2308
        %v2314 = vsel %vm412, %v2310, %v2312
        %2319 = vst [vmem:[#allocation3 + $0x60] sm:$0xff] %v2313
        %2320 = vst.msk [vmem:[#allocation3 + $0x68] sm:$0xff] %vm1381, %v2308
        %2321 = vst [vmem:[#allocation3 + $0x70] sm:$0xff] %v2314
        %2322 = vst.msk [vmem:[#allocation3 + $0x78] sm:$0xff] %vm1381, %v2312
        %2323 = vrot.lane.b32.xlu0 %v2255, 124
        %v2324 = vpop.permute.xlu0 %2323
        %2325 = vrot.lane.b32.xlu0 %v2256, 124
        %v2326 = vpop.permute.xlu0 %2325
        %2327 = vrot.lane.b32.xlu0 %v2258, 124
        %v2328 = vpop.permute.xlu0 %2327
        %2329 = vrot.lane.b32.xlu0 %v2259, 124
        %v2330 = vpop.permute.xlu0 %2329
        %v2331 = vsel %vm430, %v2324, %v2326
        %v2332 = vsel %vm430, %v2328, %v2330
        %2337 = vst [vmem:[#allocation3 + $0x80] sm:$0xff] %v2331
        %2338 = vst.msk [vmem:[#allocation3 + $0x88] sm:$0xff] %vm1381, %v2326
        %2339 = vst [vmem:[#allocation3 + $0x90] sm:$0xff] %v2332
        %2340 = vst.msk [vmem:[#allocation3 + $0x98] sm:$0xff] %vm1381, %v2330
        %2341 = vrot.lane.b32.xlu0 %v2255, 100
        %v2342 = vpop.permute.xlu0 %2341
        %2343 = vrot.lane.b32.xlu0 %v2256, 100
        %v2344 = vpop.permute.xlu0 %2343
        %2345 = vrot.lane.b32.xlu0 %v2258, 100
        %v2346 = vpop.permute.xlu0 %2345
        %2347 = vrot.lane.b32.xlu0 %v2259, 100
        %v2348 = vpop.permute.xlu0 %2347
        %v2349 = vsel %vm522, %v2342, %v2344
        %v2350 = vsel %vm522, %v2346, %v2348
        %2355 = vst [vmem:[#allocation3 + $0xa0] sm:$0xff] %v2349
        %2356 = vst.msk [vmem:[#allocation3 + $0xa8] sm:$0xff] %vm1381, %v2344
        %2357 = vst [vmem:[#allocation3 + $0xb0] sm:$0xff] %v2350
        %2358 = vst.msk [vmem:[#allocation3 + $0xb8] sm:$0xff] %vm1381, %v2348
        %2359 = vrot.lane.b32.xlu0 %v2255, 99
        %v2360 = vpop.permute.xlu0 %2359
        %2361 = vrot.lane.b32.xlu0 %v2256, 99
        %v2362 = vpop.permute.xlu0 %2361
        %2363 = vrot.lane.b32.xlu0 %v2258, 99
        %v2364 = vpop.permute.xlu0 %2363
        %2365 = vrot.lane.b32.xlu0 %v2259, 99
        %v2366 = vpop.permute.xlu0 %2365
        %v2367 = vsel %vm537, %v2360, %v2362
        %v2368 = vsel %vm537, %v2364, %v2366
        %2373 = vst [vmem:[#allocation3 + $0xc0] sm:$0xff] %v2367
        %2374 = vst.msk [vmem:[#allocation3 + $0xc8] sm:$0xff] %vm1381, %v2362
        %2375 = vst [vmem:[#allocation3 + $0xd0] sm:$0xff] %v2368
        %2376 = vst.msk [vmem:[#allocation3 + $0xd8] sm:$0xff] %vm1381, %v2366
        %2377 = vrot.lane.b32.xlu0 %v2255, 98
        %v2378 = vpop.permute.xlu0 %2377
        %2379 = vrot.lane.b32.xlu0 %v2256, 98
        %v2380 = vpop.permute.xlu0 %2379
        %2381 = vrot.lane.b32.xlu0 %v2258, 98
        %v2382 = vpop.permute.xlu0 %2381
        %2383 = vrot.lane.b32.xlu0 %v2259, 98
        %v2384 = vpop.permute.xlu0 %2383
        %v2385 = vsel %vm555, %v2378, %v2380
        %v2386 = vsel %vm555, %v2382, %v2384
        %2391 = vst [vmem:[#allocation3 + $0xe0] sm:$0xff] %v2385
        %2392 = vst.msk [vmem:[#allocation3 + $0xe8] sm:$0xff] %vm1381, %v2380
        %2393 = vst [vmem:[#allocation3 + $0xf0] sm:$0xff] %v2386
        %2394 = vst.msk [vmem:[#allocation3 + $0xf8] sm:$0xff] %vm1381, %v2384
        %2395 = vrot.lane.b32.xlu0 %v2255, 97
        %v2396 = vpop.permute.xlu0 %2395
        %2397 = vrot.lane.b32.xlu0 %v2256, 97
        %v2398 = vpop.permute.xlu0 %2397
        %2399 = vrot.lane.b32.xlu0 %v2258, 97
        %v2400 = vpop.permute.xlu0 %2399
        %2401 = vrot.lane.b32.xlu0 %v2259, 97
        %v2402 = vpop.permute.xlu0 %2401
        %v2403 = vsel %vm570, %v2396, %v2398
        %v2404 = vsel %vm570, %v2400, %v2402
        %2409 = vst [vmem:[#allocation3 + $0x100] sm:$0xff] %v2403
        %2410 = vst.msk [vmem:[#allocation3 + $0x108] sm:$0xff] %vm1381, %v2398
        %2411 = vst [vmem:[#allocation3 + $0x110] sm:$0xff] %v2404
        %2412 = vst.msk [vmem:[#allocation3 + $0x118] sm:$0xff] %vm1381, %v2402
        %2413 = vrot.lane.b32.xlu0 %v2255, 96
        %v2414 = vpop.permute.xlu0 %2413
        %2415 = vrot.lane.b32.xlu0 %v2256, 96
        %v2416 = vpop.permute.xlu0 %2415
        %2417 = vrot.lane.b32.xlu0 %v2258, 96
        %v2418 = vpop.permute.xlu0 %2417
        %2419 = vrot.lane.b32.xlu0 %v2259, 96
        %v2420 = vpop.permute.xlu0 %2419
        %v2421 = vsel %vm585, %v2414, %v2416
        %v2422 = vsel %vm585, %v2418, %v2420
        %2427 = vst [vmem:[#allocation3 + $0x120] sm:$0xff] %v2421
        %2428 = vst.msk [vmem:[#allocation3 + $0x128] sm:$0xff] %vm1381, %v2416
        %2429 = vst [vmem:[#allocation3 + $0x130] sm:$0xff] %v2422
        %2430 = vst.msk [vmem:[#allocation3 + $0x138] sm:$0xff] %vm1381, %v2420
        %2433 = vrot.lane.b32.xlu0 %v2255, 72
        %v2434 = vpop.permute.xlu0 %2433
        %2435 = vrot.lane.b32.xlu0 %v2256, 72
        %v2436 = vpop.permute.xlu0 %2435
        %2437 = vrot.lane.b32.xlu0 %v2257, 72
        %v2438 = vpop.permute.xlu0 %2437
        %2439 = vrot.lane.b32.xlu0 %v2258, 72
        %v2440 = vpop.permute.xlu0 %2439
        %2441 = vrot.lane.b32.xlu0 %v2259, 72
        %v2442 = vpop.permute.xlu0 %2441
        %2443 = vrot.lane.b32.xlu0 %v2260, 72
        %v2444 = vpop.permute.xlu0 %2443
        %v2445 = vsel %vm667, %v2434, %v2436
        %v2446 = vsel %vm667, %v2436, %v2438
        %v2447 = vsel %vm667, %v2440, %v2442
        %v2448 = vsel %vm667, %v2442, %v2444
        %2453 = vst [vmem:[#allocation3 + $0x140] sm:$0xff] %v2445
        %2454 = vst.msk [vmem:[#allocation3 + $0x148] sm:$0xff] %vm1381, %v2446
        %2455 = vst [vmem:[#allocation3 + $0x150] sm:$0xff] %v2447
        %2456 = vst.msk [vmem:[#allocation3 + $0x158] sm:$0xff] %vm1381, %v2448
        %2457 = vrot.lane.b32.xlu0 %v2255, 71
        %v2458 = vpop.permute.xlu0 %2457
        %2459 = vrot.lane.b32.xlu0 %v2256, 71
        %v2460 = vpop.permute.xlu0 %2459
        %2461 = vrot.lane.b32.xlu0 %v2257, 71
        %v2462 = vpop.permute.xlu0 %2461
        %2463 = vrot.lane.b32.xlu0 %v2258, 71
        %v2464 = vpop.permute.xlu0 %2463
        %2465 = vrot.lane.b32.xlu0 %v2259, 71
        %v2466 = vpop.permute.xlu0 %2465
        %2467 = vrot.lane.b32.xlu0 %v2260, 71
        %v2468 = vpop.permute.xlu0 %2467
        %v2469 = vsel %vm689, %v2458, %v2460
        %v2470 = vsel %vm689, %v2460, %v2462
        %v2471 = vsel %vm689, %v2464, %v2466
        %v2472 = vsel %vm689, %v2466, %v2468
        %2477 = vst [vmem:[#allocation3 + $0x160] sm:$0xff] %v2469
        %2478 = vst.msk [vmem:[#allocation3 + $0x168] sm:$0xff] %vm1381, %v2470
        %2479 = vst [vmem:[#allocation3 + $0x170] sm:$0xff] %v2471
        %2480 = vst.msk [vmem:[#allocation3 + $0x178] sm:$0xff] %vm1381, %v2472
        %2481 = vrot.lane.b32.xlu0 %v2255, 70
        %v2482 = vpop.permute.xlu0 %2481
        %2483 = vrot.lane.b32.xlu0 %v2256, 70
        %v2484 = vpop.permute.xlu0 %2483
        %2485 = vrot.lane.b32.xlu0 %v2257, 70
        %v2486 = vpop.permute.xlu0 %2485
        %2487 = vrot.lane.b32.xlu0 %v2258, 70
        %v2488 = vpop.permute.xlu0 %2487
        %2489 = vrot.lane.b32.xlu0 %v2259, 70
        %v2490 = vpop.permute.xlu0 %2489
        %2491 = vrot.lane.b32.xlu0 %v2260, 70
        %v2492 = vpop.permute.xlu0 %2491
        %v2493 = vsel %vm707, %v2482, %v2484
        %v2494 = vsel %vm707, %v2484, %v2486
        %v2495 = vsel %vm707, %v2488, %v2490
        %v2496 = vsel %vm707, %v2490, %v2492
        %2501 = vst [vmem:[#allocation3 + $0x180] sm:$0xff] %v2493
        %2502 = vst.msk [vmem:[#allocation3 + $0x188] sm:$0xff] %vm1381, %v2494
        %2503 = vst [vmem:[#allocation3 + $0x190] sm:$0xff] %v2495
        %2504 = vst.msk [vmem:[#allocation3 + $0x198] sm:$0xff] %vm1381, %v2496
        %2505 = vrot.lane.b32.xlu0 %v2255, 69
        %v2506 = vpop.permute.xlu0 %2505
        %2507 = vrot.lane.b32.xlu0 %v2256, 69
        %v2508 = vpop.permute.xlu0 %2507
        %2509 = vrot.lane.b32.xlu0 %v2257, 69
        %v2510 = vpop.permute.xlu0 %2509
        %2511 = vrot.lane.b32.xlu0 %v2258, 69
        %v2512 = vpop.permute.xlu0 %2511
        %2513 = vrot.lane.b32.xlu0 %v2259, 69
        %v2514 = vpop.permute.xlu0 %2513
        %2515 = vrot.lane.b32.xlu0 %v2260, 69
        %v2516 = vpop.permute.xlu0 %2515
        %v2517 = vsel %vm726, %v2506, %v2508
        %v2518 = vsel %vm726, %v2508, %v2510
        %v2519 = vsel %vm726, %v2512, %v2514
        %v2520 = vsel %vm726, %v2514, %v2516
        %2525 = vst [vmem:[#allocation3 + $0x1a0] sm:$0xff] %v2517
        %2526 = vst.msk [vmem:[#allocation3 + $0x1a8] sm:$0xff] %vm1381, %v2518
        %2527 = vst [vmem:[#allocation3 + $0x1b0] sm:$0xff] %v2519
        %2528 = vst.msk [vmem:[#allocation3 + $0x1b8] sm:$0xff] %vm1381, %v2520
        %2529 = vrot.lane.b32.xlu0 %v2255, 68
        %v2530 = vpop.permute.xlu0 %2529
        %2531 = vrot.lane.b32.xlu0 %v2256, 68
        %v2532 = vpop.permute.xlu0 %2531
        %2533 = vrot.lane.b32.xlu0 %v2257, 68
        %v2534 = vpop.permute.xlu0 %2533
        %2535 = vrot.lane.b32.xlu0 %v2258, 68
        %v2536 = vpop.permute.xlu0 %2535
        %2537 = vrot.lane.b32.xlu0 %v2259, 68
        %v2538 = vpop.permute.xlu0 %2537
        %2539 = vrot.lane.b32.xlu0 %v2260, 68
        %v2540 = vpop.permute.xlu0 %2539
        %v2541 = vsel %vm748, %v2530, %v2532
        %v2542 = vsel %vm748, %v2532, %v2534
        %v2543 = vsel %vm748, %v2536, %v2538
        %v2544 = vsel %vm748, %v2538, %v2540
        %2549 = vst [vmem:[#allocation3 + $0x1c0] sm:$0xff] %v2541
        %2550 = vst.msk [vmem:[#allocation3 + $0x1c8] sm:$0xff] %vm1381, %v2542
        %2551 = vst [vmem:[#allocation3 + $0x1d0] sm:$0xff] %v2543
        %2552 = vst.msk [vmem:[#allocation3 + $0x1d8] sm:$0xff] %vm1381, %v2544
        %2553 = vrot.lane.b32.xlu0 %v2255, 44
        %v2554 = vpop.permute.xlu0 %2553
        %2555 = vrot.lane.b32.xlu0 %v2256, 44
        %v2556 = vpop.permute.xlu0 %2555
        %2557 = vrot.lane.b32.xlu0 %v2257, 44
        %v2558 = vpop.permute.xlu0 %2557
        %2559 = vrot.lane.b32.xlu0 %v2258, 44
        %v2560 = vpop.permute.xlu0 %2559
        %2561 = vrot.lane.b32.xlu0 %v2259, 44
        %v2562 = vpop.permute.xlu0 %2561
        %2563 = vrot.lane.b32.xlu0 %v2260, 44
        %v2564 = vpop.permute.xlu0 %2563
        %v2565 = vsel %vm843, %v2554, %v2556
        %v2566 = vsel %vm843, %v2556, %v2558
        %v2567 = vsel %vm843, %v2560, %v2562
        %v2568 = vsel %vm843, %v2562, %v2564
        %2573 = vst [vmem:[#allocation3 + $0x1e0] sm:$0xff] %v2565
        %2574 = vst.msk [vmem:[#allocation3 + $0x1e8] sm:$0xff] %vm1381, %v2566
        %2575 = vst [vmem:[#allocation3 + $0x1f0] sm:$0xff] %v2567
        %2576 = vst.msk [vmem:[#allocation3 + $0x1f8] sm:$0xff] %vm1381, %v2568
        %2577 = vrot.lane.b32.xlu0 %v2255, 43
        %v2578 = vpop.permute.xlu0 %2577
        %2579 = vrot.lane.b32.xlu0 %v2256, 43
        %v2580 = vpop.permute.xlu0 %2579
        %2581 = vrot.lane.b32.xlu0 %v2257, 43
        %v2582 = vpop.permute.xlu0 %2581
        %2583 = vrot.lane.b32.xlu0 %v2258, 43
        %v2584 = vpop.permute.xlu0 %2583
        %2585 = vrot.lane.b32.xlu0 %v2259, 43
        %v2586 = vpop.permute.xlu0 %2585
        %2587 = vrot.lane.b32.xlu0 %v2260, 43
        %v2588 = vpop.permute.xlu0 %2587
        %v2589 = vsel %vm861, %v2578, %v2580
        %v2590 = vsel %vm861, %v2580, %v2582
        %v2591 = vsel %vm861, %v2584, %v2586
        %v2592 = vsel %vm861, %v2586, %v2588
        %2597 = vst [vmem:[#allocation3 + $0x200] sm:$0xff] %v2589
        %2598 = vst.msk [vmem:[#allocation3 + $0x208] sm:$0xff] %vm1381, %v2590
        %2599 = vst [vmem:[#allocation3 + $0x210] sm:$0xff] %v2591
        %2600 = vst.msk [vmem:[#allocation3 + $0x218] sm:$0xff] %vm1381, %v2592
        %2601 = vrot.lane.b32.xlu0 %v2255, 42
        %v2602 = vpop.permute.xlu0 %2601
        %2603 = vrot.lane.b32.xlu0 %v2256, 42
        %v2604 = vpop.permute.xlu0 %2603
        %2605 = vrot.lane.b32.xlu0 %v2257, 42
        %v2606 = vpop.permute.xlu0 %2605
        %2607 = vrot.lane.b32.xlu0 %v2258, 42
        %v2608 = vpop.permute.xlu0 %2607
        %2609 = vrot.lane.b32.xlu0 %v2259, 42
        %v2610 = vpop.permute.xlu0 %2609
        %2611 = vrot.lane.b32.xlu0 %v2260, 42
        %v2612 = vpop.permute.xlu0 %2611
        %v2613 = vsel %vm879, %v2602, %v2604
        %v2614 = vsel %vm879, %v2604, %v2606
        %v2615 = vsel %vm879, %v2608, %v2610
        %v2616 = vsel %vm879, %v2610, %v2612
        %2621 = vst [vmem:[#allocation3 + $0x220] sm:$0xff] %v2613
        %2622 = vst.msk [vmem:[#allocation3 + $0x228] sm:$0xff] %vm1381, %v2614
        %2623 = vst [vmem:[#allocation3 + $0x230] sm:$0xff] %v2615
        %2624 = vst.msk [vmem:[#allocation3 + $0x238] sm:$0xff] %vm1381, %v2616
        %2625 = vrot.lane.b32.xlu0 %v2255, 41
        %v2626 = vpop.permute.xlu0 %2625
        %2627 = vrot.lane.b32.xlu0 %v2256, 41
        %v2628 = vpop.permute.xlu0 %2627
        %2629 = vrot.lane.b32.xlu0 %v2257, 41
        %v2630 = vpop.permute.xlu0 %2629
        %2631 = vrot.lane.b32.xlu0 %v2258, 41
        %v2632 = vpop.permute.xlu0 %2631
        %2633 = vrot.lane.b32.xlu0 %v2259, 41
        %v2634 = vpop.permute.xlu0 %2633
        %2635 = vrot.lane.b32.xlu0 %v2260, 41
        %v2636 = vpop.permute.xlu0 %2635
        %v2637 = vsel %vm900, %v2626, %v2628
        %v2638 = vsel %vm900, %v2628, %v2630
        %v2639 = vsel %vm900, %v2632, %v2634
        %v2640 = vsel %vm900, %v2634, %v2636
        %2645 = vst [vmem:[#allocation3 + $0x240] sm:$0xff] %v2637
        %2646 = vst.msk [vmem:[#allocation3 + $0x248] sm:$0xff] %vm1381, %v2638
        %2647 = vst [vmem:[#allocation3 + $0x250] sm:$0xff] %v2639
        %2648 = vst.msk [vmem:[#allocation3 + $0x258] sm:$0xff] %vm1381, %v2640
        %2649 = vrot.lane.b32.xlu0 %v2255, 40
        %v2650 = vpop.permute.xlu0 %2649
        %2651 = vrot.lane.b32.xlu0 %v2256, 40
        %v2652 = vpop.permute.xlu0 %2651
        %2653 = vrot.lane.b32.xlu0 %v2257, 40
        %v2654 = vpop.permute.xlu0 %2653
        %2655 = vrot.lane.b32.xlu0 %v2258, 40
        %v2656 = vpop.permute.xlu0 %2655
        %2657 = vrot.lane.b32.xlu0 %v2259, 40
        %v2658 = vpop.permute.xlu0 %2657
        %2659 = vrot.lane.b32.xlu0 %v2260, 40
        %v2660 = vpop.permute.xlu0 %2659
        %v2661 = vsel %vm918, %v2650, %v2652
        %v2662 = vsel %vm918, %v2652, %v2654
        %v2663 = vsel %vm918, %v2656, %v2658
        %v2664 = vsel %vm918, %v2658, %v2660
        %2669 = vst [vmem:[#allocation3 + $0x260] sm:$0xff] %v2661
        %2670 = vst.msk [vmem:[#allocation3 + $0x268] sm:$0xff] %vm1381, %v2662
        %2671 = vst [vmem:[#allocation3 + $0x270] sm:$0xff] %v2663
        %2672 = vst.msk [vmem:[#allocation3 + $0x278] sm:$0xff] %vm1381, %v2664
        %2673 = vrot.lane.b32.xlu0 %v2255, 16
        %v2674 = vpop.permute.xlu0 %2673
        %2675 = vrot.lane.b32.xlu0 %v2256, 16
        %v2676 = vpop.permute.xlu0 %2675
        %2677 = vrot.lane.b32.xlu0 %v2257, 16
        %v2678 = vpop.permute.xlu0 %2677
        %2679 = vrot.lane.b32.xlu0 %v2258, 16
        %v2680 = vpop.permute.xlu0 %2679
        %2681 = vrot.lane.b32.xlu0 %v2259, 16
        %v2682 = vpop.permute.xlu0 %2681
        %2683 = vrot.lane.b32.xlu0 %v2260, 16
        %v2684 = vpop.permute.xlu0 %2683
        %v2685 = vsel %vm1011, %v2674, %v2676
        %v2686 = vsel %vm1011, %v2676, %v2678
        %v2687 = vsel %vm1011, %v2680, %v2682
        %v2688 = vsel %vm1011, %v2682, %v2684
        %2693 = vst [vmem:[#allocation3 + $0x280] sm:$0xff] %v2685
        %2694 = vst.msk [vmem:[#allocation3 + $0x288] sm:$0xff] %vm1381, %v2686
        %2695 = vst [vmem:[#allocation3 + $0x290] sm:$0xff] %v2687
        %2696 = vst.msk [vmem:[#allocation3 + $0x298] sm:$0xff] %vm1381, %v2688
        %2697 = vrot.lane.b32.xlu0 %v2255, 15
        %v2698 = vpop.permute.xlu0 %2697
        %2699 = vrot.lane.b32.xlu0 %v2256, 15
        %v2700 = vpop.permute.xlu0 %2699
        %2701 = vrot.lane.b32.xlu0 %v2257, 15
        %v2702 = vpop.permute.xlu0 %2701
        %2703 = vrot.lane.b32.xlu0 %v2258, 15
        %v2704 = vpop.permute.xlu0 %2703
        %2705 = vrot.lane.b32.xlu0 %v2259, 15
        %v2706 = vpop.permute.xlu0 %2705
        %2707 = vrot.lane.b32.xlu0 %v2260, 15
        %v2708 = vpop.permute.xlu0 %2707
        %v2709 = vsel %vm1029, %v2698, %v2700
        %v2710 = vsel %vm1029, %v2700, %v2702
        %v2711 = vsel %vm1029, %v2704, %v2706
        %v2712 = vsel %vm1029, %v2706, %v2708
        %2717 = vst [vmem:[#allocation3 + $0x2a0] sm:$0xff] %v2709
        %2718 = vst.msk [vmem:[#allocation3 + $0x2a8] sm:$0xff] %vm1381, %v2710
        %2719 = vst [vmem:[#allocation3 + $0x2b0] sm:$0xff] %v2711
        %2720 = vst.msk [vmem:[#allocation3 + $0x2b8] sm:$0xff] %vm1381, %v2712
        %2721 = vrot.lane.b32.xlu0 %v2255, 14
        %v2722 = vpop.permute.xlu0 %2721
        %2723 = vrot.lane.b32.xlu0 %v2256, 14
        %v2724 = vpop.permute.xlu0 %2723
        %2725 = vrot.lane.b32.xlu0 %v2257, 14
        %v2726 = vpop.permute.xlu0 %2725
        %2727 = vrot.lane.b32.xlu0 %v2258, 14
        %v2728 = vpop.permute.xlu0 %2727
        %2729 = vrot.lane.b32.xlu0 %v2259, 14
        %v2730 = vpop.permute.xlu0 %2729
        %2731 = vrot.lane.b32.xlu0 %v2260, 14
        %v2732 = vpop.permute.xlu0 %2731
        %v2733 = vsel %vm1050, %v2722, %v2724
        %v2734 = vsel %vm1050, %v2724, %v2726
        %v2735 = vsel %vm1050, %v2728, %v2730
        %v2736 = vsel %vm1050, %v2730, %v2732
        %2741 = vst [vmem:[#allocation3 + $0x2c0] sm:$0xff] %v2733
        %2742 = vst.msk [vmem:[#allocation3 + $0x2c8] sm:$0xff] %vm1381, %v2734
        %2743 = vst [vmem:[#allocation3 + $0x2d0] sm:$0xff] %v2735
        %2744 = vst.msk [vmem:[#allocation3 + $0x2d8] sm:$0xff] %vm1381, %v2736
        %2745 = vrot.lane.b32.xlu0 %v2255, 13
        %v2746 = vpop.permute.xlu0 %2745
        %2747 = vrot.lane.b32.xlu0 %v2256, 13
        %v2748 = vpop.permute.xlu0 %2747
        %2749 = vrot.lane.b32.xlu0 %v2257, 13
        %v2750 = vpop.permute.xlu0 %2749
        %2751 = vrot.lane.b32.xlu0 %v2258, 13
        %v2752 = vpop.permute.xlu0 %2751
        %2753 = vrot.lane.b32.xlu0 %v2259, 13
        %v2754 = vpop.permute.xlu0 %2753
        %2755 = vrot.lane.b32.xlu0 %v2260, 13
        %v2756 = vpop.permute.xlu0 %2755
        %v2757 = vsel %vm1068, %v2746, %v2748
        %v2758 = vsel %vm1068, %v2748, %v2750
        %v2759 = vsel %vm1068, %v2752, %v2754
        %v2760 = vsel %vm1068, %v2754, %v2756
        %2765 = vst [vmem:[#allocation3 + $0x2e0] sm:$0xff] %v2757
        %2766 = vst.msk [vmem:[#allocation3 + $0x2e8] sm:$0xff] %vm1381, %v2758
        %2767 = vst [vmem:[#allocation3 + $0x2f0] sm:$0xff] %v2759
        %2768 = vst.msk [vmem:[#allocation3 + $0x2f8] sm:$0xff] %vm1381, %v2760
        %2769 = vrot.lane.b32.xlu0 %v2255, 12
        %v2770 = vpop.permute.xlu0 %2769
        %2771 = vrot.lane.b32.xlu0 %v2256, 12
        %v2772 = vpop.permute.xlu0 %2771
        %2773 = vrot.lane.b32.xlu0 %v2257, 12
        %v2774 = vpop.permute.xlu0 %2773
        %2775 = vrot.lane.b32.xlu0 %v2258, 12
        %v2776 = vpop.permute.xlu0 %2775
        %2777 = vrot.lane.b32.xlu0 %v2259, 12
        %v2778 = vpop.permute.xlu0 %2777
        %2779 = vrot.lane.b32.xlu0 %v2260, 12
        %v2780 = vpop.permute.xlu0 %2779
        %v2781 = vsel %vm1086, %v2770, %v2772
        %v2782 = vsel %vm1086, %v2772, %v2774
        %v2783 = vsel %vm1086, %v2776, %v2778
        %v2784 = vsel %vm1086, %v2778, %v2780
        %2789 = vst [vmem:[#allocation3 + $0x300] sm:$0xff] %v2781
        %2790 = vst.msk [vmem:[#allocation3 + $0x308] sm:$0xff] %vm1381, %v2782
        %2791 = vst [vmem:[#allocation3 + $0x310] sm:$0xff] %v2783
        %2792 = vst.msk [vmem:[#allocation3 + $0x318] sm:$0xff] %vm1381, %v2784
        %v2793 = vld [vmem:[%s6] sm:$0xff]
        %v2794 = vld [vmem:[#allocation3] sm:$0xff]
        %v2795 = vld [vmem:[#allocation3 + $0x8] sm:$0xff]
        %v2796 = vld [vmem:[#allocation3 + $0x10] sm:$0xff]
        %v2797 = vld [vmem:[#allocation3 + $0x18] sm:$0xff]
        %v2798 = vld [vmem:[#allocation3 + $0x20] sm:$0xff]
        %v2799 = vld [vmem:[#allocation3 + $0x28] sm:$0xff]
        %v2800 = vld [vmem:[#allocation3 + $0x30] sm:$0xff]
        %v2801 = vld [vmem:[#allocation3 + $0x38] sm:$0xff]
        %v2802 = vld [vmem:[#allocation3 + $0x40] sm:$0xff]
        %v2803 = vld [vmem:[#allocation3 + $0x48] sm:$0xff]
        %v2804 = vld [vmem:[#allocation3 + $0x50] sm:$0xff]
        %v2805 = vld [vmem:[#allocation3 + $0x58] sm:$0xff]
        %v2806 = vld [vmem:[#allocation3 + $0x60] sm:$0xff]
        %v2807 = vld [vmem:[#allocation3 + $0x68] sm:$0xff]
        %v2808 = vld [vmem:[#allocation3 + $0x70] sm:$0xff]
        %v2809 = vld [vmem:[#allocation3 + $0x78] sm:$0xff]
        %v2810 = vld [vmem:[#allocation3 + $0x80] sm:$0xff]
        %v2811 = vld [vmem:[#allocation3 + $0x88] sm:$0xff]
        %v2812 = vld [vmem:[#allocation3 + $0x90] sm:$0xff]
        %v2813 = vld [vmem:[#allocation3 + $0x98] sm:$0xff]
        %v2814 = vld [vmem:[#allocation3 + $0xa0] sm:$0xff]
        %v2815 = vld [vmem:[#allocation3 + $0xa8] sm:$0xff]
        %v2816 = vld [vmem:[#allocation3 + $0xb0] sm:$0xff]
        %v2817 = vld [vmem:[#allocation3 + $0xb8] sm:$0xff]
        %v2818 = vld [vmem:[#allocation3 + $0xc0] sm:$0xff]
        %v2819 = vld [vmem:[#allocation3 + $0xc8] sm:$0xff]
        %v2820 = vld [vmem:[#allocation3 + $0xd0] sm:$0xff]
        %v2821 = vld [vmem:[#allocation3 + $0xd8] sm:$0xff]
        %v2822 = vld [vmem:[#allocation3 + $0xe0] sm:$0xff]
        %v2823 = vld [vmem:[#allocation3 + $0xe8] sm:$0xff]
        %v2824 = vld [vmem:[#allocation3 + $0xf0] sm:$0xff]
        %v2825 = vld [vmem:[#allocation3 + $0xf8] sm:$0xff]
        %v2826 = vld [vmem:[#allocation3 + $0x100] sm:$0xff]
        %v2827 = vld [vmem:[#allocation3 + $0x108] sm:$0xff]
        %v2828 = vld [vmem:[#allocation3 + $0x110] sm:$0xff]
        %v2829 = vld [vmem:[#allocation3 + $0x118] sm:$0xff]
        %v2830 = vld [vmem:[#allocation3 + $0x120] sm:$0xff]
        %v2831 = vld [vmem:[#allocation3 + $0x128] sm:$0xff]
        %v2832 = vld [vmem:[#allocation3 + $0x130] sm:$0xff]
        %v2833 = vld [vmem:[#allocation3 + $0x138] sm:$0xff]
        %v2834 = vld [vmem:[#allocation3 + $0x140] sm:$0xff]
        %v2835 = vld [vmem:[#allocation3 + $0x148] sm:$0xff]
        %v2836 = vld [vmem:[#allocation3 + $0x150] sm:$0xff]
        %v2837 = vld [vmem:[#allocation3 + $0x158] sm:$0xff]
        %v2838 = vld [vmem:[#allocation3 + $0x160] sm:$0xff]
        %v2839 = vld [vmem:[#allocation3 + $0x168] sm:$0xff]
        %v2840 = vld [vmem:[#allocation3 + $0x170] sm:$0xff]
        %v2841 = vld [vmem:[#allocation3 + $0x178] sm:$0xff]
        %v2842 = vld [vmem:[#allocation3 + $0x180] sm:$0xff]
        %v2843 = vld [vmem:[#allocation3 + $0x188] sm:$0xff]
        %v2844 = vld [vmem:[#allocation3 + $0x190] sm:$0xff]
        %v2845 = vld [vmem:[#allocation3 + $0x198] sm:$0xff]
        %v2846 = vld [vmem:[#allocation3 + $0x1a0] sm:$0xff]
        %v2847 = vld [vmem:[#allocation3 + $0x1a8] sm:$0xff]
        %v2848 = vld [vmem:[#allocation3 + $0x1b0] sm:$0xff]
        %v2849 = vld [vmem:[#allocation3 + $0x1b8] sm:$0xff]
        %v2850 = vld [vmem:[#allocation3 + $0x1c0] sm:$0xff]
        %v2851 = vld [vmem:[#allocation3 + $0x1c8] sm:$0xff]
        %v2852 = vld [vmem:[#allocation3 + $0x1d0] sm:$0xff]
        %v2853 = vld [vmem:[#allocation3 + $0x1d8] sm:$0xff]
        %v2854 = vld [vmem:[#allocation3 + $0x1e0] sm:$0xff]
        %v2855 = vld [vmem:[#allocation3 + $0x1e8] sm:$0xff]
        %v2856 = vld [vmem:[#allocation3 + $0x1f0] sm:$0xff]
        %v2857 = vld [vmem:[#allocation3 + $0x1f8] sm:$0xff]
        %v2858 = vld [vmem:[#allocation3 + $0x200] sm:$0xff]
        %v2859 = vld [vmem:[#allocation3 + $0x208] sm:$0xff]
        %v2860 = vld [vmem:[#allocation3 + $0x210] sm:$0xff]
        %v2861 = vld [vmem:[#allocation3 + $0x218] sm:$0xff]
        %v2862 = vld [vmem:[#allocation3 + $0x220] sm:$0xff]
        %v2863 = vld [vmem:[#allocation3 + $0x228] sm:$0xff]
        %v2864 = vld [vmem:[#allocation3 + $0x230] sm:$0xff]
        %v2865 = vld [vmem:[#allocation3 + $0x238] sm:$0xff]
        %v2866 = vld [vmem:[#allocation3 + $0x240] sm:$0xff]
        %v2867 = vld [vmem:[#allocation3 + $0x248] sm:$0xff]
        %v2868 = vld [vmem:[#allocation3 + $0x250] sm:$0xff]
        %v2869 = vld [vmem:[#allocation3 + $0x258] sm:$0xff]
        %v2870 = vld [vmem:[#allocation3 + $0x260] sm:$0xff]
        %v2871 = vld [vmem:[#allocation3 + $0x268] sm:$0xff]
        %v2872 = vld [vmem:[#allocation3 + $0x270] sm:$0xff]
        %v2873 = vld [vmem:[#allocation3 + $0x278] sm:$0xff]
        %v2874 = vld [vmem:[#allocation3 + $0x280] sm:$0xff]
        %v2875 = vld [vmem:[#allocation3 + $0x288] sm:$0xff]
        %v2876 = vld [vmem:[#allocation3 + $0x290] sm:$0xff]
        %v2877 = vld [vmem:[#allocation3 + $0x298] sm:$0xff]
        %v2878 = vld [vmem:[#allocation3 + $0x2a0] sm:$0xff]
        %v2879 = vld [vmem:[#allocation3 + $0x2a8] sm:$0xff]
        %v2880 = vld [vmem:[#allocation3 + $0x2b0] sm:$0xff]
        %v2881 = vld [vmem:[#allocation3 + $0x2b8] sm:$0xff]
        %v2882 = vld [vmem:[#allocation3 + $0x2c0] sm:$0xff]
        %v2883 = vld [vmem:[#allocation3 + $0x2c8] sm:$0xff]
        %v2884 = vld [vmem:[#allocation3 + $0x2d0] sm:$0xff]
        %v2885 = vld [vmem:[#allocation3 + $0x2d8] sm:$0xff]
        %v2886 = vld [vmem:[#allocation3 + $0x2e0] sm:$0xff]
        %v2887 = vld [vmem:[#allocation3 + $0x2e8] sm:$0xff]
        %v2888 = vld [vmem:[#allocation3 + $0x2f0] sm:$0xff]
        %v2889 = vld [vmem:[#allocation3 + $0x2f8] sm:$0xff]
        %v2890 = vld [vmem:[#allocation3 + $0x300] sm:$0xff]
        %v2891 = vld [vmem:[#allocation3 + $0x308] sm:$0xff]
        %v2892 = vld [vmem:[#allocation3 + $0x310] sm:$0xff]
        %v2893 = vld [vmem:[#allocation3 + $0x318] sm:$0xff]
        %v2894 = vpack.c.bf16 %v2796, %v2794
        %v2895 = vpack.c.bf16 %v2797, %v2795
        %v2896 = vpack.c.bf16 %v2800, %v2798
        %v2897 = vpack.c.bf16 %v2801, %v2799
        %v2898 = vpack.c.bf16 %v2804, %v2802
        %v2899 = vpack.c.bf16 %v2805, %v2803
        %v2900 = vpack.c.bf16 %v2808, %v2806
        %v2901 = vpack.c.bf16 %v2809, %v2807
        %v2902 = vpack.c.bf16 %v2812, %v2810
        %v2903 = vpack.c.bf16 %v2813, %v2811
        %v2904 = vpack.c.bf16 %v2816, %v2814
        %v2905 = vpack.c.bf16 %v2817, %v2815
        %v2906 = vpack.c.bf16 %v2820, %v2818
        %v2907 = vpack.c.bf16 %v2821, %v2819
        %v2908 = vpack.c.bf16 %v2824, %v2822
        %v2909 = vpack.c.bf16 %v2825, %v2823
        %v2910 = vpack.c.bf16 %v2828, %v2826
        %v2911 = vpack.c.bf16 %v2829, %v2827
        %v2912 = vpack.c.bf16 %v2832, %v2830
        %v2913 = vpack.c.bf16 %v2833, %v2831
        %v2914 = vpack.c.bf16 %v2836, %v2834
        %v2915 = vpack.c.bf16 %v2837, %v2835
        %v2916 = vpack.c.bf16 %v2840, %v2838
        %v2917 = vpack.c.bf16 %v2841, %v2839
        %v2918 = vpack.c.bf16 %v2844, %v2842
        %v2919 = vpack.c.bf16 %v2845, %v2843
        %v2920 = vpack.c.bf16 %v2848, %v2846
        %v2921 = vpack.c.bf16 %v2849, %v2847
        %v2922 = vpack.c.bf16 %v2852, %v2850
        %v2923 = vpack.c.bf16 %v2853, %v2851
        %v2924 = vpack.c.bf16 %v2856, %v2854
        %v2925 = vpack.c.bf16 %v2857, %v2855
        %v2926 = vpack.c.bf16 %v2860, %v2858
        %v2927 = vpack.c.bf16 %v2861, %v2859
        %v2928 = vpack.c.bf16 %v2864, %v2862
        %v2929 = vpack.c.bf16 %v2865, %v2863
        %v2930 = vpack.c.bf16 %v2868, %v2866
        %v2931 = vpack.c.bf16 %v2869, %v2867
        %v2932 = vpack.c.bf16 %v2872, %v2870
        %v2933 = vpack.c.bf16 %v2873, %v2871
        %v2934 = vpack.c.bf16 %v2876, %v2874
        %v2935 = vpack.c.bf16 %v2877, %v2875
        %v2936 = vpack.c.bf16 %v2880, %v2878
        %v2937 = vpack.c.bf16 %v2881, %v2879
        %v2938 = vpack.c.bf16 %v2884, %v2882
        %v2939 = vpack.c.bf16 %v2885, %v2883
        %v2940 = vpack.c.bf16 %v2888, %v2886
        %v2941 = vpack.c.bf16 %v2889, %v2887
        %v2942 = vpack.c.bf16 %v2892, %v2890
        %v2943 = vpack.c.bf16 %v2893, %v2891
        %v2944 = vld [vmem:[%s7] sm:$0x7]
        %2946 = vset.pattern.permute.xlu0 0
        %2947 = vperm.xlu0 %2946, %v2944
        %v2948 = vpop.permute.xlu0 %2947
        %v2951 = vcombine.high %v2793, %v2793
        %v2953 = vunpack.c.l.s4 1983009808
        %v2954 = vunpack.c.0.s8 %v2953
        %v2955 = vlaneseq
        %v2956 = vshrl.u32 %v2955, 7
        %v2957 = vsub.s32 %v2954, %v2956
        %v2958 = vrot.slane %v2793, %v2957
        %v2960 = vunpack.c.l.s4 1983009808
        %v2961 = vunpack.c.0.s8 %v2960
        %v2962 = vlaneseq
        %v2963 = vshrl.u32 %v2962, 7
        %v2964 = vsub.s32 %v2961, %v2963
        %v2965 = vrot.slane %v2951, %v2964
        %v2966 = vcombine.high %v2958, %v2958
        %v2967 = vcombine.high %v2965, %v2965
        %v2972 = vsel %vm1011, %v2967, 0
        %2974 = vmatprep.subr.bf16.mxu0 %v2909
        %2975 = vmatpush1.bf16.msra.mxu0 %v2908
        %2976 = vmatprep.subr.bf16.mxu0 %v2907
        %2977 = vmatpush1.bf16.msra.mxu0 %v2906
        %2978 = vmatprep.subr.bf16.mxu0 %v2905
        %2979 = vmatpush1.bf16.msra.mxu0 %v2904
        %2980 = vmatprep.subr.bf16.mxu0 %v2903
        %2981 = vmatpush1.bf16.msra.mxu0 %v2902
        %2982 = vmatprep.subr.bf16.mxu0 %v2901
        %2983 = vmatpush1.bf16.msra.mxu0 %v2900
        %2984 = vmatprep.subr.bf16.mxu0 %v2899
        %2985 = vmatpush1.bf16.msra.mxu0 %v2898
        %2986 = vmatprep.subr.bf16.mxu0 %v2897
        %2987 = vmatpush1.bf16.msra.mxu0 %v2896
        %2988 = vmatprep.subr.bf16.mxu0 %v2895
        %2989 = vmatpush1.bf16.msra.mxu0 %v2894
        %2990 = vmatprep.subr.bf16.mxu0 %v2925
        %2991 = vmatpush2.bf16.msra.mxu0 %v2924
        %2992 = vmatprep.subr.bf16.mxu0 %v2923
        %2993 = vmatpush2.bf16.msra.mxu0 %v2922
        %2994 = vmatprep.subr.bf16.mxu0 %v2921
        %2995 = vmatpush2.bf16.msra.mxu0 %v2920
        %2996 = vmatprep.subr.bf16.mxu0 %v2919
        %2997 = vmatpush2.bf16.msra.mxu0 %v2918
        %2998 = vmatprep.subr.bf16.mxu0 %v2917
        %2999 = vmatpush2.bf16.msra.mxu0 %v2916
        %3000 = vmatprep.subr.bf16.mxu0 %v2915
        %3001 = vmatpush2.bf16.msra.mxu0 %v2914
        %3002 = vmatprep.subr.bf16.mxu0 %v2913
        %3003 = vmatpush2.bf16.msra.mxu0 %v2912
        %3004 = vmatprep.subr.bf16.mxu0 %v2911
        %3005 = vmatpush2.bf16.msra.mxu0 %v2910
        %3006 = vmatprep.mubr.bf16.mxu0 %v2966
        %3007 = vmatmul.mubr.bf16.gmra.mxu0 %v2958
        %v3008 = vpop.f32.mrf.mxu0
        %v3009 = vadd.f32 %v2948, %v3008
        %v3010 = vpop.f32.mrf.mxu0
        %v3011 = vadd.f32 %v2948, %v3010
        %v3012 = vpop.f32.mrf.mxu0
        %v3013 = vpop.f32.mrf.mxu0
        %3014 = vdwg.mxu0
        %3015 = vmatprep.subr.bf16.mxu0 %v2941
        %3016 = vmatpush1.bf16.msra.mxu0 %v2940
        %3017 = vmatprep.subr.bf16.mxu0 %v2939
        %3018 = vmatpush1.bf16.msra.mxu0 %v2938
        %3019 = vmatprep.subr.bf16.mxu0 %v2937
        %3020 = vmatpush1.bf16.msra.mxu0 %v2936
        %3021 = vmatprep.subr.bf16.mxu0 %v2935
        %3022 = vmatpush1.bf16.msra.mxu0 %v2934
        %3023 = vmatprep.subr.bf16.mxu0 %v2933
        %3024 = vmatpush1.bf16.msra.mxu0 %v2932
        %3025 = vmatprep.subr.bf16.mxu0 %v2931
        %3026 = vmatpush1.bf16.msra.mxu0 %v2930
        %3027 = vmatprep.subr.bf16.mxu0 %v2929
        %3028 = vmatpush1.bf16.msra.mxu0 %v2928
        %3029 = vmatprep.subr.bf16.mxu0 %v2927
        %3030 = vmatpush1.bf16.msra.mxu0 %v2926
        %3031 = vmatprep.subr.bf16.mxu0 0
        %3032 = vmatpush2.bf16.msra.mxu0 0
        %3033 = vmatprep.subr.bf16.mxu0 0
        %3034 = vmatpush2.bf16.msra.mxu0 0
        %3035 = vmatprep.subr.bf16.mxu0 0
        %3036 = vmatpush2.bf16.msra.mxu0 0
        %3037 = vmatprep.subr.bf16.mxu0 0
        %3038 = vmatpush2.bf16.msra.mxu0 0
        %3039 = vmatprep.subr.bf16.mxu0 0
        %3040 = vmatpush2.bf16.msra.mxu0 0
        %3041 = vmatprep.subr.bf16.mxu0 0
        %3042 = vmatpush2.bf16.msra.mxu0 0
        %3043 = vmatprep.subr.bf16.mxu0 0
        %3044 = vmatpush2.bf16.msra.mxu0 0
        %3045 = vmatprep.subr.bf16.mxu0 %v2943
        %3046 = vmatpush2.bf16.msra.mxu0 %v2942
        %3047 = vmatprep.mubr.bf16.mxu0 %v2972
        %3048 = vmatmul.mubr.bf16.gmra.mxu0 %v2965
        %v3049 = vpop.f32.mrf.mxu0
        %v3050 = vadd.f32 %v3009, %v3049
        %v3051 = vpop.f32.mrf.mxu0
        %v3052 = vadd.f32 %v3011, %v3051
        %v3053 = vpop.f32.mrf.mxu0
        %v3054 = vpop.f32.mrf.mxu0
        %3055 = vdwg.mxu0
        %v3058 = vunpack.c.l.s4 1966171168
        %v3059 = vunpack.c.0.s8 %v3058
        %v3060 = vlaneseq
        %v3061 = vshrl.u32 %v3060, 7
        %v3062 = vsub.s32 %v3059, %v3061
        %v3063 = vrot.slane %v3050, %v3062
        %v3064 = vcombine.high %v3063, %v3063
        %v3066 = vunpack.c.l.s4 1966171168
        %v3067 = vunpack.c.0.s8 %v3066
        %v3068 = vlaneseq
        %v3069 = vshrl.u32 %v3068, 7
        %v3070 = vsub.s32 %v3067, %v3069
        %v3071 = vrot.slane %v3063, %v3070
        %v3073 = vunpack.c.l.s4 1966171168
        %v3074 = vunpack.c.0.s8 %v3073
        %v3075 = vlaneseq
        %v3076 = vshrl.u32 %v3075, 7
        %v3077 = vsub.s32 %v3074, %v3076
        %v3078 = vrot.slane %v3064, %v3077
        %v3079 = vcombine.high %v3071, %v3071
        %vm3083 = vcmask 122880
        %3084 = vst.msk [vmem:[%s335] sm:$0x1] %vm3083, %v3071
        %3085 = vst.msk [vmem:[%s335 + $0x8] sm:$0x1] %vm3083, %v3078
        %3086 = vst.msk [vmem:[%s335 + $0x10] sm:$0x1] %vm3083, %v3079
        %v3087 = vlaneseq
        %v3088 = vshrl.u32 %v3087, 7
        %v3089 = vsub.s32 0, %v3088
        %v3090 = vrot.slane %v3071, %v3089
        %v3091 = vlaneseq
        %v3092 = vshrl.u32 %v3091, 7
        %v3093 = vsub.s32 0, %v3092
        %v3094 = vrot.slane %v3078, %v3093
        %v3095 = vlaneseq
        %v3096 = vshrl.u32 %v3095, 7
        %v3097 = vsub.s32 0, %v3096
        %v3098 = vrot.slane %v3079, %v3097
        %3099 = vrot.lane.b32.xlu0 %v3090, 100
        %v3100 = vpop.permute.xlu0 %3099
        %3101 = vrot.lane.b32.xlu0 %v3094, 100
        %v3102 = vpop.permute.xlu0 %3101
        %3103 = vrot.lane.b32.xlu0 %v3098, 100
        %v3104 = vpop.permute.xlu0 %3103
        %3108 = vst.msk [vmem:[%s335 + $0x1] sm:$0x1] %vm3083, %v3100
        %3109 = vst.msk [vmem:[%s335 + $0x9] sm:$0x1] %vm3083, %v3102
        %3110 = vst.msk [vmem:[%s335 + $0x11] sm:$0x1] %vm3083, %v3104
        %3111 = vrot.lane.b32.xlu0 %v3090, 72
        %v3112 = vpop.permute.xlu0 %3111
        %3113 = vrot.lane.b32.xlu0 %v3094, 72
        %v3114 = vpop.permute.xlu0 %3113
        %3115 = vrot.lane.b32.xlu0 %v3098, 72
        %v3116 = vpop.permute.xlu0 %3115
        %3120 = vst.msk [vmem:[%s335 + $0x2] sm:$0x1] %vm3083, %v3112
        %3121 = vst.msk [vmem:[%s335 + $0xa] sm:$0x1] %vm3083, %v3114
        %3122 = vst.msk [vmem:[%s335 + $0x12] sm:$0x1] %vm3083, %v3116
        %3123 = vrot.lane.b32.xlu0 %v3090, 44
        %v3124 = vpop.permute.xlu0 %3123
        %3125 = vrot.lane.b32.xlu0 %v3094, 44
        %v3126 = vpop.permute.xlu0 %3125
        %3127 = vrot.lane.b32.xlu0 %v3098, 44
        %v3128 = vpop.permute.xlu0 %3127
        %3132 = vst.msk [vmem:[%s335 + $0x3] sm:$0x1] %vm3083, %v3124
        %3133 = vst.msk [vmem:[%s335 + $0xb] sm:$0x1] %vm3083, %v3126
        %3134 = vst.msk [vmem:[%s335 + $0x13] sm:$0x1] %vm3083, %v3128
        %3135 = vrot.lane.b32.xlu0 %v3090, 16
        %v3136 = vpop.permute.xlu0 %3135
        %3137 = vrot.lane.b32.xlu0 %v3094, 16
        %v3138 = vpop.permute.xlu0 %3137
        %3139 = vrot.lane.b32.xlu0 %v3098, 16
        %v3140 = vpop.permute.xlu0 %3139
        %3144 = vst.msk [vmem:[%s335 + $0x4] sm:$0x1] %vm3083, %v3136
        %3145 = vst.msk [vmem:[%s335 + $0xc] sm:$0x1] %vm3083, %v3138
        %3146 = vst.msk [vmem:[%s335 + $0x14] sm:$0x1] %vm3083, %v3140
        %v3149 = vunpack.c.l.s4 1966171168
        %v3150 = vunpack.c.0.s8 %v3149
        %v3151 = vlaneseq
        %v3152 = vshrl.u32 %v3151, 7
        %v3153 = vsub.s32 %v3150, %v3152
        %v3154 = vrot.slane %v3052, %v3153
        %v3155 = vcombine.high %v3154, %v3154
        %v3157 = vunpack.c.l.s4 1966171168
        %v3158 = vunpack.c.0.s8 %v3157
        %v3159 = vlaneseq
        %v3160 = vshrl.u32 %v3159, 7
        %v3161 = vsub.s32 %v3158, %v3160
        %v3162 = vrot.slane %v3154, %v3161
        %v3164 = vunpack.c.l.s4 1966171168
        %v3165 = vunpack.c.0.s8 %v3164
        %v3166 = vlaneseq
        %v3167 = vshrl.u32 %v3166, 7
        %v3168 = vsub.s32 %v3165, %v3167
        %v3169 = vrot.slane %v3155, %v3168
        %v3170 = vcombine.high %v3162, %v3162
        %v3171 = vlaneseq
        %v3172 = vshrl.u32 %v3171, 7
        %v3173 = vsub.s32 0, %v3172
        %v3174 = vrot.slane %v3162, %v3173
        %v3175 = vlaneseq
        %v3176 = vshrl.u32 %v3175, 7
        %v3177 = vsub.s32 0, %v3176
        %v3178 = vrot.slane %v3169, %v3177
        %v3179 = vlaneseq
        %v3180 = vshrl.u32 %v3179, 7
        %v3181 = vsub.s32 0, %v3180
        %v3182 = vrot.slane %v3170, %v3181
        %3183 = vrot.lane.b32.xlu0 %v3174, 116
        %v3184 = vpop.permute.xlu0 %3183
        %3185 = vrot.lane.b32.xlu0 %v3178, 116
        %v3186 = vpop.permute.xlu0 %3185
        %3187 = vrot.lane.b32.xlu0 %v3182, 116
        %v3188 = vpop.permute.xlu0 %3187
        %3192 = vst.msk [vmem:[%s335 + $0x5] sm:$0x1] %vm3083, %v3184
        %3193 = vst.msk [vmem:[%s335 + $0xd] sm:$0x1] %vm3083, %v3186
        %3194 = vst.msk [vmem:[%s335 + $0x15] sm:$0x1] %vm3083, %v3188
        %3195 = vrot.lane.b32.xlu0 %v3174, 88
        %v3196 = vpop.permute.xlu0 %3195
        %3197 = vrot.lane.b32.xlu0 %v3178, 88
        %v3198 = vpop.permute.xlu0 %3197
        %3199 = vrot.lane.b32.xlu0 %v3182, 88
        %v3200 = vpop.permute.xlu0 %3199
        %3204 = vst.msk [vmem:[%s335 + $0x6] sm:$0x1] %vm3083, %v3196
        %3205 = vst.msk [vmem:[%s335 + $0xe] sm:$0x1] %vm3083, %v3198
        %3206 = vst.msk [vmem:[%s335 + $0x16] sm:$0x1] %vm3083, %v3200
        %3207 = vrot.lane.b32.xlu0 %v3174, 60
        %v3208 = vpop.permute.xlu0 %3207
        %3209 = vrot.lane.b32.xlu0 %v3178, 60
        %v3210 = vpop.permute.xlu0 %3209
        %3211 = vrot.lane.b32.xlu0 %v3182, 60
        %v3212 = vpop.permute.xlu0 %3211
        %3216 = vst.msk [vmem:[%s335 + $0x7] sm:$0x1] %vm3083, %v3208
        %3217 = vst.msk [vmem:[%s335 + $0xf] sm:$0x1] %vm3083, %v3210
        %3218 = vst.msk [vmem:[%s335 + $0x17] sm:$0x1] %vm3083, %v3212
        %s3219 = sand.u32 %s224, 1
        %s3220 = scalar_lea.sflag [#allocation5], %s3219
        %s3221 = sand.u32 %s224, 1
        %s3222 = smul.addr %s3221, 24
        %s3223 = scalar_lea.vmem [#allocation4], %s3222
        // Predicated region
        $region53: #{srcnn_forward.1} parent=51 // pred_check
          %p3224 = pneg %p234
        $region54: #{srcnn_forward.1} parent=51 // pred_check_branch
          %3226 = sbr.rel (%p3224) target = $region56
        $region55: #{srcnn_forward.1} parent=51 // pred_region
          %s3228 = ssub.s32 384, 384
          %3229 = vsyncadd %s3220, %s3228
          %s3230 = smul.addr %s26, 6
          %s3231 = sadd.s32 %s27, %s3230
          %s3232 = smul.addr %s3231, 128
          %s3233 = scalar_lea.hbm %s8, %s3232
          %s3234 = sshll.u32 %s3223, 4
          %s3235 = int_to_ptr.vmem [resolvable:$true] %s3234
          %3240 = dma.vmem_to_hbm [thread:$0]  %s3235, 384, %s3233, %s3220, 128, 256, 8
        $region56: #{srcnn_forward.1} parent=51 // pred_fallthru
          _
      $region52: #{srcnn_forward.1} parent=5 // pred_fallthru
        _
      %p3241 = scmp.le.s32.totalorder 2, %s17
      // Predicated region
      $region57: #{srcnn_forward.1} parent=5 // pred_check
        %p3242 = pneg %p3241
      $region58: #{srcnn_forward.1} parent=5 // pred_check_branch
        %3244 = sbr.rel (%p3242) target = $region60
      $region59: #{srcnn_forward.1} parent=5 // pred_region
        %s3245 = ssub.s32 %s17, 2
        // Predicated region
        $region61: #{srcnn_forward.1} parent=59 // pred_check
          %p3246 = pneg %p240
        $region62: #{srcnn_forward.1} parent=59 // pred_check_branch
          %3248 = sbr.rel (%p3246) target = $region64
        $region63: #{srcnn_forward.1} parent=59 // pred_region
          %s3249 = sand.u32 %s225, 1
          %s3250 = scalar_lea.sflag [#allocation5], %s3249
          %s3251 = sand.u32 %s225, 1
          %s3252 = smul.addr %s3251, 24
          %s3253 = scalar_lea.vmem [#allocation4], %s3252
          %3254 = dma.done %s3250, 384
        $region64: #{srcnn_forward.1} parent=59 // pred_fallthru
          _
      $region60: #{srcnn_forward.1} parent=5 // pred_fallthru
        _
    $region6: #{srcnn_forward.1} parent=1 // loop_footer
      %s21 = sadd.s32 1, %s17
    $region7: #{srcnn_forward.1} parent=1 // loop_footer_branch
      %16 = sbr.rel target = $region3
    $region8: #{srcnn_forward.1} parent=1 // loop_exit
      _
    %3255 = vsyncpa [#allocation5], 1
    %s3256 = scalar_lea.sflag [#allocation5], 1
    %3257 = vsyncpa %s3256, 1

</llo_original>
